<compile_context>
chip_gen: v6e
topology: v6e:2x2x1
jax: 0.10.0
libtpu: 0.0.40
codegen_flags: <defaults>
</compile_context>

<pallas_src>
import jax
import jax.numpy as jnp
from jax import lax
from jax.experimental import pallas as pl
from jax.experimental.pallas import tpu as pltpu


def _round_up(x, m):
    return ((x + m - 1) // m) * m


# ---------------------------------------------------------------------------
# Kernel factory: one (batch tile, time chunk) grid step of the Net forward.
# ---------------------------------------------------------------------------
def _make_lstm_net_kernel(T, Tc, gate_dtype):
    """Refs per grid step (padded shapes):
      x_ref    : (Tc*Bt, Hp)  bf16  time-major chunk (row = t_local*Bt + b)
      wih_ref  : (Hp, 4Hp)    bf16  W_ih^T, each gate block padded to Hp
      whh_ref  : (Hp, 4Hp)    bf16  W_hh^T, same layout
      b_ref    : (1, 4Hp)     f32   b_ih + b_hh (padded entries 0)
      wlin_ref : (Hp, Lp)     bf16  W_lin^T (padded rows/cols 0)
      blin_ref : (1, Lp)      f32   b_lin, padded cols = -1e30
      out_ref  : (Bt, Lp)     f32   log-probabilities (written on last chunk)
      gx_ref   : (Tc*Bt, 4Hp) bf16  scratch: chunked input projection
      h/c/acc  : (Bt, Hp)     f32   scratch: LSTM state and sum_t h_t
    """

    def kernel(x_ref, wih_ref, whh_ref, b_ref, wlin_ref, blin_ref,
               out_ref, gx_ref, h_ref, c_ref, acc_ref):
        Bt, Hp = h_ref.shape
        j = pl.program_id(1)          # time-chunk index (innermost, "arbitrary")

        @pl.when(j == 0)
        def _init():
            h_ref[...] = jnp.zeros_like(h_ref)
            c_ref[...] = jnp.zeros_like(c_ref)
            acc_ref[...] = jnp.zeros_like(acc_ref)

        # Chunked hoisted input projection: one MXU matmul per time chunk,
        # stored as bf16 (bias + recurrent term added in f32 at gate time).
        gx_ref[...] = jnp.dot(
            x_ref[...], wih_ref[...],
            preferred_element_type=jnp.float32).astype(gx_ref.dtype)

        bias = b_ref[...]             # (1, 4Hp) f32 — tiny, safe to hoist

        def step(t, carry):
            base = pl.multiple_of(t * Bt, Bt)               # aligned sublane slice
            gx_t = gx_ref[pl.ds(base, Bt), :].astype(jnp.float32)
            # W_hh is read from VMEM here (not hoisted as a 32-vreg value).
            # TODO(synk): make W_hh weight-stationary in the MXU via
            # pltpu.matmul_push_rhs once + matmul_acc_lhs/matmul_pop per step.
            gates = gx_t + bias + jnp.dot(
                h_ref[...].astype(jnp.bfloat16), whh_ref[...],
                preferred_element_type=jnp.float32)          # (Bt, 4Hp) f32
            g = gates.astype(gate_dtype)
            # Gate blocks are Hp-aligned -> lane-tile aligned slices.
            i_g = jax.nn.sigmoid(g[:, 0 * Hp:1 * Hp]).astype(jnp.float32)
            f_g = jax.nn.sigmoid(g[:, 1 * Hp:2 * Hp]).astype(jnp.float32)
            g_g = jnp.tanh(g[:, 2 * Hp:3 * Hp]).astype(jnp.float32)
            o_g = jax.nn.sigmoid(g[:, 3 * Hp:4 * Hp]).astype(jnp.float32)
            c_new = f_g * c_ref[...] + i_g * g_g             # f32 state
            h_new = o_g * jnp.tanh(c_new.astype(gate_dtype)).astype(jnp.float32)
            c_ref[...] = c_new
            h_ref[...] = h_new
            if T % Tc == 0:
                acc_ref[...] = acc_ref[...] + h_new
            else:
                # Skip zero-padded tail timesteps (only the last chunk has any).
                @pl.when(j * Tc + t < T)
                def _acc():
                    acc_ref[...] = acc_ref[...] + h_new
            return carry

        # Partial unroll: enough for MXU/EUP/VPU overlap without code blow-up.
        lax.fori_loop(0, Tc, step, 0, unroll=min(8, Tc))

        @pl.when(j == pl.num_programs(1) - 1)
        def _finalize():
            h_mean = acc_ref[...] * (1.0 / T)
            logits = jnp.dot(h_mean.astype(wlin_ref.dtype), wlin_ref[...],
                             preferred_element_type=jnp.float32) + blin_ref[...]
            m = jnp.max(logits, axis=-1, keepdims=True)
            z = logits - m
            lse = jnp.log(jnp.sum(jnp.exp(z), axis=-1, keepdims=True))
            out_ref[...] = z - lse                           # lane-dense (Bt, Lp)

    return kernel


# ---------------------------------------------------------------------------
# Parameter re-layout helpers (XLA glue, run once).
# ---------------------------------------------------------------------------
def _pack_lstm_weight(w, H, Hp):
    """(4H, H) PyTorch gate weight -> (Hp, 4Hp) = W^T with each gate block padded."""
    # TODO(synk): when H << 128 (small-H / v5e case) pack all 4 gates into one
    # 128-lane block instead of padding each gate to Hp (cuts MXU/EUP work 4x).
    out = jnp.zeros((Hp, 4 * Hp), jnp.float32)
    for k in range(4):
        out = out.at[:H, k * Hp:k * Hp + H].set(
            w[k * H:(k + 1) * H, :].T.astype(jnp.float32))
    return out


def _pack_lstm_bias(b_ih, b_hh, H, Hp):
    b = (b_ih + b_hh).astype(jnp.float32)
    out = jnp.zeros((1, 4 * Hp), jnp.float32)
    for k in range(4):
        out = out.at[0, k * Hp:k * Hp + H].set(b[k * H:(k + 1) * H])
    return out


def _device_tuning():
    kind = jax.devices()[0].device_kind.lower()
    # bf16 VPU/EUP exists on v6e/v7x; keep gate math in f32 on older gens.
    old_gen = any(tag in kind for tag in ("v2", "v3", "v4", "v5"))
    gate_dtype = jnp.float32 if old_gen else jnp.bfloat16
    if "v7" in kind:                          # 64 MiB physical VMEM per core
        vmem_limit = 56 * 1024 * 1024
    elif "v2" in kind or "v3" in kind:        # small-VMEM generations
        vmem_limit = 12 * 1024 * 1024
    else:                                     # v4 / v5e / v6e: 128 MiB physical
        vmem_limit = 100 * 1024 * 1024
    return gate_dtype, vmem_limit


# ---------------------------------------------------------------------------
# Wrapper.
# ---------------------------------------------------------------------------
def net_forward(tokens, params, *, time_chunk=32):
    """tokens: (B, T) int32. Returns (B, num_labels) float32 log-probs."""
    embed = params["embed"]          # (V, H)
    w_ih = params["w_ih"]            # (4H, H)
    w_hh = params["w_hh"]            # (4H, H)
    b_ih = params["b_ih"]            # (4H,)
    b_hh = params["b_hh"]            # (4H,)
    w_lin = params["w_lin"]          # (L, H)
    b_lin = params["b_lin"]          # (L,)

    B, T = tokens.shape
    H = embed.shape[1]
    L = w_lin.shape[0]

    Hp = _round_up(H, 128)
    Lp = _round_up(L, 128)

    # Batch tile: >= 2 tiles once B >= 16 so the "parallel" grid axis actually
    # shards across v7x's two TensorCores; cap tile at 128 rows.
    if B >= 16:
        Bt = min(_round_up((B + 1) // 2, 8), 128)
    else:
        Bt = _round_up(max(B, 1), 8)
    Bp = _round_up(B, Bt)
    nb = Bp // Bt

    # Time chunk: bounds VMEM to O(Tc*Bt) regardless of T; BlockSpec
    # double-buffers the next chunk's x while the current recurrence runs.
    Tc = max(1, min(time_chunk, T))
    Tp = _round_up(T, Tc)
    nt = Tp // Tc

    gate_dtype, vmem_limit = _device_tuning()

    # --- Embedding glue (XLA): gather straight into bf16, single pad, relayout.
    # TODO(synk): fuse the gather via PrefetchScalarGridSpec + pl.Element rows.
    x = embed.astype(jnp.bfloat16)[tokens]                       # (B, T, H) bf16
    x = jnp.pad(x, ((0, Bp - B), (0, Tp - T), (0, Hp - H)))      # (Bp, Tp, Hp)
    x = x.reshape(nb, Bt, nt, Tc, Hp).transpose(0, 2, 3, 1, 4)   # (nb, nt, Tc, Bt, Hp)
    x = x.reshape(nb, nt, Tc * Bt, Hp)                           # row = t_local*Bt + b

    wih = _pack_lstm_weight(w_ih, H, Hp).astype(jnp.bfloat16)    # (Hp, 4Hp)
    whh = _pack_lstm_weight(w_hh, H, Hp).astype(jnp.bfloat16)    # (Hp, 4Hp)
    b = _pack_lstm_bias(b_ih, b_hh, H, Hp)                       # (1, 4Hp) f32
    wlin = jnp.zeros((Hp, Lp), jnp.float32).at[:H, :L].set(
        w_lin.T.astype(jnp.float32)).astype(jnp.bfloat16)        # (Hp, Lp)
    blin = jnp.full((1, Lp), -1e30, jnp.float32).at[0, :L].set(
        b_lin.astype(jnp.float32))                               # padded labels -> -inf

    # NOTE: weight blocks are grid-invariant but BlockSpec still double-buffers
    # them; their 2x size is accounted for in the VMEM budget above.
    # TODO(synk): pin them single-buffered with pipeline_mode=pl.Buffered(1)
    # once that path is validated on the target toolchain.
    grid_spec = pltpu.PrefetchScalarGridSpec(
        num_scalar_prefetch=0,
        grid=(nb, nt),
        in_specs=[
            pl.BlockSpec((None, None, Tc * Bt, Hp), lambda i, j: (i, j, 0, 0)),
            pl.BlockSpec((Hp, 4 * Hp), lambda i, j: (0, 0)),      # W_ih^T (resident)
            pl.BlockSpec((Hp, 4 * Hp), lambda i, j: (0, 0)),      # W_hh^T (resident)
            pl.BlockSpec((1, 4 * Hp), lambda i, j: (0, 0)),       # bias
            pl.BlockSpec((Hp, Lp), lambda i, j: (0, 0)),          # W_lin^T
            pl.BlockSpec((1, Lp), lambda i, j: (0, 0)),           # b_lin
        ],
        out_specs=pl.BlockSpec((Bt, Lp), lambda i, j: (i, 0)),
        scratch_shapes=[
            pltpu.VMEM((Tc * Bt, 4 * Hp), jnp.bfloat16),   # gates_x chunk (bf16)
            pltpu.VMEM((Bt, Hp), jnp.float32),             # h
            pltpu.VMEM((Bt, Hp), jnp.float32),             # c
            pltpu.VMEM((Bt, Hp), jnp.float32),             # sum_t h_t
        ],
    )

    out = pl.pallas_call(
        _make_lstm_net_kernel(T=T, Tc=Tc, gate_dtype=gate_dtype),
        out_shape=jax.ShapeDtypeStruct((Bp, Lp), jnp.float32),
        grid_spec=grid_spec,
        compiler_params=pltpu.CompilerParams(
            dimension_semantics=("parallel", "arbitrary"),
            vmem_limit_bytes=vmem_limit,
        ),
    )(x, wih, whh, b, wlin, blin)

    return out[:B, :L]


# ---------------------------------------------------------------------------
# Pure-JAX reference (f32) for a correctness sanity check.
# ---------------------------------------------------------------------------
def net_reference(tokens, params):
    x = params["embed"][tokens].astype(jnp.float32)              # (B, T, H)
    B, T, H = x.shape
    w_ih, w_hh = params["w_ih"], params["w_hh"]
    bias = params["b_ih"] + params["b_hh"]

    def step(carry, xt):
        h, c = carry
        g = xt @ w_ih.T + h @ w_hh.T + bias
        i, f, gg, o = jnp.split(g, 4, axis=-1)
        c = jax.nn.sigmoid(f) * c + jax.nn.sigmoid(i) * jnp.tanh(gg)
        h = jax.nn.sigmoid(o) * jnp.tanh(c)
        return (h, c), h

    h0 = jnp.zeros((B, H), jnp.float32)
    c0 = jnp.zeros((B, H), jnp.float32)
    _, hs = lax.scan(step, (h0, c0), jnp.swapaxes(x, 0, 1))      # (T, B, H)
    h_mean = hs.mean(axis=0)
    logits = h_mean @ params["w_lin"].T + params["b_lin"]
    return jax.nn.log_softmax(logits, axis=-1)


def init_params(key, num_vocab, num_labels, dim_hidden):
    ks = jax.random.split(key, 7)
    k = 1.0 / jnp.sqrt(dim_hidden)
    u = lambda kk, shape: jax.random.uniform(kk, shape, jnp.float32, -k, k)
    return {
        "embed": jax.random.normal(ks[0], (num_vocab, dim_hidden), jnp.float32),
        "w_ih": u(ks[1], (4 * dim_hidden, dim_hidden)),
        "w_hh": u(ks[2], (4 * dim_hidden, dim_hidden)),
        "b_ih": u(ks[3], (4 * dim_hidden,)),
        "b_hh": u(ks[4], (4 * dim_hidden,)),
        "w_lin": u(ks[5], (num_labels, dim_hidden)),
        "b_lin": u(ks[6], (num_labels,)),
    }


if __name__ == "__main__":
    key = jax.random.PRNGKey(0)
    kp, kt, kt2 = jax.random.split(key, 3)

    # --- Small "spec" shapes: single batch tile, single time chunk. ---
    B, T, H = 2, 8, 32          # batch, sequence length, hidden dim
    V, L = 50, 5                # vocab size, num labels
    params = init_params(kp, V, L, H)
    tokens = jax.random.randint(kt, (B, T), 0, V, dtype=jnp.int32)

    out = net_forward(tokens, params)
    jax.block_until_ready(out)
    assert out.shape == (B, L)
    ref = net_reference(tokens, params)
    err = float(jnp.max(jnp.abs(out - ref)))
    assert err < 1e-1, f"mismatch vs reference: max abs err = {err}"
    assert bool(jnp.all(jnp.isfinite(out)))

    # --- Multi batch-tile + multi time-chunk path (exercises chunking, state
    #     carry across chunks, and the padded-timestep mask: 37 % 16 != 0). ---
    B2, T2 = 20, 37
    tokens2 = jax.random.randint(kt2, (B2, T2), 0, V, dtype=jnp.int32)
    out2 = net_forward(tokens2, params, time_chunk=16)
    jax.block_until_ready(out2)
    assert out2.shape == (B2, L)
    ref2 = net_reference(tokens2, params)
    err2 = float(jnp.max(jnp.abs(out2 - ref2)))
    assert err2 < 1e-1, f"mismatch vs reference (chunked): max abs err = {err2}"
    assert bool(jnp.all(jnp.isfinite(out2)))

    print("KERNEL_OK")
</pallas_src>

<mosaic_0001>
module attributes {stable_mosaic.version = 11 : i64} {
  func.func @kernel(%arg0: i32, %arg1: i32, %arg2: memref<1x1x64x128xbf16, #tpu.memory_space<vmem>>, %arg3: memref<128x512xbf16, #tpu.memory_space<vmem>>, %arg4: memref<128x512xbf16, #tpu.memory_space<vmem>>, %arg5: memref<1x512xf32, #tpu.memory_space<vmem>>, %arg6: memref<128x128xbf16, #tpu.memory_space<vmem>>, %arg7: memref<1x128xf32, #tpu.memory_space<vmem>>, %arg8: memref<8x128xf32, #tpu.memory_space<vmem>>, %arg9: memref<64x512xbf16, #tpu.memory_space<vmem>>, %arg10: memref<8x128xf32, #tpu.memory_space<vmem>>, %arg11: memref<8x128xf32, #tpu.memory_space<vmem>>, %arg12: memref<8x128xf32, #tpu.memory_space<vmem>>) attributes {dimension_semantics = [#tpu.dimension_semantics<parallel>, #tpu.dimension_semantics<arbitrary>], iteration_bounds = array<i64: 1, 1>, scalar_prefetch = 0 : i64, scratch_operands = 4 : i64, tpu.core_type = #tpu.core_type<tc>, window_params = [{transform_indices = @transform_0, window_bounds = array<i64: 1, 1, 64, 128>}, {pipeline_mode = #tpu.pipeline_mode<synchronous>, transform_indices = @transform_1, window_bounds = array<i64: 128, 512>}, {pipeline_mode = #tpu.pipeline_mode<synchronous>, transform_indices = @transform_2, window_bounds = array<i64: 128, 512>}, {pipeline_mode = #tpu.pipeline_mode<synchronous>, transform_indices = @transform_3, window_bounds = array<i64: 1, 512>}, {pipeline_mode = #tpu.pipeline_mode<synchronous>, transform_indices = @transform_4, window_bounds = array<i64: 128, 128>}, {pipeline_mode = #tpu.pipeline_mode<synchronous>, transform_indices = @transform_5, window_bounds = array<i64: 1, 128>}, {transform_indices = @transform_6, window_bounds = array<i64: 8, 128>}]} {
    %c0_i32 = arith.constant 0 : i32
    %0 = arith.cmpi eq, %arg1, %c0_i32 : i32
    %1 = arith.extui %0 : i1 to i32
    %c0_i32_0 = arith.constant 0 : i32
    %2 = arith.cmpi ne, %1, %c0_i32_0 : i32
    scf.if %2 {
      %cst_173 = arith.constant 0.000000e+00 : f32
      %413 = vector.broadcast %cst_173 : f32 to vector<8x128xf32>
      %c0_174 = arith.constant 0 : index
      %c0_175 = arith.constant 0 : index
      %414 = vector.load %arg10[%c0_174, %c0_175] : memref<8x128xf32, #tpu.memory_space<vmem>>, vector<8x128xf32>
      tpu.vector_store %arg10[%c0_174, %c0_175], %413 {strides = array<i32>} : memref<8x128xf32, #tpu.memory_space<vmem>>, vector<8x128xf32>,
      %cst_176 = arith.constant 0.000000e+00 : f32
      %415 = vector.broadcast %cst_176 : f32 to vector<8x128xf32>
      %c0_177 = arith.constant 0 : index
      %c0_178 = arith.constant 0 : index
      %416 = vector.load %arg11[%c0_177, %c0_178] : memref<8x128xf32, #tpu.memory_space<vmem>>, vector<8x128xf32>
      tpu.vector_store %arg11[%c0_177, %c0_178], %415 {strides = array<i32>} : memref<8x128xf32, #tpu.memory_space<vmem>>, vector<8x128xf32>,
      %cst_179 = arith.constant 0.000000e+00 : f32
      %417 = vector.broadcast %cst_179 : f32 to vector<8x128xf32>
      %c0_180 = arith.constant 0 : index
      %c0_181 = arith.constant 0 : index
      %418 = vector.load %arg12[%c0_180, %c0_181] : memref<8x128xf32, #tpu.memory_space<vmem>>, vector<8x128xf32>
      tpu.vector_store %arg12[%c0_180, %c0_181], %417 {strides = array<i32>} : memref<8x128xf32, #tpu.memory_space<vmem>>, vector<8x128xf32>,
    } else {
    }
    %c0 = arith.constant 0 : index
    %c0_1 = arith.constant 0 : index
    %c0_2 = arith.constant 0 : index
    %c0_3 = arith.constant 0 : index
    %3 = vector.load %arg2[%c0, %c0_1, %c0_2, %c0_3] : memref<1x1x64x128xbf16, #tpu.memory_space<vmem>>, vector<1x1x64x128xbf16>
    %4 = vector.shape_cast %3 : vector<1x1x64x128xbf16> to vector<64x128xbf16>
    %c0_4 = arith.constant 0 : index
    %c0_5 = arith.constant 0 : index
    %5 = vector.load %arg3[%c0_4, %c0_5] : memref<128x512xbf16, #tpu.memory_space<vmem>>, vector<128x512xbf16>
    %cst = arith.constant dense<0.000000e+00> : vector<64x512xf32>
    %6 = tpu.matmul %4, %5, %cst {dimension_numbers = #tpu.dot_dimension_numbers<[1], [0], [0], [1], [0, 0, 1, 1], [], []>} : vector<64x128xbf16>, vector<128x512xbf16>, vector<64x512xf32> -> vector<64x512xf32>
    %7 = arith.truncf %6 : vector<64x512xf32> to vector<64x512xbf16>
    %c0_6 = arith.constant 0 : index
    %c0_7 = arith.constant 0 : index
    %8 = vector.load %arg9[%c0_6, %c0_7] : memref<64x512xbf16, #tpu.memory_space<vmem>>, vector<64x512xbf16>
    tpu.vector_store %arg9[%c0_6, %c0_7], %7 {strides = array<i32>} : memref<64x512xbf16, #tpu.memory_space<vmem>>, vector<64x512xbf16>,
    %c0_8 = arith.constant 0 : index
    %c0_9 = arith.constant 0 : index
    %9 = vector.load %arg5[%c0_8, %c0_9] : memref<1x512xf32, #tpu.memory_space<vmem>>, vector<1x512xf32>
    %c0_i32_10 = arith.constant 0 : i32
    %c8_i32 = arith.constant 8 : i32
    %10 = arith.muli %c0_i32_10, %c8_i32 : i32
    %11 = tpu.assume_multiple %10, 8 : i32
    %12 = arith.index_cast %11 : i32 to index
    %c0_11 = arith.constant 0 : index
    %13 = vector.load %arg9[%12, %c0_11] : memref<64x512xbf16, #tpu.memory_space<vmem>>, vector<8x512xbf16>
    %14 = arith.extf %13 : vector<8x512xbf16> to vector<8x512xf32>
    %15 = vector.broadcast %9 : vector<1x512xf32> to vector<8x512xf32>
    %16 = arith.addf %14, %15 : vector<8x512xf32>
    %c0_12 = arith.constant 0 : index
    %c0_13 = arith.constant 0 : index
    %17 = vector.load %arg10[%c0_12, %c0_13] : memref<8x128xf32, #tpu.memory_space<vmem>>, vector<8x128xf32>
    %18 = arith.truncf %17 : vector<8x128xf32> to vector<8x128xbf16>
    %c0_14 = arith.constant 0 : index
    %c0_15 = arith.constant 0 : index
    %19 = vector.load %arg4[%c0_14, %c0_15] : memref<128x512xbf16, #tpu.memory_space<vmem>>, vector<128x512xbf16>
    %cst_16 = arith.constant dense<0.000000e+00> : vector<8x512xf32>
    %20 = tpu.matmul %18, %19, %cst_16 {dimension_numbers = #tpu.dot_dimension_numbers<[1], [0], [0], [1], [0, 0, 1, 1], [], []>} : vector<8x128xbf16>, vector<128x512xbf16>, vector<8x512xf32> -> vector<8x512xf32>
    %21 = arith.addf %16, %20 : vector<8x512xf32>
    %22 = arith.truncf %21 : vector<8x512xf32> to vector<8x512xbf16>
    %23 = vector.extract_strided_slice %22 {offsets = [0, 0], sizes = [8, 128], strides = [1, 1]} : vector<8x512xbf16> to vector<8x128xbf16>
    %24 = arith.negf %23 : vector<8x128xbf16>
    %25 = math.exp %24 : vector<8x128xbf16>
    %cst_17 = arith.constant 1.000000e+00 : bf16
    %26 = vector.broadcast %cst_17 : bf16 to vector<8x128xbf16>
    %27 = arith.addf %26, %25 : vector<8x128xbf16>
    %28 = arith.divf %26, %27 : vector<8x128xbf16>
    %29 = arith.extf %28 : vector<8x128xbf16> to vector<8x128xf32>
    %30 = vector.extract_strided_slice %22 {offsets = [0, 128], sizes = [8, 128], strides = [1, 1]} : vector<8x512xbf16> to vector<8x128xbf16>
    %31 = arith.negf %30 : vector<8x128xbf16>
    %32 = math.exp %31 : vector<8x128xbf16>
    %cst_18 = arith.constant 1.000000e+00 : bf16
    %33 = vector.broadcast %cst_18 : bf16 to vector<8x128xbf16>
    %34 = arith.addf %33, %32 : vector<8x128xbf16>
    %35 = arith.divf %33, %34 : vector<8x128xbf16>
    %36 = arith.extf %35 : vector<8x128xbf16> to vector<8x128xf32>
    %37 = vector.extract_strided_slice %22 {offsets = [0, 256], sizes = [8, 128], strides = [1, 1]} : vector<8x512xbf16> to vector<8x128xbf16>
    %38 = math.tanh %37 : vector<8x128xbf16>
    %39 = arith.extf %38 : vector<8x128xbf16> to vector<8x128xf32>
    %40 = vector.extract_strided_slice %22 {offsets = [0, 384], sizes = [8, 128], strides = [1, 1]} : vector<8x512xbf16> to vector<8x128xbf16>
    %41 = arith.negf %40 : vector<8x128xbf16>
    %42 = math.exp %41 : vector<8x128xbf16>
    %cst_19 = arith.constant 1.000000e+00 : bf16
    %43 = vector.broadcast %cst_19 : bf16 to vector<8x128xbf16>
    %44 = arith.addf %43, %42 : vector<8x128xbf16>
    %45 = arith.divf %43, %44 : vector<8x128xbf16>
    %46 = arith.extf %45 : vector<8x128xbf16> to vector<8x128xf32>
    %c0_20 = arith.constant 0 : index
    %c0_21 = arith.constant 0 : index
    %47 = vector.load %arg11[%c0_20, %c0_21] : memref<8x128xf32, #tpu.memory_space<vmem>>, vector<8x128xf32>
    %48 = arith.mulf %36, %47 : vector<8x128xf32>
    %49 = arith.mulf %29, %39 : vector<8x128xf32>
    %50 = arith.addf %48, %49 : vector<8x128xf32>
    %51 = arith.truncf %50 : vector<8x128xf32> to vector<8x128xbf16>
    %52 = math.tanh %51 : vector<8x128xbf16>
    %53 = arith.extf %52 : vector<8x128xbf16> to vector<8x128xf32>
    %54 = arith.mulf %46, %53 : vector<8x128xf32>
    %c0_22 = arith.constant 0 : index
    %c0_23 = arith.constant 0 : index
    %55 = vector.load %arg11[%c0_22, %c0_23] : memref<8x128xf32, #tpu.memory_space<vmem>>, vector<8x128xf32>
    tpu.vector_store %arg11[%c0_22, %c0_23], %50 {strides = array<i32>} : memref<8x128xf32, #tpu.memory_space<vmem>>, vector<8x128xf32>,
    %c0_24 = arith.constant 0 : index
    %c0_25 = arith.constant 0 : index
    %56 = vector.load %arg10[%c0_24, %c0_25] : memref<8x128xf32, #tpu.memory_space<vmem>>, vector<8x128xf32>
    tpu.vector_store %arg10[%c0_24, %c0_25], %54 {strides = array<i32>} : memref<8x128xf32, #tpu.memory_space<vmem>>, vector<8x128xf32>,
    %c0_26 = arith.constant 0 : index
    %c0_27 = arith.constant 0 : index
    %57 = vector.load %arg12[%c0_26, %c0_27] : memref<8x128xf32, #tpu.memory_space<vmem>>, vector<8x128xf32>
    %58 = arith.addf %57, %54 : vector<8x128xf32>
    %c0_28 = arith.constant 0 : index
    %c0_29 = arith.constant 0 : index
    %59 = vector.load %arg12[%c0_28, %c0_29] : memref<8x128xf32, #tpu.memory_space<vmem>>, vector<8x128xf32>
    tpu.vector_store %arg12[%c0_28, %c0_29], %58 {strides = array<i32>} : memref<8x128xf32, #tpu.memory_space<vmem>>, vector<8x128xf32>,
    %c1_i32 = arith.constant 1 : i32
    %c8_i32_30 = arith.constant 8 : i32
    %60 = arith.muli %c1_i32, %c8_i32_30 : i32
    %61 = tpu.assume_multiple %60, 8 : i32
    %62 = arith.index_cast %61 : i32 to index
    %c0_31 = arith.constant 0 : index
    %63 = vector.load %arg9[%62, %c0_31] : memref<64x512xbf16, #tpu.memory_space<vmem>>, vector<8x512xbf16>
    %64 = arith.extf %63 : vector<8x512xbf16> to vector<8x512xf32>
    %65 = vector.broadcast %9 : vector<1x512xf32> to vector<8x512xf32>
    %66 = arith.addf %64, %65 : vector<8x512xf32>
    %c0_32 = arith.constant 0 : index
    %c0_33 = arith.constant 0 : index
    %67 = vector.load %arg10[%c0_32, %c0_33] : memref<8x128xf32, #tpu.memory_space<vmem>>, vector<8x128xf32>
    %68 = arith.truncf %67 : vector<8x128xf32> to vector<8x128xbf16>
    %c0_34 = arith.constant 0 : index
    %c0_35 = arith.constant 0 : index
    %69 = vector.load %arg4[%c0_34, %c0_35] : memref<128x512xbf16, #tpu.memory_space<vmem>>, vector<128x512xbf16>
    %cst_36 = arith.constant dense<0.000000e+00> : vector<8x512xf32>
    %70 = tpu.matmul %68, %69, %cst_36 {dimension_numbers = #tpu.dot_dimension_numbers<[1], [0], [0], [1], [0, 0, 1, 1], [], []>} : vector<8x128xbf16>, vector<128x512xbf16>, vector<8x512xf32> -> vector<8x512xf32>
    %71 = arith.addf %66, %70 : vector<8x512xf32>
    %72 = arith.truncf %71 : vector<8x512xf32> to vector<8x512xbf16>
    %73 = vector.extract_strided_slice %72 {offsets = [0, 0], sizes = [8, 128], strides = [1, 1]} : vector<8x512xbf16> to vector<8x128xbf16>
    %74 = arith.negf %73 : vector<8x128xbf16>
    %75 = math.exp %74 : vector<8x128xbf16>
    %cst_37 = arith.constant 1.000000e+00 : bf16
    %76 = vector.broadcast %cst_37 : bf16 to vector<8x128xbf16>
    %77 = arith.addf %76, %75 : vector<8x128xbf16>
    %78 = arith.divf %76, %77 : vector<8x128xbf16>
    %79 = arith.extf %78 : vector<8x128xbf16> to vector<8x128xf32>
    %80 = vector.extract_strided_slice %72 {offsets = [0, 128], sizes = [8, 128], strides = [1, 1]} : vector<8x512xbf16> to vector<8x128xbf16>
    %81 = arith.negf %80 : vector<8x128xbf16>
    %82 = math.exp %81 : vector<8x128xbf16>
    %cst_38 = arith.constant 1.000000e+00 : bf16
    %83 = vector.broadcast %cst_38 : bf16 to vector<8x128xbf16>
    %84 = arith.addf %83, %82 : vector<8x128xbf16>
    %85 = arith.divf %83, %84 : vector<8x128xbf16>
    %86 = arith.extf %85 : vector<8x128xbf16> to vector<8x128xf32>
    %87 = vector.extract_strided_slice %72 {offsets = [0, 256], sizes = [8, 128], strides = [1, 1]} : vector<8x512xbf16> to vector<8x128xbf16>
    %88 = math.tanh %87 : vector<8x128xbf16>
    %89 = arith.extf %88 : vector<8x128xbf16> to vector<8x128xf32>
    %90 = vector.extract_strided_slice %72 {offsets = [0, 384], sizes = [8, 128], strides = [1, 1]} : vector<8x512xbf16> to vector<8x128xbf16>
    %91 = arith.negf %90 : vector<8x128xbf16>
    %92 = math.exp %91 : vector<8x128xbf16>
    %cst_39 = arith.constant 1.000000e+00 : bf16
    %93 = vector.broadcast %cst_39 : bf16 to vector<8x128xbf16>
    %94 = arith.addf %93, %92 : vector<8x128xbf16>
    %95 = arith.divf %93, %94 : vector<8x128xbf16>
    %96 = arith.extf %95 : vector<8x128xbf16> to vector<8x128xf32>
    %c0_40 = arith.constant 0 : index
    %c0_41 = arith.constant 0 : index
    %97 = vector.load %arg11[%c0_40, %c0_41] : memref<8x128xf32, #tpu.memory_space<vmem>>, vector<8x128xf32>
    %98 = arith.mulf %86, %97 : vector<8x128xf32>
    %99 = arith.mulf %79, %89 : vector<8x128xf32>
    %100 = arith.addf %98, %99 : vector<8x128xf32>
    %101 = arith.truncf %100 : vector<8x128xf32> to vector<8x128xbf16>
    %102 = math.tanh %101 : vector<8x128xbf16>
    %103 = arith.extf %102 : vector<8x128xbf16> to vector<8x128xf32>
    %104 = arith.mulf %96, %103 : vector<8x128xf32>
    %c0_42 = arith.constant 0 : index
    %c0_43 = arith.constant 0 : index
    %105 = vector.load %arg11[%c0_42, %c0_43] : memref<8x128xf32, #tpu.memory_space<vmem>>, vector<8x128xf32>
    tpu.vector_store %arg11[%c0_42, %c0_43], %100 {strides = array<i32>} : memref<8x128xf32, #tpu.memory_space<vmem>>, vector<8x128xf32>,
    %c0_44 = arith.constant 0 : index
    %c0_45 = arith.constant 0 : index
    %106 = vector.load %arg10[%c0_44, %c0_45] : memref<8x128xf32, #tpu.memory_space<vmem>>, vector<8x128xf32>
    tpu.vector_store %arg10[%c0_44, %c0_45], %104 {strides = array<i32>} : memref<8x128xf32, #tpu.memory_space<vmem>>, vector<8x128xf32>,
    %c0_46 = arith.constant 0 : index
    %c0_47 = arith.constant 0 : index
    %107 = vector.load %arg12[%c0_46, %c0_47] : memref<8x128xf32, #tpu.memory_space<vmem>>, vector<8x128xf32>
    %108 = arith.addf %107, %104 : vector<8x128xf32>
    %c0_48 = arith.constant 0 : index
    %c0_49 = arith.constant 0 : index
    %109 = vector.load %arg12[%c0_48, %c0_49] : memref<8x128xf32, #tpu.memory_space<vmem>>, vector<8x128xf32>
    tpu.vector_store %arg12[%c0_48, %c0_49], %108 {strides = array<i32>} : memref<8x128xf32, #tpu.memory_space<vmem>>, vector<8x128xf32>,
    %c2_i32 = arith.constant 2 : i32
    %c8_i32_50 = arith.constant 8 : i32
    %110 = arith.muli %c2_i32, %c8_i32_50 : i32
    %111 = tpu.assume_multiple %110, 8 : i32
    %112 = arith.index_cast %111 : i32 to index
    %c0_51 = arith.constant 0 : index
    %113 = vector.load %arg9[%112, %c0_51] : memref<64x512xbf16, #tpu.memory_space<vmem>>, vector<8x512xbf16>
    %114 = arith.extf %113 : vector<8x512xbf16> to vector<8x512xf32>
    %115 = vector.broadcast %9 : vector<1x512xf32> to vector<8x512xf32>
    %116 = arith.addf %114, %115 : vector<8x512xf32>
    %c0_52 = arith.constant 0 : index
    %c0_53 = arith.constant 0 : index
    %117 = vector.load %arg10[%c0_52, %c0_53] : memref<8x128xf32, #tpu.memory_space<vmem>>, vector<8x128xf32>
    %118 = arith.truncf %117 : vector<8x128xf32> to vector<8x128xbf16>
    %c0_54 = arith.constant 0 : index
    %c0_55 = arith.constant 0 : index
    %119 = vector.load %arg4[%c0_54, %c0_55] : memref<128x512xbf16, #tpu.memory_space<vmem>>, vector<128x512xbf16>
    %cst_56 = arith.constant dense<0.000000e+00> : vector<8x512xf32>
    %120 = tpu.matmul %118, %119, %cst_56 {dimension_numbers = #tpu.dot_dimension_numbers<[1], [0], [0], [1], [0, 0, 1, 1], [], []>} : vector<8x128xbf16>, vector<128x512xbf16>, vector<8x512xf32> -> vector<8x512xf32>
    %121 = arith.addf %116, %120 : vector<8x512xf32>
    %122 = arith.truncf %121 : vector<8x512xf32> to vector<8x512xbf16>
    %123 = vector.extract_strided_slice %122 {offsets = [0, 0], sizes = [8, 128], strides = [1, 1]} : vector<8x512xbf16> to vector<8x128xbf16>
    %124 = arith.negf %123 : vector<8x128xbf16>
    %125 = math.exp %124 : vector<8x128xbf16>
    %cst_57 = arith.constant 1.000000e+00 : bf16
    %126 = vector.broadcast %cst_57 : bf16 to vector<8x128xbf16>
    %127 = arith.addf %126, %125 : vector<8x128xbf16>
    %128 = arith.divf %126, %127 : vector<8x128xbf16>
    %129 = arith.extf %128 : vector<8x128xbf16> to vector<8x128xf32>
    %130 = vector.extract_strided_slice %122 {offsets = [0, 128], sizes = [8, 128], strides = [1, 1]} : vector<8x512xbf16> to vector<8x128xbf16>
    %131 = arith.negf %130 : vector<8x128xbf16>
    %132 = math.exp %131 : vector<8x128xbf16>
    %cst_58 = arith.constant 1.000000e+00 : bf16
    %133 = vector.broadcast %cst_58 : bf16 to vector<8x128xbf16>
    %134 = arith.addf %133, %132 : vector<8x128xbf16>
    %135 = arith.divf %133, %134 : vector<8x128xbf16>
    %136 = arith.extf %135 : vector<8x128xbf16> to vector<8x128xf32>
    %137 = vector.extract_strided_slice %122 {offsets = [0, 256], sizes = [8, 128], strides = [1, 1]} : vector<8x512xbf16> to vector<8x128xbf16>
    %138 = math.tanh %137 : vector<8x128xbf16>
    %139 = arith.extf %138 : vector<8x128xbf16> to vector<8x128xf32>
    %140 = vector.extract_strided_slice %122 {offsets = [0, 384], sizes = [8, 128], strides = [1, 1]} : vector<8x512xbf16> to vector<8x128xbf16>
    %141 = arith.negf %140 : vector<8x128xbf16>
    %142 = math.exp %141 : vector<8x128xbf16>
    %cst_59 = arith.constant 1.000000e+00 : bf16
    %143 = vector.broadcast %cst_59 : bf16 to vector<8x128xbf16>
    %144 = arith.addf %143, %142 : vector<8x128xbf16>
    %145 = arith.divf %143, %144 : vector<8x128xbf16>
    %146 = arith.extf %145 : vector<8x128xbf16> to vector<8x128xf32>
    %c0_60 = arith.constant 0 : index
    %c0_61 = arith.constant 0 : index
    %147 = vector.load %arg11[%c0_60, %c0_61] : memref<8x128xf32, #tpu.memory_space<vmem>>, vector<8x128xf32>
    %148 = arith.mulf %136, %147 : vector<8x128xf32>
    %149 = arith.mulf %129, %139 : vector<8x128xf32>
    %150 = arith.addf %148, %149 : vector<8x128xf32>
    %151 = arith.truncf %150 : vector<8x128xf32> to vector<8x128xbf16>
    %152 = math.tanh %151 : vector<8x128xbf16>
    %153 = arith.extf %152 : vector<8x128xbf16> to vector<8x128xf32>
    %154 = arith.mulf %146, %153 : vector<8x128xf32>
    %c0_62 = arith.constant 0 : index
    %c0_63 = arith.constant 0 : index
    %155 = vector.load %arg11[%c0_62, %c0_63] : memref<8x128xf32, #tpu.memory_space<vmem>>, vector<8x128xf32>
    tpu.vector_store %arg11[%c0_62, %c0_63], %150 {strides = array<i32>} : memref<8x128xf32, #tpu.memory_space<vmem>>, vector<8x128xf32>,
    %c0_64 = arith.constant 0 : index
    %c0_65 = arith.constant 0 : index
    %156 = vector.load %arg10[%c0_64, %c0_65] : memref<8x128xf32, #tpu.memory_space<vmem>>, vector<8x128xf32>
    tpu.vector_store %arg10[%c0_64, %c0_65], %154 {strides = array<i32>} : memref<8x128xf32, #tpu.memory_space<vmem>>, vector<8x128xf32>,
    %c0_66 = arith.constant 0 : index
    %c0_67 = arith.constant 0 : index
    %157 = vector.load %arg12[%c0_66, %c0_67] : memref<8x128xf32, #tpu.memory_space<vmem>>, vector<8x128xf32>
    %158 = arith.addf %157, %154 : vector<8x128xf32>
    %c0_68 = arith.constant 0 : index
    %c0_69 = arith.constant 0 : index
    %159 = vector.load %arg12[%c0_68, %c0_69] : memref<8x128xf32, #tpu.memory_space<vmem>>, vector<8x128xf32>
    tpu.vector_store %arg12[%c0_68, %c0_69], %158 {strides = array<i32>} : memref<8x128xf32, #tpu.memory_space<vmem>>, vector<8x128xf32>,
    %c3_i32 = arith.constant 3 : i32
    %c8_i32_70 = arith.constant 8 : i32
    %160 = arith.muli %c3_i32, %c8_i32_70 : i32
    %161 = tpu.assume_multiple %160, 8 : i32
    %162 = arith.index_cast %161 : i32 to index
    %c0_71 = arith.constant 0 : index
    %163 = vector.load %arg9[%162, %c0_71] : memref<64x512xbf16, #tpu.memory_space<vmem>>, vector<8x512xbf16>
    %164 = arith.extf %163 : vector<8x512xbf16> to vector<8x512xf32>
    %165 = vector.broadcast %9 : vector<1x512xf32> to vector<8x512xf32>
    %166 = arith.addf %164, %165 : vector<8x512xf32>
    %c0_72 = arith.constant 0 : index
    %c0_73 = arith.constant 0 : index
    %167 = vector.load %arg10[%c0_72, %c0_73] : memref<8x128xf32, #tpu.memory_space<vmem>>, vector<8x128xf32>
    %168 = arith.truncf %167 : vector<8x128xf32> to vector<8x128xbf16>
    %c0_74 = arith.constant 0 : index
    %c0_75 = arith.constant 0 : index
    %169 = vector.load %arg4[%c0_74, %c0_75] : memref<128x512xbf16, #tpu.memory_space<vmem>>, vector<128x512xbf16>
    %cst_76 = arith.constant dense<0.000000e+00> : vector<8x512xf32>
    %170 = tpu.matmul %168, %169, %cst_76 {dimension_numbers = #tpu.dot_dimension_numbers<[1], [0], [0], [1], [0, 0, 1, 1], [], []>} : vector<8x128xbf16>, vector<128x512xbf16>, vector<8x512xf32> -> vector<8x512xf32>
    %171 = arith.addf %166, %170 : vector<8x512xf32>
    %172 = arith.truncf %171 : vector<8x512xf32> to vector<8x512xbf16>
    %173 = vector.extract_strided_slice %172 {offsets = [0, 0], sizes = [8, 128], strides = [1, 1]} : vector<8x512xbf16> to vector<8x128xbf16>
    %174 = arith.negf %173 : vector<8x128xbf16>
    %175 = math.exp %174 : vector<8x128xbf16>
    %cst_77 = arith.constant 1.000000e+00 : bf16
    %176 = vector.broadcast %cst_77 : bf16 to vector<8x128xbf16>
    %177 = arith.addf %176, %175 : vector<8x128xbf16>
    %178 = arith.divf %176, %177 : vector<8x128xbf16>
    %179 = arith.extf %178 : vector<8x128xbf16> to vector<8x128xf32>
    %180 = vector.extract_strided_slice %172 {offsets = [0, 128], sizes = [8, 128], strides = [1, 1]} : vector<8x512xbf16> to vector<8x128xbf16>
    %181 = arith.negf %180 : vector<8x128xbf16>
    %182 = math.exp %181 : vector<8x128xbf16>
    %cst_78 = arith.constant 1.000000e+00 : bf16
    %183 = vector.broadcast %cst_78 : bf16 to vector<8x128xbf16>
    %184 = arith.addf %183, %182 : vector<8x128xbf16>
    %185 = arith.divf %183, %184 : vector<8x128xbf16>
    %186 = arith.extf %185 : vector<8x128xbf16> to vector<8x128xf32>
    %187 = vector.extract_strided_slice %172 {offsets = [0, 256], sizes = [8, 128], strides = [1, 1]} : vector<8x512xbf16> to vector<8x128xbf16>
    %188 = math.tanh %187 : vector<8x128xbf16>
    %189 = arith.extf %188 : vector<8x128xbf16> to vector<8x128xf32>
    %190 = vector.extract_strided_slice %172 {offsets = [0, 384], sizes = [8, 128], strides = [1, 1]} : vector<8x512xbf16> to vector<8x128xbf16>
    %191 = arith.negf %190 : vector<8x128xbf16>
    %192 = math.exp %191 : vector<8x128xbf16>
    %cst_79 = arith.constant 1.000000e+00 : bf16
    %193 = vector.broadcast %cst_79 : bf16 to vector<8x128xbf16>
    %194 = arith.addf %193, %192 : vector<8x128xbf16>
    %195 = arith.divf %193, %194 : vector<8x128xbf16>
    %196 = arith.extf %195 : vector<8x128xbf16> to vector<8x128xf32>
    %c0_80 = arith.constant 0 : index
    %c0_81 = arith.constant 0 : index
    %197 = vector.load %arg11[%c0_80, %c0_81] : memref<8x128xf32, #tpu.memory_space<vmem>>, vector<8x128xf32>
    %198 = arith.mulf %186, %197 : vector<8x128xf32>
    %199 = arith.mulf %179, %189 : vector<8x128xf32>
    %200 = arith.addf %198, %199 : vector<8x128xf32>
    %201 = arith.truncf %200 : vector<8x128xf32> to vector<8x128xbf16>
    %202 = math.tanh %201 : vector<8x128xbf16>
    %203 = arith.extf %202 : vector<8x128xbf16> to vector<8x128xf32>
    %204 = arith.mulf %196, %203 : vector<8x128xf32>
    %c0_82 = arith.constant 0 : index
    %c0_83 = arith.constant 0 : index
    %205 = vector.load %arg11[%c0_82, %c0_83] : memref<8x128xf32, #tpu.memory_space<vmem>>, vector<8x128xf32>
    tpu.vector_store %arg11[%c0_82, %c0_83], %200 {strides = array<i32>} : memref<8x128xf32, #tpu.memory_space<vmem>>, vector<8x128xf32>,
    %c0_84 = arith.constant 0 : index
    %c0_85 = arith.constant 0 : index
    %206 = vector.load %arg10[%c0_84, %c0_85] : memref<8x128xf32, #tpu.memory_space<vmem>>, vector<8x128xf32>
    tpu.vector_store %arg10[%c0_84, %c0_85], %204 {strides = array<i32>} : memref<8x128xf32, #tpu.memory_space<vmem>>, vector<8x128xf32>,
    %c0_86 = arith.constant 0 : index
    %c0_87 = arith.constant 0 : index
    %207 = vector.load %arg12[%c0_86, %c0_87] : memref<8x128xf32, #tpu.memory_space<vmem>>, vector<8x128xf32>
    %208 = arith.addf %207, %204 : vector<8x128xf32>
    %c0_88 = arith.constant 0 : index
    %c0_89 = arith.constant 0 : index
    %209 = vector.load %arg12[%c0_88, %c0_89] : memref<8x128xf32, #tpu.memory_space<vmem>>, vector<8x128xf32>
    tpu.vector_store %arg12[%c0_88, %c0_89], %208 {strides = array<i32>} : memref<8x128xf32, #tpu.memory_space<vmem>>, vector<8x128xf32>,
    %c4_i32 = arith.constant 4 : i32
    %c8_i32_90 = arith.constant 8 : i32
    %210 = arith.muli %c4_i32, %c8_i32_90 : i32
    %211 = tpu.assume_multiple %210, 8 : i32
    %212 = arith.index_cast %211 : i32 to index
    %c0_91 = arith.constant 0 : index
    %213 = vector.load %arg9[%212, %c0_91] : memref<64x512xbf16, #tpu.memory_space<vmem>>, vector<8x512xbf16>
    %214 = arith.extf %213 : vector<8x512xbf16> to vector<8x512xf32>
    %215 = vector.broadcast %9 : vector<1x512xf32> to vector<8x512xf32>
    %216 = arith.addf %214, %215 : vector<8x512xf32>
    %c0_92 = arith.constant 0 : index
    %c0_93 = arith.constant 0 : index
    %217 = vector.load %arg10[%c0_92, %c0_93] : memref<8x128xf32, #tpu.memory_space<vmem>>, vector<8x128xf32>
    %218 = arith.truncf %217 : vector<8x128xf32> to vector<8x128xbf16>
    %c0_94 = arith.constant 0 : index
    %c0_95 = arith.constant 0 : index
    %219 = vector.load %arg4[%c0_94, %c0_95] : memref<128x512xbf16, #tpu.memory_space<vmem>>, vector<128x512xbf16>
    %cst_96 = arith.constant dense<0.000000e+00> : vector<8x512xf32>
    %220 = tpu.matmul %218, %219, %cst_96 {dimension_numbers = #tpu.dot_dimension_numbers<[1], [0], [0], [1], [0, 0, 1, 1], [], []>} : vector<8x128xbf16>, vector<128x512xbf16>, vector<8x512xf32> -> vector<8x512xf32>
    %221 = arith.addf %216, %220 : vector<8x512xf32>
    %222 = arith.truncf %221 : vector<8x512xf32> to vector<8x512xbf16>
    %223 = vector.extract_strided_slice %222 {offsets = [0, 0], sizes = [8, 128], strides = [1, 1]} : vector<8x512xbf16> to vector<8x128xbf16>
    %224 = arith.negf %223 : vector<8x128xbf16>
    %225 = math.exp %224 : vector<8x128xbf16>
    %cst_97 = arith.constant 1.000000e+00 : bf16
    %226 = vector.broadcast %cst_97 : bf16 to vector<8x128xbf16>
    %227 = arith.addf %226, %225 : vector<8x128xbf16>
    %228 = arith.divf %226, %227 : vector<8x128xbf16>
    %229 = arith.extf %228 : vector<8x128xbf16> to vector<8x128xf32>
    %230 = vector.extract_strided_slice %222 {offsets = [0, 128], sizes = [8, 128], strides = [1, 1]} : vector<8x512xbf16> to vector<8x128xbf16>
    %231 = arith.negf %230 : vector<8x128xbf16>
    %232 = math.exp %231 : vector<8x128xbf16>
    %cst_98 = arith.constant 1.000000e+00 : bf16
    %233 = vector.broadcast %cst_98 : bf16 to vector<8x128xbf16>
    %234 = arith.addf %233, %232 : vector<8x128xbf16>
    %235 = arith.divf %233, %234 : vector<8x128xbf16>
    %236 = arith.extf %235 : vector<8x128xbf16> to vector<8x128xf32>
    %237 = vector.extract_strided_slice %222 {offsets = [0, 256], sizes = [8, 128], strides = [1, 1]} : vector<8x512xbf16> to vector<8x128xbf16>
    %238 = math.tanh %237 : vector<8x128xbf16>
    %239 = arith.extf %238 : vector<8x128xbf16> to vector<8x128xf32>
    %240 = vector.extract_strided_slice %222 {offsets = [0, 384], sizes = [8, 128], strides = [1, 1]} : vector<8x512xbf16> to vector<8x128xbf16>
    %241 = arith.negf %240 : vector<8x128xbf16>
    %242 = math.exp %241 : vector<8x128xbf16>
    %cst_99 = arith.constant 1.000000e+00 : bf16
    %243 = vector.broadcast %cst_99 : bf16 to vector<8x128xbf16>
    %244 = arith.addf %243, %242 : vector<8x128xbf16>
    %245 = arith.divf %243, %244 : vector<8x128xbf16>
    %246 = arith.extf %245 : vector<8x128xbf16> to vector<8x128xf32>
    %c0_100 = arith.constant 0 : index
    %c0_101 = arith.constant 0 : index
    %247 = vector.load %arg11[%c0_100, %c0_101] : memref<8x128xf32, #tpu.memory_space<vmem>>, vector<8x128xf32>
    %248 = arith.mulf %236, %247 : vector<8x128xf32>
    %249 = arith.mulf %229, %239 : vector<8x128xf32>
    %250 = arith.addf %248, %249 : vector<8x128xf32>
    %251 = arith.truncf %250 : vector<8x128xf32> to vector<8x128xbf16>
    %252 = math.tanh %251 : vector<8x128xbf16>
    %253 = arith.extf %252 : vector<8x128xbf16> to vector<8x128xf32>
    %254 = arith.mulf %246, %253 : vector<8x128xf32>
    %c0_102 = arith.constant 0 : index
    %c0_103 = arith.constant 0 : index
    %255 = vector.load %arg11[%c0_102, %c0_103] : memref<8x128xf32, #tpu.memory_space<vmem>>, vector<8x128xf32>
    tpu.vector_store %arg11[%c0_102, %c0_103], %250 {strides = array<i32>} : memref<8x128xf32, #tpu.memory_space<vmem>>, vector<8x128xf32>,
    %c0_104 = arith.constant 0 : index
    %c0_105 = arith.constant 0 : index
    %256 = vector.load %arg10[%c0_104, %c0_105] : memref<8x128xf32, #tpu.memory_space<vmem>>, vector<8x128xf32>
    tpu.vector_store %arg10[%c0_104, %c0_105], %254 {strides = array<i32>} : memref<8x128xf32, #tpu.memory_space<vmem>>, vector<8x128xf32>,
    %c0_106 = arith.constant 0 : index
    %c0_107 = arith.constant 0 : index
    %257 = vector.load %arg12[%c0_106, %c0_107] : memref<8x128xf32, #tpu.memory_space<vmem>>, vector<8x128xf32>
    %258 = arith.addf %257, %254 : vector<8x128xf32>
    %c0_108 = arith.constant 0 : index
    %c0_109 = arith.constant 0 : index
    %259 = vector.load %arg12[%c0_108, %c0_109] : memref<8x128xf32, #tpu.memory_space<vmem>>, vector<8x128xf32>
    tpu.vector_store %arg12[%c0_108, %c0_109], %258 {strides = array<i32>} : memref<8x128xf32, #tpu.memory_space<vmem>>, vector<8x128xf32>,
    %c5_i32 = arith.constant 5 : i32
    %c8_i32_110 = arith.constant 8 : i32
    %260 = arith.muli %c5_i32, %c8_i32_110 : i32
    %261 = tpu.assume_multiple %260, 8 : i32
    %262 = arith.index_cast %261 : i32 to index
    %c0_111 = arith.constant 0 : index
    %263 = vector.load %arg9[%262, %c0_111] : memref<64x512xbf16, #tpu.memory_space<vmem>>, vector<8x512xbf16>
    %264 = arith.extf %263 : vector<8x512xbf16> to vector<8x512xf32>
    %265 = vector.broadcast %9 : vector<1x512xf32> to vector<8x512xf32>
    %266 = arith.addf %264, %265 : vector<8x512xf32>
    %c0_112 = arith.constant 0 : index
    %c0_113 = arith.constant 0 : index
    %267 = vector.load %arg10[%c0_112, %c0_113] : memref<8x128xf32, #tpu.memory_space<vmem>>, vector<8x128xf32>
    %268 = arith.truncf %267 : vector<8x128xf32> to vector<8x128xbf16>
    %c0_114 = arith.constant 0 : index
    %c0_115 = arith.constant 0 : index
    %269 = vector.load %arg4[%c0_114, %c0_115] : memref<128x512xbf16, #tpu.memory_space<vmem>>, vector<128x512xbf16>
    %cst_116 = arith.constant dense<0.000000e+00> : vector<8x512xf32>
    %270 = tpu.matmul %268, %269, %cst_116 {dimension_numbers = #tpu.dot_dimension_numbers<[1], [0], [0], [1], [0, 0, 1, 1], [], []>} : vector<8x128xbf16>, vector<128x512xbf16>, vector<8x512xf32> -> vector<8x512xf32>
    %271 = arith.addf %266, %270 : vector<8x512xf32>
    %272 = arith.truncf %271 : vector<8x512xf32> to vector<8x512xbf16>
    %273 = vector.extract_strided_slice %272 {offsets = [0, 0], sizes = [8, 128], strides = [1, 1]} : vector<8x512xbf16> to vector<8x128xbf16>
    %274 = arith.negf %273 : vector<8x128xbf16>
    %275 = math.exp %274 : vector<8x128xbf16>
    %cst_117 = arith.constant 1.000000e+00 : bf16
    %276 = vector.broadcast %cst_117 : bf16 to vector<8x128xbf16>
    %277 = arith.addf %276, %275 : vector<8x128xbf16>
    %278 = arith.divf %276, %277 : vector<8x128xbf16>
    %279 = arith.extf %278 : vector<8x128xbf16> to vector<8x128xf32>
    %280 = vector.extract_strided_slice %272 {offsets = [0, 128], sizes = [8, 128], strides = [1, 1]} : vector<8x512xbf16> to vector<8x128xbf16>
    %281 = arith.negf %280 : vector<8x128xbf16>
    %282 = math.exp %281 : vector<8x128xbf16>
    %cst_118 = arith.constant 1.000000e+00 : bf16
    %283 = vector.broadcast %cst_118 : bf16 to vector<8x128xbf16>
    %284 = arith.addf %283, %282 : vector<8x128xbf16>
    %285 = arith.divf %283, %284 : vector<8x128xbf16>
    %286 = arith.extf %285 : vector<8x128xbf16> to vector<8x128xf32>
    %287 = vector.extract_strided_slice %272 {offsets = [0, 256], sizes = [8, 128], strides = [1, 1]} : vector<8x512xbf16> to vector<8x128xbf16>
    %288 = math.tanh %287 : vector<8x128xbf16>
    %289 = arith.extf %288 : vector<8x128xbf16> to vector<8x128xf32>
    %290 = vector.extract_strided_slice %272 {offsets = [0, 384], sizes = [8, 128], strides = [1, 1]} : vector<8x512xbf16> to vector<8x128xbf16>
    %291 = arith.negf %290 : vector<8x128xbf16>
    %292 = math.exp %291 : vector<8x128xbf16>
    %cst_119 = arith.constant 1.000000e+00 : bf16
    %293 = vector.broadcast %cst_119 : bf16 to vector<8x128xbf16>
    %294 = arith.addf %293, %292 : vector<8x128xbf16>
    %295 = arith.divf %293, %294 : vector<8x128xbf16>
    %296 = arith.extf %295 : vector<8x128xbf16> to vector<8x128xf32>
    %c0_120 = arith.constant 0 : index
    %c0_121 = arith.constant 0 : index
    %297 = vector.load %arg11[%c0_120, %c0_121] : memref<8x128xf32, #tpu.memory_space<vmem>>, vector<8x128xf32>
    %298 = arith.mulf %286, %297 : vector<8x128xf32>
    %299 = arith.mulf %279, %289 : vector<8x128xf32>
    %300 = arith.addf %298, %299 : vector<8x128xf32>
    %301 = arith.truncf %300 : vector<8x128xf32> to vector<8x128xbf16>
    %302 = math.tanh %301 : vector<8x128xbf16>
    %303 = arith.extf %302 : vector<8x128xbf16> to vector<8x128xf32>
    %304 = arith.mulf %296, %303 : vector<8x128xf32>
    %c0_122 = arith.constant 0 : index
    %c0_123 = arith.constant 0 : index
    %305 = vector.load %arg11[%c0_122, %c0_123] : memref<8x128xf32, #tpu.memory_space<vmem>>, vector<8x128xf32>
    tpu.vector_store %arg11[%c0_122, %c0_123], %300 {strides = array<i32>} : memref<8x128xf32, #tpu.memory_space<vmem>>, vector<8x128xf32>,
    %c0_124 = arith.constant 0 : index
    %c0_125 = arith.constant 0 : index
    %306 = vector.load %arg10[%c0_124, %c0_125] : memref<8x128xf32, #tpu.memory_space<vmem>>, vector<8x128xf32>
    tpu.vector_store %arg10[%c0_124, %c0_125], %304 {strides = array<i32>} : memref<8x128xf32, #tpu.memory_space<vmem>>, vector<8x128xf32>,
    %c0_126 = arith.constant 0 : index
    %c0_127 = arith.constant 0 : index
    %307 = vector.load %arg12[%c0_126, %c0_127] : memref<8x128xf32, #tpu.memory_space<vmem>>, vector<8x128xf32>
    %308 = arith.addf %307, %304 : vector<8x128xf32>
    %c0_128 = arith.constant 0 : index
    %c0_129 = arith.constant 0 : index
    %309 = vector.load %arg12[%c0_128, %c0_129] : memref<8x128xf32, #tpu.memory_space<vmem>>, vector<8x128xf32>
    tpu.vector_store %arg12[%c0_128, %c0_129], %308 {strides = array<i32>} : memref<8x128xf32, #tpu.memory_space<vmem>>, vector<8x128xf32>,
    %c6_i32 = arith.constant 6 : i32
    %c8_i32_130 = arith.constant 8 : i32
    %310 = arith.muli %c6_i32, %c8_i32_130 : i32
    %311 = tpu.assume_multiple %310, 8 : i32
    %312 = arith.index_cast %311 : i32 to index
    %c0_131 = arith.constant 0 : index
    %313 = vector.load %arg9[%312, %c0_131] : memref<64x512xbf16, #tpu.memory_space<vmem>>, vector<8x512xbf16>
    %314 = arith.extf %313 : vector<8x512xbf16> to vector<8x512xf32>
    %315 = vector.broadcast %9 : vector<1x512xf32> to vector<8x512xf32>
    %316 = arith.addf %314, %315 : vector<8x512xf32>
    %c0_132 = arith.constant 0 : index
    %c0_133 = arith.constant 0 : index
    %317 = vector.load %arg10[%c0_132, %c0_133] : memref<8x128xf32, #tpu.memory_space<vmem>>, vector<8x128xf32>
    %318 = arith.truncf %317 : vector<8x128xf32> to vector<8x128xbf16>
    %c0_134 = arith.constant 0 : index
    %c0_135 = arith.constant 0 : index
    %319 = vector.load %arg4[%c0_134, %c0_135] : memref<128x512xbf16, #tpu.memory_space<vmem>>, vector<128x512xbf16>
    %cst_136 = arith.constant dense<0.000000e+00> : vector<8x512xf32>
    %320 = tpu.matmul %318, %319, %cst_136 {dimension_numbers = #tpu.dot_dimension_numbers<[1], [0], [0], [1], [0, 0, 1, 1], [], []>} : vector<8x128xbf16>, vector<128x512xbf16>, vector<8x512xf32> -> vector<8x512xf32>
    %321 = arith.addf %316, %320 : vector<8x512xf32>
    %322 = arith.truncf %321 : vector<8x512xf32> to vector<8x512xbf16>
    %323 = vector.extract_strided_slice %322 {offsets = [0, 0], sizes = [8, 128], strides = [1, 1]} : vector<8x512xbf16> to vector<8x128xbf16>
    %324 = arith.negf %323 : vector<8x128xbf16>
    %325 = math.exp %324 : vector<8x128xbf16>
    %cst_137 = arith.constant 1.000000e+00 : bf16
    %326 = vector.broadcast %cst_137 : bf16 to vector<8x128xbf16>
    %327 = arith.addf %326, %325 : vector<8x128xbf16>
    %328 = arith.divf %326, %327 : vector<8x128xbf16>
    %329 = arith.extf %328 : vector<8x128xbf16> to vector<8x128xf32>
    %330 = vector.extract_strided_slice %322 {offsets = [0, 128], sizes = [8, 128], strides = [1, 1]} : vector<8x512xbf16> to vector<8x128xbf16>
    %331 = arith.negf %330 : vector<8x128xbf16>
    %332 = math.exp %331 : vector<8x128xbf16>
    %cst_138 = arith.constant 1.000000e+00 : bf16
    %333 = vector.broadcast %cst_138 : bf16 to vector<8x128xbf16>
    %334 = arith.addf %333, %332 : vector<8x128xbf16>
    %335 = arith.divf %333, %334 : vector<8x128xbf16>
    %336 = arith.extf %335 : vector<8x128xbf16> to vector<8x128xf32>
    %337 = vector.extract_strided_slice %322 {offsets = [0, 256], sizes = [8, 128], strides = [1, 1]} : vector<8x512xbf16> to vector<8x128xbf16>
    %338 = math.tanh %337 : vector<8x128xbf16>
    %339 = arith.extf %338 : vector<8x128xbf16> to vector<8x128xf32>
    %340 = vector.extract_strided_slice %322 {offsets = [0, 384], sizes = [8, 128], strides = [1, 1]} : vector<8x512xbf16> to vector<8x128xbf16>
    %341 = arith.negf %340 : vector<8x128xbf16>
    %342 = math.exp %341 : vector<8x128xbf16>
    %cst_139 = arith.constant 1.000000e+00 : bf16
    %343 = vector.broadcast %cst_139 : bf16 to vector<8x128xbf16>
    %344 = arith.addf %343, %342 : vector<8x128xbf16>
    %345 = arith.divf %343, %344 : vector<8x128xbf16>
    %346 = arith.extf %345 : vector<8x128xbf16> to vector<8x128xf32>
    %c0_140 = arith.constant 0 : index
    %c0_141 = arith.constant 0 : index
    %347 = vector.load %arg11[%c0_140, %c0_141] : memref<8x128xf32, #tpu.memory_space<vmem>>, vector<8x128xf32>
    %348 = arith.mulf %336, %347 : vector<8x128xf32>
    %349 = arith.mulf %329, %339 : vector<8x128xf32>
    %350 = arith.addf %348, %349 : vector<8x128xf32>
    %351 = arith.truncf %350 : vector<8x128xf32> to vector<8x128xbf16>
    %352 = math.tanh %351 : vector<8x128xbf16>
    %353 = arith.extf %352 : vector<8x128xbf16> to vector<8x128xf32>
    %354 = arith.mulf %346, %353 : vector<8x128xf32>
    %c0_142 = arith.constant 0 : index
    %c0_143 = arith.constant 0 : index
    %355 = vector.load %arg11[%c0_142, %c0_143] : memref<8x128xf32, #tpu.memory_space<vmem>>, vector<8x128xf32>
    tpu.vector_store %arg11[%c0_142, %c0_143], %350 {strides = array<i32>} : memref<8x128xf32, #tpu.memory_space<vmem>>, vector<8x128xf32>,
    %c0_144 = arith.constant 0 : index
    %c0_145 = arith.constant 0 : index
    %356 = vector.load %arg10[%c0_144, %c0_145] : memref<8x128xf32, #tpu.memory_space<vmem>>, vector<8x128xf32>
    tpu.vector_store %arg10[%c0_144, %c0_145], %354 {strides = array<i32>} : memref<8x128xf32, #tpu.memory_space<vmem>>, vector<8x128xf32>,
    %c0_146 = arith.constant 0 : index
    %c0_147 = arith.constant 0 : index
    %357 = vector.load %arg12[%c0_146, %c0_147] : memref<8x128xf32, #tpu.memory_space<vmem>>, vector<8x128xf32>
    %358 = arith.addf %357, %354 : vector<8x128xf32>
    %c0_148 = arith.constant 0 : index
    %c0_149 = arith.constant 0 : index
    %359 = vector.load %arg12[%c0_148, %c0_149] : memref<8x128xf32, #tpu.memory_space<vmem>>, vector<8x128xf32>
    tpu.vector_store %arg12[%c0_148, %c0_149], %358 {strides = array<i32>} : memref<8x128xf32, #tpu.memory_space<vmem>>, vector<8x128xf32>,
    %c7_i32 = arith.constant 7 : i32
    %c8_i32_150 = arith.constant 8 : i32
    %360 = arith.muli %c7_i32, %c8_i32_150 : i32
    %361 = tpu.assume_multiple %360, 8 : i32
    %362 = arith.index_cast %361 : i32 to index
    %c0_151 = arith.constant 0 : index
    %363 = vector.load %arg9[%362, %c0_151] : memref<64x512xbf16, #tpu.memory_space<vmem>>, vector<8x512xbf16>
    %364 = arith.extf %363 : vector<8x512xbf16> to vector<8x512xf32>
    %365 = vector.broadcast %9 : vector<1x512xf32> to vector<8x512xf32>
    %366 = arith.addf %364, %365 : vector<8x512xf32>
    %c0_152 = arith.constant 0 : index
    %c0_153 = arith.constant 0 : index
    %367 = vector.load %arg10[%c0_152, %c0_153] : memref<8x128xf32, #tpu.memory_space<vmem>>, vector<8x128xf32>
    %368 = arith.truncf %367 : vector<8x128xf32> to vector<8x128xbf16>
    %c0_154 = arith.constant 0 : index
    %c0_155 = arith.constant 0 : index
    %369 = vector.load %arg4[%c0_154, %c0_155] : memref<128x512xbf16, #tpu.memory_space<vmem>>, vector<128x512xbf16>
    %cst_156 = arith.constant dense<0.000000e+00> : vector<8x512xf32>
    %370 = tpu.matmul %368, %369, %cst_156 {dimension_numbers = #tpu.dot_dimension_numbers<[1], [0], [0], [1], [0, 0, 1, 1], [], []>} : vector<8x128xbf16>, vector<128x512xbf16>, vector<8x512xf32> -> vector<8x512xf32>
    %371 = arith.addf %366, %370 : vector<8x512xf32>
    %372 = arith.truncf %371 : vector<8x512xf32> to vector<8x512xbf16>
    %373 = vector.extract_strided_slice %372 {offsets = [0, 0], sizes = [8, 128], strides = [1, 1]} : vector<8x512xbf16> to vector<8x128xbf16>
    %374 = arith.negf %373 : vector<8x128xbf16>
    %375 = math.exp %374 : vector<8x128xbf16>
    %cst_157 = arith.constant 1.000000e+00 : bf16
    %376 = vector.broadcast %cst_157 : bf16 to vector<8x128xbf16>
    %377 = arith.addf %376, %375 : vector<8x128xbf16>
    %378 = arith.divf %376, %377 : vector<8x128xbf16>
    %379 = arith.extf %378 : vector<8x128xbf16> to vector<8x128xf32>
    %380 = vector.extract_strided_slice %372 {offsets = [0, 128], sizes = [8, 128], strides = [1, 1]} : vector<8x512xbf16> to vector<8x128xbf16>
    %381 = arith.negf %380 : vector<8x128xbf16>
    %382 = math.exp %381 : vector<8x128xbf16>
    %cst_158 = arith.constant 1.000000e+00 : bf16
    %383 = vector.broadcast %cst_158 : bf16 to vector<8x128xbf16>
    %384 = arith.addf %383, %382 : vector<8x128xbf16>
    %385 = arith.divf %383, %384 : vector<8x128xbf16>
    %386 = arith.extf %385 : vector<8x128xbf16> to vector<8x128xf32>
    %387 = vector.extract_strided_slice %372 {offsets = [0, 256], sizes = [8, 128], strides = [1, 1]} : vector<8x512xbf16> to vector<8x128xbf16>
    %388 = math.tanh %387 : vector<8x128xbf16>
    %389 = arith.extf %388 : vector<8x128xbf16> to vector<8x128xf32>
    %390 = vector.extract_strided_slice %372 {offsets = [0, 384], sizes = [8, 128], strides = [1, 1]} : vector<8x512xbf16> to vector<8x128xbf16>
    %391 = arith.negf %390 : vector<8x128xbf16>
    %392 = math.exp %391 : vector<8x128xbf16>
    %cst_159 = arith.constant 1.000000e+00 : bf16
    %393 = vector.broadcast %cst_159 : bf16 to vector<8x128xbf16>
    %394 = arith.addf %393, %392 : vector<8x128xbf16>
    %395 = arith.divf %393, %394 : vector<8x128xbf16>
    %396 = arith.extf %395 : vector<8x128xbf16> to vector<8x128xf32>
    %c0_160 = arith.constant 0 : index
    %c0_161 = arith.constant 0 : index
    %397 = vector.load %arg11[%c0_160, %c0_161] : memref<8x128xf32, #tpu.memory_space<vmem>>, vector<8x128xf32>
    %398 = arith.mulf %386, %397 : vector<8x128xf32>
    %399 = arith.mulf %379, %389 : vector<8x128xf32>
    %400 = arith.addf %398, %399 : vector<8x128xf32>
    %401 = arith.truncf %400 : vector<8x128xf32> to vector<8x128xbf16>
    %402 = math.tanh %401 : vector<8x128xbf16>
    %403 = arith.extf %402 : vector<8x128xbf16> to vector<8x128xf32>
    %404 = arith.mulf %396, %403 : vector<8x128xf32>
    %c0_162 = arith.constant 0 : index
    %c0_163 = arith.constant 0 : index
    %405 = vector.load %arg11[%c0_162, %c0_163] : memref<8x128xf32, #tpu.memory_space<vmem>>, vector<8x128xf32>
    tpu.vector_store %arg11[%c0_162, %c0_163], %400 {strides = array<i32>} : memref<8x128xf32, #tpu.memory_space<vmem>>, vector<8x128xf32>,
    %c0_164 = arith.constant 0 : index
    %c0_165 = arith.constant 0 : index
    %406 = vector.load %arg10[%c0_164, %c0_165] : memref<8x128xf32, #tpu.memory_space<vmem>>, vector<8x128xf32>
    tpu.vector_store %arg10[%c0_164, %c0_165], %404 {strides = array<i32>} : memref<8x128xf32, #tpu.memory_space<vmem>>, vector<8x128xf32>,
    %c0_166 = arith.constant 0 : index
    %c0_167 = arith.constant 0 : index
    %407 = vector.load %arg12[%c0_166, %c0_167] : memref<8x128xf32, #tpu.memory_space<vmem>>, vector<8x128xf32>
    %408 = arith.addf %407, %404 : vector<8x128xf32>
    %c0_168 = arith.constant 0 : index
    %c0_169 = arith.constant 0 : index
    %409 = vector.load %arg12[%c0_168, %c0_169] : memref<8x128xf32, #tpu.memory_space<vmem>>, vector<8x128xf32>
    tpu.vector_store %arg12[%c0_168, %c0_169], %408 {strides = array<i32>} : memref<8x128xf32, #tpu.memory_space<vmem>>, vector<8x128xf32>,
    %c8_i32_170 = arith.constant 8 : i32
    %c0_i32_171 = arith.constant 0 : i32
    %410 = arith.cmpi eq, %arg1, %c0_i32_171 : i32
    %411 = arith.extui %410 : i1 to i32
    %c0_i32_172 = arith.constant 0 : i32
    %412 = arith.cmpi ne, %411, %c0_i32_172 : i32
    scf.if %412 {
      %c0_173 = arith.constant 0 : index
      %c0_174 = arith.constant 0 : index
      %413 = vector.load %arg12[%c0_173, %c0_174] : memref<8x128xf32, #tpu.memory_space<vmem>>, vector<8x128xf32>
      %cst_175 = arith.constant 1.250000e-01 : f32
      %414 = vector.broadcast %cst_175 : f32 to vector<8x128xf32>
      %415 = arith.mulf %413, %414 : vector<8x128xf32>
      %416 = arith.truncf %415 : vector<8x128xf32> to vector<8x128xbf16>
      %c0_176 = arith.constant 0 : index
      %c0_177 = arith.constant 0 : index
      %417 = vector.load %arg6[%c0_176, %c0_177] : memref<128x128xbf16, #tpu.memory_space<vmem>>, vector<128x128xbf16>
      %cst_178 = arith.constant dense<0.000000e+00> : vector<8x128xf32>
      %418 = tpu.matmul %416, %417, %cst_178 {dimension_numbers = #tpu.dot_dimension_numbers<[1], [0], [0], [1], [0, 0, 1, 1], [], []>} : vector<8x128xbf16>, vector<128x128xbf16>, vector<8x128xf32> -> vector<8x128xf32>
      %c0_179 = arith.constant 0 : index
      %c0_180 = arith.constant 0 : index
      %419 = vector.load %arg7[%c0_179, %c0_180] : memref<1x128xf32, #tpu.memory_space<vmem>>, vector<1x128xf32>
      %420 = vector.broadcast %419 : vector<1x128xf32> to vector<8x128xf32>
      %421 = arith.addf %418, %420 : vector<8x128xf32>
      %cst_181 = arith.constant dense<0xFF800000> : vector<8xf32>
      %422 = vector.multi_reduction <maximumf>, %421, %cst_181 [1] : vector<8x128xf32> to vector<8xf32>
      %423 = vector.shape_cast %422 : vector<8xf32> to vector<8x1xf32>
      %424 = vector.broadcast %423 : vector<8x1xf32> to vector<8x128xf32>
      %425 = arith.subf %421, %424 : vector<8x128xf32>
      %426 = math.exp %425 : vector<8x128xf32>
      %cst_182 = arith.constant dense<0.000000e+00> : vector<8xf32>
      %427 = vector.multi_reduction <add>, %426, %cst_182 [1] : vector<8x128xf32> to vector<8xf32>
      %428 = vector.shape_cast %427 : vector<8xf32> to vector<8x1xf32>
      %429 = math.log %428 : vector<8x1xf32>
      %430 = vector.broadcast %429 : vector<8x1xf32> to vector<8x128xf32>
      %431 = arith.subf %425, %430 : vector<8x128xf32>
      %c0_183 = arith.constant 0 : index
      %c0_184 = arith.constant 0 : index
      %432 = vector.load %arg8[%c0_183, %c0_184] : memref<8x128xf32, #tpu.memory_space<vmem>>, vector<8x128xf32>
      tpu.vector_store %arg8[%c0_183, %c0_184], %431 {strides = array<i32>} : memref<8x128xf32, #tpu.memory_space<vmem>>, vector<8x128xf32>,
    } else {
    }
    return
  }
  func.func @transform_0(%arg0: i32, %arg1: i32) -> (i32, i32, i32, i32) {
    %c0_i32 = arith.constant 0 : i32
    %c0_i32_0 = arith.constant 0 : i32
    %c0_i32_1 = arith.constant 0 : i32
    return %arg0, %arg1, %c0_i32, %c0_i32_0 : i32, i32, i32, i32
  }
  func.func @transform_1(%arg0: i32, %arg1: i32) -> (i32, i32) {
    %c0_i32 = arith.constant 0 : i32
    %c0_i32_0 = arith.constant 0 : i32
    %c0_i32_1 = arith.constant 0 : i32
    return %c0_i32, %c0_i32_0 : i32, i32
  }
  func.func @transform_2(%arg0: i32, %arg1: i32) -> (i32, i32) {
    %c0_i32 = arith.constant 0 : i32
    %c0_i32_0 = arith.constant 0 : i32
    %c0_i32_1 = arith.constant 0 : i32
    return %c0_i32, %c0_i32_0 : i32, i32
  }
  func.func @transform_3(%arg0: i32, %arg1: i32) -> (i32, i32) {
    %c0_i32 = arith.constant 0 : i32
    %c0_i32_0 = arith.constant 0 : i32
    %c0_i32_1 = arith.constant 0 : i32
    return %c0_i32, %c0_i32_0 : i32, i32
  }
  func.func @transform_4(%arg0: i32, %arg1: i32) -> (i32, i32) {
    %c0_i32 = arith.constant 0 : i32
    %c0_i32_0 = arith.constant 0 : i32
    %c0_i32_1 = arith.constant 0 : i32
    return %c0_i32, %c0_i32_0 : i32, i32
  }
  func.func @transform_5(%arg0: i32, %arg1: i32) -> (i32, i32) {
    %c0_i32 = arith.constant 0 : i32
    %c0_i32_0 = arith.constant 0 : i32
    %c0_i32_1 = arith.constant 0 : i32
    return %c0_i32, %c0_i32_0 : i32, i32
  }
  func.func @transform_6(%arg0: i32, %arg1: i32) -> (i32, i32) {
    %c0_i32 = arith.constant 0 : i32
    %c0_i32_0 = arith.constant 0 : i32
    return %arg0, %c0_i32 : i32, i32
  }
}

</mosaic_0001>

<llo_original>
// kernel: tpu_custom_call.1
$region0: #{tpu_custom_call.1}
  #allocation0 [shape = 'u32[]', space=smem, size = 0x4, offset = 0x4, fixed_abs, tag = 'smem constant byte address 0x4 - core index']
  #allocation1 [shape = 'u32[144,128]{1,0:T(1,128)}', space=vmem, size = 0x12000, scoped, tag = 'internal scratch']
  #allocation2 [shape = 'bf16[64,512]{1,0:T(8,128)(2,1)}', space=vmem, size = 0x10000, scoped, tag = 'scratch operand']
  #allocation3 [shape = 'f32[8,128]{1,0:T(8,128)}', space=vmem, size = 0x1000, scoped, tag = 'scratch operand']
  #allocation4 [shape = 'f32[8,128]{1,0:T(8,128)}', space=vmem, size = 0x1000, scoped, tag = 'scratch operand']
  #allocation5 [shape = 'f32[8,128]{1,0:T(8,128)}', space=vmem, size = 0x1000, scoped, tag = 'scratch operand']
  %s0 = inlined_call_operand.hbm [shape: bf16[1,1,64,128], index: 0, kind: input, shape index: {}]
  %s1 = inlined_call_operand.hbm [shape: bf16[128,512], index: 1, kind: input, shape index: {}]
  %s2 = inlined_call_operand.hbm [shape: bf16[128,512], index: 2, kind: input, shape index: {}]
  %s3 = inlined_call_operand.vmem [shape: f32[1,512], index: 3, kind: input, shape index: {}]
  %s4 = inlined_call_operand.hbm [shape: bf16[128,128], index: 4, kind: input, shape index: {}]
  %s5 = inlined_call_operand.vmem [shape: f32[1,128], index: 5, kind: input, shape index: {}]
  %s6 = inlined_call_operand.hbm [shape: f32[8,128], index: 6, kind: output, shape index: {}]
  %s7 = sld [smem:[#allocation0]]
  $region58: #{tpu_custom_call.1} parent=0
    _
  %s9 = ssub.s32 1, %s7
  %s10 = scalar_select 0, %s9, %s7
  $region1: #{tpu_custom_call.1} parent=0
    #allocation6 [shape = 'u8[16384]{0}', space=vmem, size = 0x4000, scoped, tag = 'input window, operand 0, single buffered']
    #allocation7 [shape = 's32[1]{0}', space=sflag, size = 0x4, scoped, tag = 'scoped memory for tpu_custom_call.1']
    #allocation8 [shape = 's32[1]{0}', space=sflag, size = 0x4, scoped, tag = 'scoped memory for tpu_custom_call.1']
    #allocation9 [shape = 'u8[131072]{0}', space=vmem, size = 0x20000, scoped, tag = 'input window, operand 1, single buffered']
    #allocation10 [shape = 's32[1]{0}', space=sflag, size = 0x4, scoped, tag = 'scoped memory for tpu_custom_call.1']
    #allocation11 [shape = 'u8[131072]{0}', space=vmem, size = 0x20000, scoped, tag = 'input window, operand 2, single buffered']
    #allocation12 [shape = 'u8[32768]{0}', space=vmem, size = 0x8000, scoped, tag = 'input window, operand 4, single buffered']
    #allocation13 [shape = 's32[1]{0}', space=sflag, size = 0x4, scoped, tag = 'scoped memory for tpu_custom_call.1']
    #allocation14 [shape = 'u8[4096]{0}', space=vmem, size = 0x1000, scoped, tag = 'output window, operand 0, single buffered']
    %11 = vsyncpa [#allocation7], 0
    %12 = vsyncpa [#allocation10], 0
    %13 = vsyncpa [#allocation13], 0
    %14 = vsyncpa [#allocation8], 0
    // Predicated region
    $region2: #{tpu_custom_call.1} parent=1 // pred_check
      _
    $region3: #{tpu_custom_call.1} parent=1 // pred_check_branch
      %16 = sbr.rel (0) target = $region5
    $region4: #{tpu_custom_call.1} parent=1 // pred_region
      %s18 = ssub.s32 512, 512
      %19 = vsyncadd [#allocation7], %s18
      %s20 = sshll.u32 [#allocation6], 4
      %s21 = int_to_ptr.vmem [resolvable:$true] %s20
      %26 = dma.hbm_to_vmem [thread:$0]  %s0, 512, %s21, [#allocation7], 64, 64, 4
    $region5: #{tpu_custom_call.1} parent=1 // pred_fallthru
      _
    // Predicated region
    $region6: #{tpu_custom_call.1} parent=1 // pred_check
      _
    $region7: #{tpu_custom_call.1} parent=1 // pred_check_branch
      %28 = sbr.rel (0) target = $region9
    $region8: #{tpu_custom_call.1} parent=1 // pred_region
      %s30 = ssub.s32 4096, 4096
      %31 = vsyncadd [#allocation10], %s30
      %s32 = sshll.u32 [#allocation9], 4
      %s33 = int_to_ptr.vmem [resolvable:$true] %s32
      %38 = dma.hbm_to_vmem [thread:$0]  %s1, 4096, %s33, [#allocation10], 256, 256, 16
    $region9: #{tpu_custom_call.1} parent=1 // pred_fallthru
      _
    // Predicated region
    $region10: #{tpu_custom_call.1} parent=1 // pred_check
      _
    $region11: #{tpu_custom_call.1} parent=1 // pred_check_branch
      %40 = sbr.rel (0) target = $region13
    $region12: #{tpu_custom_call.1} parent=1 // pred_region
      %s42 = ssub.s32 4096, 4096
      %43 = vsyncadd [#allocation10], %s42
      %s44 = sshll.u32 [#allocation11], 4
      %s45 = int_to_ptr.vmem [resolvable:$true] %s44
      %50 = dma.hbm_to_vmem [thread:$0]  %s2, 4096, %s45, [#allocation10], 256, 256, 16
    $region13: #{tpu_custom_call.1} parent=1 // pred_fallthru
      _
    // Predicated region
    $region14: #{tpu_custom_call.1} parent=1 // pred_check
      _
    $region15: #{tpu_custom_call.1} parent=1 // pred_check_branch
      %52 = sbr.rel (0) target = $region17
    $region16: #{tpu_custom_call.1} parent=1 // pred_region
      _
    $region17: #{tpu_custom_call.1} parent=1 // pred_fallthru
      _
    // Predicated region
    $region18: #{tpu_custom_call.1} parent=1 // pred_check
      _
    $region19: #{tpu_custom_call.1} parent=1 // pred_check_branch
      %54 = sbr.rel (0) target = $region21
    $region20: #{tpu_custom_call.1} parent=1 // pred_region
      %s56 = ssub.s32 1024, 1024
      %57 = vsyncadd [#allocation13], %s56
      %s58 = sshll.u32 [#allocation12], 4
      %s59 = int_to_ptr.vmem [resolvable:$true] %s58
      %64 = dma.hbm_to_vmem [thread:$0]  %s4, 1024, %s59, [#allocation13], 64, 64, 4
    $region21: #{tpu_custom_call.1} parent=1 // pred_fallthru
      _
    // Predicated region
    $region22: #{tpu_custom_call.1} parent=1 // pred_check
      _
    $region23: #{tpu_custom_call.1} parent=1 // pred_check_branch
      %66 = sbr.rel (0) target = $region25
    $region24: #{tpu_custom_call.1} parent=1 // pred_region
      _
    $region25: #{tpu_custom_call.1} parent=1 // pred_fallthru
      _
    // Predicated region
    $region26: #{tpu_custom_call.1} parent=1 // pred_check
      _
    $region27: #{tpu_custom_call.1} parent=1 // pred_check_branch
      %68 = sbr.rel (0) target = $region29
    $region28: #{tpu_custom_call.1} parent=1 // pred_region
      %69 = dma.done [#allocation7], 512
    $region29: #{tpu_custom_call.1} parent=1 // pred_fallthru
      _
    // Predicated region
    $region30: #{tpu_custom_call.1} parent=1 // pred_check
      _
    $region31: #{tpu_custom_call.1} parent=1 // pred_check_branch
      %71 = sbr.rel (0) target = $region33
    $region32: #{tpu_custom_call.1} parent=1 // pred_region
      %72 = dma.done [#allocation10], 4096
    $region33: #{tpu_custom_call.1} parent=1 // pred_fallthru
      _
    // Predicated region
    $region34: #{tpu_custom_call.1} parent=1 // pred_check
      _
    $region35: #{tpu_custom_call.1} parent=1 // pred_check_branch
      %74 = sbr.rel (0) target = $region37
    $region36: #{tpu_custom_call.1} parent=1 // pred_region
      %75 = dma.done [#allocation10], 4096
    $region37: #{tpu_custom_call.1} parent=1 // pred_fallthru
      _
    // Predicated region
    $region38: #{tpu_custom_call.1} parent=1 // pred_check
      _
    $region39: #{tpu_custom_call.1} parent=1 // pred_check_branch
      %77 = sbr.rel (0) target = $region41
    $region40: #{tpu_custom_call.1} parent=1 // pred_region
      %78 = dma.done [#allocation13], 1024
    $region41: #{tpu_custom_call.1} parent=1 // pred_fallthru
      _
    %p81 = scmp.eq.s32.totalorder 0, 0
    // Predicated region
    $region42: #{tpu_custom_call.1} parent=1 // pred_check
      %p82 = pneg %p81
    $region43: #{tpu_custom_call.1} parent=1 // pred_check_branch
      %84 = sbr.rel (%p82) target = $region45
    $region44: #{tpu_custom_call.1} parent=1 // pred_region
      %85 = vst [vmem:[#allocation3] sm:$0xff] 0.0
      %86 = vst [vmem:[#allocation4] sm:$0xff] 0.0
      %87 = vst [vmem:[#allocation5] sm:$0xff] 0.0
    $region45: #{tpu_custom_call.1} parent=1 // pred_fallthru
      _
    %v88 = vld [vmem:[#allocation6] sm:$0xf]
    %v89 = vld [vmem:[#allocation6 + $0x4] sm:$0xf]
    %v90 = vld [vmem:[#allocation6 + $0x8] sm:$0xf]
    %v91 = vld [vmem:[#allocation6 + $0xc] sm:$0xf]
    %v92 = vld [vmem:[#allocation6 + $0x10] sm:$0xf]
    %v93 = vld [vmem:[#allocation6 + $0x14] sm:$0xf]
    %v94 = vld [vmem:[#allocation6 + $0x18] sm:$0xf]
    %v95 = vld [vmem:[#allocation6 + $0x1c] sm:$0xf]
    %v96 = vld [vmem:[#allocation9] sm:$0xff]
    %v97 = vld [vmem:[#allocation9 + $0x8] sm:$0xff]
    %v98 = vld [vmem:[#allocation9 + $0x10] sm:$0xff]
    %v99 = vld [vmem:[#allocation9 + $0x18] sm:$0xff]
    %v100 = vld [vmem:[#allocation9 + $0x20] sm:$0xff]
    %v101 = vld [vmem:[#allocation9 + $0x28] sm:$0xff]
    %v102 = vld [vmem:[#allocation9 + $0x30] sm:$0xff]
    %v103 = vld [vmem:[#allocation9 + $0x38] sm:$0xff]
    %v104 = vld [vmem:[#allocation9 + $0x40] sm:$0xff]
    %v105 = vld [vmem:[#allocation9 + $0x48] sm:$0xff]
    %v106 = vld [vmem:[#allocation9 + $0x50] sm:$0xff]
    %v107 = vld [vmem:[#allocation9 + $0x58] sm:$0xff]
    %v108 = vld [vmem:[#allocation9 + $0x60] sm:$0xff]
    %v109 = vld [vmem:[#allocation9 + $0x68] sm:$0xff]
    %v110 = vld [vmem:[#allocation9 + $0x70] sm:$0xff]
    %v111 = vld [vmem:[#allocation9 + $0x78] sm:$0xff]
    %v112 = vld [vmem:[#allocation9 + $0x80] sm:$0xff]
    %v113 = vld [vmem:[#allocation9 + $0x88] sm:$0xff]
    %v114 = vld [vmem:[#allocation9 + $0x90] sm:$0xff]
    %v115 = vld [vmem:[#allocation9 + $0x98] sm:$0xff]
    %v116 = vld [vmem:[#allocation9 + $0xa0] sm:$0xff]
    %v117 = vld [vmem:[#allocation9 + $0xa8] sm:$0xff]
    %v118 = vld [vmem:[#allocation9 + $0xb0] sm:$0xff]
    %v119 = vld [vmem:[#allocation9 + $0xb8] sm:$0xff]
    %v120 = vld [vmem:[#allocation9 + $0xc0] sm:$0xff]
    %v121 = vld [vmem:[#allocation9 + $0xc8] sm:$0xff]
    %v122 = vld [vmem:[#allocation9 + $0xd0] sm:$0xff]
    %v123 = vld [vmem:[#allocation9 + $0xd8] sm:$0xff]
    %v124 = vld [vmem:[#allocation9 + $0xe0] sm:$0xff]
    %v125 = vld [vmem:[#allocation9 + $0xe8] sm:$0xff]
    %v126 = vld [vmem:[#allocation9 + $0xf0] sm:$0xff]
    %v127 = vld [vmem:[#allocation9 + $0xf8] sm:$0xff]
    %v136 = vunpack.c.l.b16 %v88
    %v137 = vunpack.c.l.b16 %v89
    %v138 = vunpack.c.l.b16 %v90
    %v139 = vunpack.c.l.b16 %v91
    %v140 = vunpack.c.l.b16 %v92
    %v141 = vunpack.c.l.b16 %v93
    %v142 = vunpack.c.l.b16 %v94
    %v143 = vunpack.c.l.b16 %v95
    %v144 = vpack.c.b16 %v137, %v136
    %v145 = vpack.c.b16 %v139, %v138
    %v146 = vpack.c.b16 %v141, %v140
    %v147 = vpack.c.b16 %v143, %v142
    %v184 = vunpack.c.l.b16 %v96
    %v185 = vunpack.c.h.b16 %v96
    %v186 = vunpack.c.l.b16 %v97
    %v187 = vunpack.c.h.b16 %v97
    %v188 = vunpack.c.l.b16 %v98
    %v189 = vunpack.c.h.b16 %v98
    %v190 = vunpack.c.l.b16 %v99
    %v191 = vunpack.c.h.b16 %v99
    %v192 = vunpack.c.l.b16 %v100
    %v193 = vunpack.c.h.b16 %v100
    %v194 = vunpack.c.l.b16 %v101
    %v195 = vunpack.c.h.b16 %v101
    %v196 = vunpack.c.l.b16 %v102
    %v197 = vunpack.c.h.b16 %v102
    %v198 = vunpack.c.l.b16 %v103
    %v199 = vunpack.c.h.b16 %v103
    %v200 = vunpack.c.l.b16 %v104
    %v201 = vunpack.c.h.b16 %v104
    %v202 = vunpack.c.l.b16 %v105
    %v203 = vunpack.c.h.b16 %v105
    %v204 = vunpack.c.l.b16 %v106
    %v205 = vunpack.c.h.b16 %v106
    %v206 = vunpack.c.l.b16 %v107
    %v207 = vunpack.c.h.b16 %v107
    %v208 = vunpack.c.l.b16 %v108
    %v209 = vunpack.c.h.b16 %v108
    %v210 = vunpack.c.l.b16 %v109
    %v211 = vunpack.c.h.b16 %v109
    %v212 = vunpack.c.l.b16 %v110
    %v213 = vunpack.c.h.b16 %v110
    %v214 = vunpack.c.l.b16 %v111
    %v215 = vunpack.c.h.b16 %v111
    %v216 = vunpack.c.l.b16 %v112
    %v217 = vunpack.c.h.b16 %v112
    %v218 = vunpack.c.l.b16 %v113
    %v219 = vunpack.c.h.b16 %v113
    %v220 = vunpack.c.l.b16 %v114
    %v221 = vunpack.c.h.b16 %v114
    %v222 = vunpack.c.l.b16 %v115
    %v223 = vunpack.c.h.b16 %v115
    %v224 = vunpack.c.l.b16 %v116
    %v225 = vunpack.c.h.b16 %v116
    %v226 = vunpack.c.l.b16 %v117
    %v227 = vunpack.c.h.b16 %v117
    %v228 = vunpack.c.l.b16 %v118
    %v229 = vunpack.c.h.b16 %v118
    %v230 = vunpack.c.l.b16 %v119
    %v231 = vunpack.c.h.b16 %v119
    %v232 = vunpack.c.l.b16 %v120
    %v233 = vunpack.c.h.b16 %v120
    %v234 = vunpack.c.l.b16 %v121
    %v235 = vunpack.c.h.b16 %v121
    %v236 = vunpack.c.l.b16 %v122
    %v237 = vunpack.c.h.b16 %v122
    %v238 = vunpack.c.l.b16 %v123
    %v239 = vunpack.c.h.b16 %v123
    %v240 = vunpack.c.l.b16 %v124
    %v241 = vunpack.c.h.b16 %v124
    %v242 = vunpack.c.l.b16 %v125
    %v243 = vunpack.c.h.b16 %v125
    %v244 = vunpack.c.l.b16 %v126
    %v245 = vunpack.c.h.b16 %v126
    %v246 = vunpack.c.l.b16 %v127
    %v247 = vunpack.c.h.b16 %v127
    %v248 = vpack.c.b16 %v188, %v184
    %v249 = vpack.c.b16 %v189, %v185
    %v250 = vpack.c.b16 %v190, %v186
    %v251 = vpack.c.b16 %v191, %v187
    %v252 = vpack.c.b16 %v196, %v192
    %v253 = vpack.c.b16 %v197, %v193
    %v254 = vpack.c.b16 %v198, %v194
    %v255 = vpack.c.b16 %v199, %v195
    %v256 = vpack.c.b16 %v204, %v200
    %v257 = vpack.c.b16 %v205, %v201
    %v258 = vpack.c.b16 %v206, %v202
    %v259 = vpack.c.b16 %v207, %v203
    %v260 = vpack.c.b16 %v212, %v208
    %v261 = vpack.c.b16 %v213, %v209
    %v262 = vpack.c.b16 %v214, %v210
    %v263 = vpack.c.b16 %v215, %v211
    %v264 = vpack.c.b16 %v220, %v216
    %v265 = vpack.c.b16 %v221, %v217
    %v266 = vpack.c.b16 %v222, %v218
    %v267 = vpack.c.b16 %v223, %v219
    %v268 = vpack.c.b16 %v228, %v224
    %v269 = vpack.c.b16 %v229, %v225
    %v270 = vpack.c.b16 %v230, %v226
    %v271 = vpack.c.b16 %v231, %v227
    %v272 = vpack.c.b16 %v236, %v232
    %v273 = vpack.c.b16 %v237, %v233
    %v274 = vpack.c.b16 %v238, %v234
    %v275 = vpack.c.b16 %v239, %v235
    %v276 = vpack.c.b16 %v244, %v240
    %v277 = vpack.c.b16 %v245, %v241
    %v278 = vpack.c.b16 %v246, %v242
    %v279 = vpack.c.b16 %v247, %v243
    %312 = vmatprep.subr.bf16.mxu0 %v277
    %313 = vmatpush1.bf16.msra.mxu0 %v276
    %314 = vmatprep.subr.bf16.mxu0 %v273
    %315 = vmatpush1.bf16.msra.mxu0 %v272
    %316 = vmatprep.subr.bf16.mxu0 %v269
    %317 = vmatpush1.bf16.msra.mxu0 %v268
    %318 = vmatprep.subr.bf16.mxu0 %v265
    %319 = vmatpush1.bf16.msra.mxu0 %v264
    %320 = vmatprep.subr.bf16.mxu0 %v261
    %321 = vmatpush1.bf16.msra.mxu0 %v260
    %322 = vmatprep.subr.bf16.mxu0 %v257
    %323 = vmatpush1.bf16.msra.mxu0 %v256
    %324 = vmatprep.subr.bf16.mxu0 %v253
    %325 = vmatpush1.bf16.msra.mxu0 %v252
    %326 = vmatprep.subr.bf16.mxu0 %v249
    %327 = vmatpush1.bf16.msra.mxu0 %v248
    %328 = vmatprep.subr.bf16.mxu0 0
    %329 = vmatpush2.bf16.msra.mxu0 0
    %330 = vmatprep.subr.bf16.mxu0 0
    %331 = vmatpush2.bf16.msra.mxu0 0
    %332 = vmatprep.subr.bf16.mxu0 0
    %333 = vmatpush2.bf16.msra.mxu0 0
    %334 = vmatprep.subr.bf16.mxu0 0
    %335 = vmatpush2.bf16.msra.mxu0 0
    %336 = vmatprep.subr.bf16.mxu0 0
    %337 = vmatpush2.bf16.msra.mxu0 0
    %338 = vmatprep.subr.bf16.mxu0 0
    %339 = vmatpush2.bf16.msra.mxu0 0
    %340 = vmatprep.subr.bf16.mxu0 0
    %341 = vmatpush2.bf16.msra.mxu0 0
    %342 = vmatprep.subr.bf16.mxu0 0
    %343 = vmatpush2.bf16.msra.mxu0 0
    %344 = vmatprep.mubr.bf16.mxu0 0
    %345 = vmatmul.mubr.bf16.gmra.mxu0 %v144
    %v346 = vpop.f32.mrf.mxu0
    %v347 = vadd.f32 0.0, %v346
    %v348 = vpop.f32.mrf.mxu0
    %v349 = vadd.f32 0.0, %v348
    %v350 = vpop.f32.mrf.mxu0
    %v351 = vadd.f32 0.0, %v350
    %v352 = vpop.f32.mrf.mxu0
    %v353 = vadd.f32 0.0, %v352
    %354 = vmatprep.mubr.bf16.mxu0 0
    %355 = vmatmul.mubr.bf16.gmra.mxu0 %v145
    %v356 = vpop.f32.mrf.mxu0
    %v357 = vadd.f32 0.0, %v356
    %v358 = vpop.f32.mrf.mxu0
    %v359 = vadd.f32 0.0, %v358
    %v360 = vpop.f32.mrf.mxu0
    %v361 = vadd.f32 0.0, %v360
    %v362 = vpop.f32.mrf.mxu0
    %v363 = vadd.f32 0.0, %v362
    %364 = vmatprep.mubr.bf16.mxu0 0
    %365 = vmatmul.mubr.bf16.gmra.mxu0 %v146
    %v366 = vpop.f32.mrf.mxu0
    %v367 = vadd.f32 0.0, %v366
    %v368 = vpop.f32.mrf.mxu0
    %v369 = vadd.f32 0.0, %v368
    %v370 = vpop.f32.mrf.mxu0
    %v371 = vadd.f32 0.0, %v370
    %v372 = vpop.f32.mrf.mxu0
    %v373 = vadd.f32 0.0, %v372
    %374 = vmatprep.mubr.bf16.mxu0 0
    %375 = vmatmul.mubr.bf16.gmra.mxu0 %v147
    %v376 = vpop.f32.mrf.mxu0
    %v377 = vadd.f32 0.0, %v376
    %v378 = vpop.f32.mrf.mxu0
    %v379 = vadd.f32 0.0, %v378
    %v380 = vpop.f32.mrf.mxu0
    %v381 = vadd.f32 0.0, %v380
    %v382 = vpop.f32.mrf.mxu0
    %v383 = vadd.f32 0.0, %v382
    %384 = vdwg.mxu0
    %385 = vmatprep.subr.bf16.mxu0 %v279
    %386 = vmatpush1.bf16.msra.mxu0 %v278
    %387 = vmatprep.subr.bf16.mxu0 %v275
    %388 = vmatpush1.bf16.msra.mxu0 %v274
    %389 = vmatprep.subr.bf16.mxu0 %v271
    %390 = vmatpush1.bf16.msra.mxu0 %v270
    %391 = vmatprep.subr.bf16.mxu0 %v267
    %392 = vmatpush1.bf16.msra.mxu0 %v266
    %393 = vmatprep.subr.bf16.mxu0 %v263
    %394 = vmatpush1.bf16.msra.mxu0 %v262
    %395 = vmatprep.subr.bf16.mxu0 %v259
    %396 = vmatpush1.bf16.msra.mxu0 %v258
    %397 = vmatprep.subr.bf16.mxu0 %v255
    %398 = vmatpush1.bf16.msra.mxu0 %v254
    %399 = vmatprep.subr.bf16.mxu0 %v251
    %400 = vmatpush1.bf16.msra.mxu0 %v250
    %401 = vmatprep.subr.bf16.mxu0 0
    %402 = vmatpush2.bf16.msra.mxu0 0
    %403 = vmatprep.subr.bf16.mxu0 0
    %404 = vmatpush2.bf16.msra.mxu0 0
    %405 = vmatprep.subr.bf16.mxu0 0
    %406 = vmatpush2.bf16.msra.mxu0 0
    %407 = vmatprep.subr.bf16.mxu0 0
    %408 = vmatpush2.bf16.msra.mxu0 0
    %409 = vmatprep.subr.bf16.mxu0 0
    %410 = vmatpush2.bf16.msra.mxu0 0
    %411 = vmatprep.subr.bf16.mxu0 0
    %412 = vmatpush2.bf16.msra.mxu0 0
    %413 = vmatprep.subr.bf16.mxu0 0
    %414 = vmatpush2.bf16.msra.mxu0 0
    %415 = vmatprep.subr.bf16.mxu0 0
    %416 = vmatpush2.bf16.msra.mxu0 0
    %417 = vmatprep.mubr.bf16.mxu0 0
    %418 = vmatmul.mubr.bf16.gmra.mxu0 %v144
    %v419 = vpop.f32.mrf.mxu0
    %v420 = vadd.f32 0.0, %v419
    %v421 = vpop.f32.mrf.mxu0
    %v422 = vadd.f32 0.0, %v421
    %v423 = vpop.f32.mrf.mxu0
    %v424 = vadd.f32 0.0, %v423
    %v425 = vpop.f32.mrf.mxu0
    %v426 = vadd.f32 0.0, %v425
    %427 = vmatprep.mubr.bf16.mxu0 0
    %428 = vmatmul.mubr.bf16.gmra.mxu0 %v145
    %v429 = vpop.f32.mrf.mxu0
    %v430 = vadd.f32 0.0, %v429
    %v431 = vpop.f32.mrf.mxu0
    %v432 = vadd.f32 0.0, %v431
    %v433 = vpop.f32.mrf.mxu0
    %v434 = vadd.f32 0.0, %v433
    %v435 = vpop.f32.mrf.mxu0
    %v436 = vadd.f32 0.0, %v435
    %437 = vmatprep.mubr.bf16.mxu0 0
    %438 = vmatmul.mubr.bf16.gmra.mxu0 %v146
    %v439 = vpop.f32.mrf.mxu0
    %v440 = vadd.f32 0.0, %v439
    %v441 = vpop.f32.mrf.mxu0
    %v442 = vadd.f32 0.0, %v441
    %v443 = vpop.f32.mrf.mxu0
    %v444 = vadd.f32 0.0, %v443
    %v445 = vpop.f32.mrf.mxu0
    %v446 = vadd.f32 0.0, %v445
    %447 = vmatprep.mubr.bf16.mxu0 0
    %448 = vmatmul.mubr.bf16.gmra.mxu0 %v147
    %v449 = vpop.f32.mrf.mxu0
    %v450 = vadd.f32 0.0, %v449
    %v451 = vpop.f32.mrf.mxu0
    %v452 = vadd.f32 0.0, %v451
    %v453 = vpop.f32.mrf.mxu0
    %v454 = vadd.f32 0.0, %v453
    %v455 = vpop.f32.mrf.mxu0
    %v456 = vadd.f32 0.0, %v455
    %457 = vdwg.mxu0
    %v458 = vpack.c.bf16 %v351, %v347
    %v459 = vpack.c.bf16 %v353, %v349
    %v460 = vpack.c.bf16 %v424, %v420
    %v461 = vpack.c.bf16 %v426, %v422
    %v462 = vpack.c.bf16 %v361, %v357
    %v463 = vpack.c.bf16 %v363, %v359
    %v464 = vpack.c.bf16 %v434, %v430
    %v465 = vpack.c.bf16 %v436, %v432
    %v466 = vpack.c.bf16 %v371, %v367
    %v467 = vpack.c.bf16 %v373, %v369
    %v468 = vpack.c.bf16 %v444, %v440
    %v469 = vpack.c.bf16 %v446, %v442
    %v470 = vpack.c.bf16 %v381, %v377
    %v471 = vpack.c.bf16 %v383, %v379
    %v472 = vpack.c.bf16 %v454, %v450
    %v473 = vpack.c.bf16 %v456, %v452
    %v490 = vunpack.c.l.b16 %v458
    %v491 = vunpack.c.l.b16 %v459
    %v492 = vunpack.c.l.b16 %v460
    %v493 = vunpack.c.l.b16 %v461
    %v494 = vunpack.c.h.b16 %v458
    %v495 = vunpack.c.h.b16 %v459
    %v496 = vunpack.c.h.b16 %v460
    %v497 = vunpack.c.h.b16 %v461
    %v498 = vunpack.c.l.b16 %v462
    %v499 = vunpack.c.l.b16 %v463
    %v500 = vunpack.c.l.b16 %v464
    %v501 = vunpack.c.l.b16 %v465
    %v502 = vunpack.c.h.b16 %v462
    %v503 = vunpack.c.h.b16 %v463
    %v504 = vunpack.c.h.b16 %v464
    %v505 = vunpack.c.h.b16 %v465
    %v506 = vunpack.c.l.b16 %v466
    %v507 = vunpack.c.l.b16 %v467
    %v508 = vunpack.c.l.b16 %v468
    %v509 = vunpack.c.l.b16 %v469
    %v510 = vunpack.c.h.b16 %v466
    %v511 = vunpack.c.h.b16 %v467
    %v512 = vunpack.c.h.b16 %v468
    %v513 = vunpack.c.h.b16 %v469
    %v514 = vunpack.c.l.b16 %v470
    %v515 = vunpack.c.l.b16 %v471
    %v516 = vunpack.c.l.b16 %v472
    %v517 = vunpack.c.l.b16 %v473
    %v518 = vunpack.c.h.b16 %v470
    %v519 = vunpack.c.h.b16 %v471
    %v520 = vunpack.c.h.b16 %v472
    %v521 = vunpack.c.h.b16 %v473
    %v522 = vpack.c.b16 %v491, %v490
    %v523 = vpack.c.b16 %v493, %v492
    %v524 = vpack.c.b16 %v495, %v494
    %v525 = vpack.c.b16 %v497, %v496
    %v526 = vpack.c.b16 %v499, %v498
    %v527 = vpack.c.b16 %v501, %v500
    %v528 = vpack.c.b16 %v503, %v502
    %v529 = vpack.c.b16 %v505, %v504
    %v530 = vpack.c.b16 %v507, %v506
    %v531 = vpack.c.b16 %v509, %v508
    %v532 = vpack.c.b16 %v511, %v510
    %v533 = vpack.c.b16 %v513, %v512
    %v534 = vpack.c.b16 %v515, %v514
    %v535 = vpack.c.b16 %v517, %v516
    %v536 = vpack.c.b16 %v519, %v518
    %v537 = vpack.c.b16 %v521, %v520
    %554 = vst [vmem:[#allocation2] sm:$0xff] %v522
    %555 = vst [vmem:[#allocation2 + $0x8] sm:$0xff] %v523
    %556 = vst [vmem:[#allocation2 + $0x10] sm:$0xff] %v524
    %557 = vst [vmem:[#allocation2 + $0x18] sm:$0xff] %v525
    %558 = vst [vmem:[#allocation2 + $0x20] sm:$0xff] %v526
    %559 = vst [vmem:[#allocation2 + $0x28] sm:$0xff] %v527
    %560 = vst [vmem:[#allocation2 + $0x30] sm:$0xff] %v528
    %561 = vst [vmem:[#allocation2 + $0x38] sm:$0xff] %v529
    %562 = vst [vmem:[#allocation2 + $0x40] sm:$0xff] %v530
    %563 = vst [vmem:[#allocation2 + $0x48] sm:$0xff] %v531
    %564 = vst [vmem:[#allocation2 + $0x50] sm:$0xff] %v532
    %565 = vst [vmem:[#allocation2 + $0x58] sm:$0xff] %v533
    %566 = vst [vmem:[#allocation2 + $0x60] sm:$0xff] %v534
    %567 = vst [vmem:[#allocation2 + $0x68] sm:$0xff] %v535
    %568 = vst [vmem:[#allocation2 + $0x70] sm:$0xff] %v536
    %569 = vst [vmem:[#allocation2 + $0x78] sm:$0xff] %v537
    %v570 = vld [vmem:[%s3] sm:$0xf]
    %s571 = smul.u32 0, 4
    %s572 = smul.addr %s571, 4
    %s573 = scalar_lea.vmem [#allocation2], %s572
    %v574 = vld [vmem:[%s573] sm:$0xff]
    %v575 = vld [vmem:[%s573 + $0x8] sm:$0xff]
    %v576 = vunpack.c.l.bf16 %v574
    %v577 = vunpack.c.h.bf16 %v574
    %v578 = vunpack.c.l.bf16 %v575
    %v579 = vunpack.c.h.bf16 %v575
    %v581 = vlaneseq
    %v582 = vshrl.u32 %v581, 7
    %v583 = vsub.s32 0, %v582
    %v584 = vrot.slane %v570, %v583
    %v585 = vlaneseq
    %v586 = vshrl.u32 %v585, 7
    %v587 = vsub.s32 1, %v586
    %v588 = vrot.slane %v570, %v587
    %v589 = vlaneseq
    %v590 = vshrl.u32 %v589, 7
    %v591 = vsub.s32 2, %v590
    %v592 = vrot.slane %v570, %v591
    %v593 = vlaneseq
    %v594 = vshrl.u32 %v593, 7
    %v595 = vsub.s32 3, %v594
    %v596 = vrot.slane %v570, %v595
    %v601 = vadd.f32 %v576, %v584
    %v602 = vadd.f32 %v577, %v588
    %v603 = vadd.f32 %v578, %v592
    %v604 = vadd.f32 %v579, %v596
    %v605 = vld [vmem:[#allocation3] sm:$0xff]
    %v606 = vpack.c.bf16 %v605, %v605
    %v607 = vld [vmem:[#allocation11] sm:$0xff]
    %v608 = vld [vmem:[#allocation11 + $0x8] sm:$0xff]
    %v609 = vld [vmem:[#allocation11 + $0x10] sm:$0xff]
    %v610 = vld [vmem:[#allocation11 + $0x18] sm:$0xff]
    %v611 = vld [vmem:[#allocation11 + $0x20] sm:$0xff]
    %v612 = vld [vmem:[#allocation11 + $0x28] sm:$0xff]
    %v613 = vld [vmem:[#allocation11 + $0x30] sm:$0xff]
    %v614 = vld [vmem:[#allocation11 + $0x38] sm:$0xff]
    %v615 = vld [vmem:[#allocation11 + $0x40] sm:$0xff]
    %v616 = vld [vmem:[#allocation11 + $0x48] sm:$0xff]
    %v617 = vld [vmem:[#allocation11 + $0x50] sm:$0xff]
    %v618 = vld [vmem:[#allocation11 + $0x58] sm:$0xff]
    %v619 = vld [vmem:[#allocation11 + $0x60] sm:$0xff]
    %v620 = vld [vmem:[#allocation11 + $0x68] sm:$0xff]
    %v621 = vld [vmem:[#allocation11 + $0x70] sm:$0xff]
    %v622 = vld [vmem:[#allocation11 + $0x78] sm:$0xff]
    %v623 = vld [vmem:[#allocation11 + $0x80] sm:$0xff]
    %v624 = vld [vmem:[#allocation11 + $0x88] sm:$0xff]
    %v625 = vld [vmem:[#allocation11 + $0x90] sm:$0xff]
    %v626 = vld [vmem:[#allocation11 + $0x98] sm:$0xff]
    %v627 = vld [vmem:[#allocation11 + $0xa0] sm:$0xff]
    %v628 = vld [vmem:[#allocation11 + $0xa8] sm:$0xff]
    %v629 = vld [vmem:[#allocation11 + $0xb0] sm:$0xff]
    %v630 = vld [vmem:[#allocation11 + $0xb8] sm:$0xff]
    %v631 = vld [vmem:[#allocation11 + $0xc0] sm:$0xff]
    %v632 = vld [vmem:[#allocation11 + $0xc8] sm:$0xff]
    %v633 = vld [vmem:[#allocation11 + $0xd0] sm:$0xff]
    %v634 = vld [vmem:[#allocation11 + $0xd8] sm:$0xff]
    %v635 = vld [vmem:[#allocation11 + $0xe0] sm:$0xff]
    %v636 = vld [vmem:[#allocation11 + $0xe8] sm:$0xff]
    %v637 = vld [vmem:[#allocation11 + $0xf0] sm:$0xff]
    %v638 = vld [vmem:[#allocation11 + $0xf8] sm:$0xff]
    %v671 = vunpack.c.l.b16 %v607
    %v672 = vunpack.c.h.b16 %v607
    %v673 = vunpack.c.l.b16 %v608
    %v674 = vunpack.c.h.b16 %v608
    %v675 = vunpack.c.l.b16 %v609
    %v676 = vunpack.c.h.b16 %v609
    %v677 = vunpack.c.l.b16 %v610
    %v678 = vunpack.c.h.b16 %v610
    %v679 = vunpack.c.l.b16 %v611
    %v680 = vunpack.c.h.b16 %v611
    %v681 = vunpack.c.l.b16 %v612
    %v682 = vunpack.c.h.b16 %v612
    %v683 = vunpack.c.l.b16 %v613
    %v684 = vunpack.c.h.b16 %v613
    %v685 = vunpack.c.l.b16 %v614
    %v686 = vunpack.c.h.b16 %v614
    %v687 = vunpack.c.l.b16 %v615
    %v688 = vunpack.c.h.b16 %v615
    %v689 = vunpack.c.l.b16 %v616
    %v690 = vunpack.c.h.b16 %v616
    %v691 = vunpack.c.l.b16 %v617
    %v692 = vunpack.c.h.b16 %v617
    %v693 = vunpack.c.l.b16 %v618
    %v694 = vunpack.c.h.b16 %v618
    %v695 = vunpack.c.l.b16 %v619
    %v696 = vunpack.c.h.b16 %v619
    %v697 = vunpack.c.l.b16 %v620
    %v698 = vunpack.c.h.b16 %v620
    %v699 = vunpack.c.l.b16 %v621
    %v700 = vunpack.c.h.b16 %v621
    %v701 = vunpack.c.l.b16 %v622
    %v702 = vunpack.c.h.b16 %v622
    %v703 = vunpack.c.l.b16 %v623
    %v704 = vunpack.c.h.b16 %v623
    %v705 = vunpack.c.l.b16 %v624
    %v706 = vunpack.c.h.b16 %v624
    %v707 = vunpack.c.l.b16 %v625
    %v708 = vunpack.c.h.b16 %v625
    %v709 = vunpack.c.l.b16 %v626
    %v710 = vunpack.c.h.b16 %v626
    %v711 = vunpack.c.l.b16 %v627
    %v712 = vunpack.c.h.b16 %v627
    %v713 = vunpack.c.l.b16 %v628
    %v714 = vunpack.c.h.b16 %v628
    %v715 = vunpack.c.l.b16 %v629
    %v716 = vunpack.c.h.b16 %v629
    %v717 = vunpack.c.l.b16 %v630
    %v718 = vunpack.c.h.b16 %v630
    %v719 = vunpack.c.l.b16 %v631
    %v720 = vunpack.c.h.b16 %v631
    %v721 = vunpack.c.l.b16 %v632
    %v722 = vunpack.c.h.b16 %v632
    %v723 = vunpack.c.l.b16 %v633
    %v724 = vunpack.c.h.b16 %v633
    %v725 = vunpack.c.l.b16 %v634
    %v726 = vunpack.c.h.b16 %v634
    %v727 = vunpack.c.l.b16 %v635
    %v728 = vunpack.c.h.b16 %v635
    %v729 = vunpack.c.l.b16 %v636
    %v730 = vunpack.c.h.b16 %v636
    %v731 = vunpack.c.l.b16 %v637
    %v732 = vunpack.c.h.b16 %v637
    %v733 = vunpack.c.l.b16 %v638
    %v734 = vunpack.c.h.b16 %v638
    %v735 = vpack.c.b16 %v675, %v671
    %v736 = vpack.c.b16 %v676, %v672
    %v737 = vpack.c.b16 %v677, %v673
    %v738 = vpack.c.b16 %v678, %v674
    %v739 = vpack.c.b16 %v683, %v679
    %v740 = vpack.c.b16 %v684, %v680
    %v741 = vpack.c.b16 %v685, %v681
    %v742 = vpack.c.b16 %v686, %v682
    %v743 = vpack.c.b16 %v691, %v687
    %v744 = vpack.c.b16 %v692, %v688
    %v745 = vpack.c.b16 %v693, %v689
    %v746 = vpack.c.b16 %v694, %v690
    %v747 = vpack.c.b16 %v699, %v695
    %v748 = vpack.c.b16 %v700, %v696
    %v749 = vpack.c.b16 %v701, %v697
    %v750 = vpack.c.b16 %v702, %v698
    %v751 = vpack.c.b16 %v707, %v703
    %v752 = vpack.c.b16 %v708, %v704
    %v753 = vpack.c.b16 %v709, %v705
    %v754 = vpack.c.b16 %v710, %v706
    %v755 = vpack.c.b16 %v715, %v711
    %v756 = vpack.c.b16 %v716, %v712
    %v757 = vpack.c.b16 %v717, %v713
    %v758 = vpack.c.b16 %v718, %v714
    %v759 = vpack.c.b16 %v723, %v719
    %v760 = vpack.c.b16 %v724, %v720
    %v761 = vpack.c.b16 %v725, %v721
    %v762 = vpack.c.b16 %v726, %v722
    %v763 = vpack.c.b16 %v731, %v727
    %v764 = vpack.c.b16 %v732, %v728
    %v765 = vpack.c.b16 %v733, %v729
    %v766 = vpack.c.b16 %v734, %v730
    %799 = vmatprep.subr.bf16.mxu0 %v764
    %800 = vmatpush1.bf16.msra.mxu0 %v763
    %801 = vmatprep.subr.bf16.mxu0 %v760
    %802 = vmatpush1.bf16.msra.mxu0 %v759
    %803 = vmatprep.subr.bf16.mxu0 %v756
    %804 = vmatpush1.bf16.msra.mxu0 %v755
    %805 = vmatprep.subr.bf16.mxu0 %v752
    %806 = vmatpush1.bf16.msra.mxu0 %v751
    %807 = vmatprep.subr.bf16.mxu0 %v748
    %808 = vmatpush1.bf16.msra.mxu0 %v747
    %809 = vmatprep.subr.bf16.mxu0 %v744
    %810 = vmatpush1.bf16.msra.mxu0 %v743
    %811 = vmatprep.subr.bf16.mxu0 %v740
    %812 = vmatpush1.bf16.msra.mxu0 %v739
    %813 = vmatprep.subr.bf16.mxu0 %v736
    %814 = vmatpush1.bf16.msra.mxu0 %v735
    %815 = vmatprep.subr.bf16.mxu0 0
    %816 = vmatpush2.bf16.msra.mxu0 0
    %817 = vmatprep.subr.bf16.mxu0 0
    %818 = vmatpush2.bf16.msra.mxu0 0
    %819 = vmatprep.subr.bf16.mxu0 0
    %820 = vmatpush2.bf16.msra.mxu0 0
    %821 = vmatprep.subr.bf16.mxu0 0
    %822 = vmatpush2.bf16.msra.mxu0 0
    %823 = vmatprep.subr.bf16.mxu0 0
    %824 = vmatpush2.bf16.msra.mxu0 0
    %825 = vmatprep.subr.bf16.mxu0 0
    %826 = vmatpush2.bf16.msra.mxu0 0
    %827 = vmatprep.subr.bf16.mxu0 0
    %828 = vmatpush2.bf16.msra.mxu0 0
    %829 = vmatprep.subr.bf16.mxu0 0
    %830 = vmatpush2.bf16.msra.mxu0 0
    %831 = vmatprep.mubr.bf16.mxu0 0
    %832 = vmatmul.mubr.bf16.gmra.mxu0 %v606
    %v833 = vpop.f32.mrf.mxu0
    %v834 = vadd.f32 0.0, %v833
    %v835 = vpop.f32.mrf.mxu0
    %v836 = vadd.f32 0.0, %v835
    %v837 = vpop.f32.mrf.mxu0
    %v838 = vpop.f32.mrf.mxu0
    %839 = vdwg.mxu0
    %840 = vmatprep.subr.bf16.mxu0 %v766
    %841 = vmatpush1.bf16.msra.mxu0 %v765
    %842 = vmatprep.subr.bf16.mxu0 %v762
    %843 = vmatpush1.bf16.msra.mxu0 %v761
    %844 = vmatprep.subr.bf16.mxu0 %v758
    %845 = vmatpush1.bf16.msra.mxu0 %v757
    %846 = vmatprep.subr.bf16.mxu0 %v754
    %847 = vmatpush1.bf16.msra.mxu0 %v753
    %848 = vmatprep.subr.bf16.mxu0 %v750
    %849 = vmatpush1.bf16.msra.mxu0 %v749
    %850 = vmatprep.subr.bf16.mxu0 %v746
    %851 = vmatpush1.bf16.msra.mxu0 %v745
    %852 = vmatprep.subr.bf16.mxu0 %v742
    %853 = vmatpush1.bf16.msra.mxu0 %v741
    %854 = vmatprep.subr.bf16.mxu0 %v738
    %855 = vmatpush1.bf16.msra.mxu0 %v737
    %856 = vmatprep.subr.bf16.mxu0 0
    %857 = vmatpush2.bf16.msra.mxu0 0
    %858 = vmatprep.subr.bf16.mxu0 0
    %859 = vmatpush2.bf16.msra.mxu0 0
    %860 = vmatprep.subr.bf16.mxu0 0
    %861 = vmatpush2.bf16.msra.mxu0 0
    %862 = vmatprep.subr.bf16.mxu0 0
    %863 = vmatpush2.bf16.msra.mxu0 0
    %864 = vmatprep.subr.bf16.mxu0 0
    %865 = vmatpush2.bf16.msra.mxu0 0
    %866 = vmatprep.subr.bf16.mxu0 0
    %867 = vmatpush2.bf16.msra.mxu0 0
    %868 = vmatprep.subr.bf16.mxu0 0
    %869 = vmatpush2.bf16.msra.mxu0 0
    %870 = vmatprep.subr.bf16.mxu0 0
    %871 = vmatpush2.bf16.msra.mxu0 0
    %872 = vmatprep.mubr.bf16.mxu0 0
    %873 = vmatmul.mubr.bf16.gmra.mxu0 %v606
    %v874 = vpop.f32.mrf.mxu0
    %v875 = vadd.f32 0.0, %v874
    %v876 = vpop.f32.mrf.mxu0
    %v877 = vadd.f32 0.0, %v876
    %v878 = vpop.f32.mrf.mxu0
    %v879 = vpop.f32.mrf.mxu0
    %880 = vdwg.mxu0
    %v881 = vadd.f32 %v601, %v834
    %v882 = vadd.f32 %v602, %v836
    %v883 = vadd.f32 %v603, %v875
    %v884 = vadd.f32 %v604, %v877
    %v885 = vpack.c.bf16 %v881, %v881
    %v886 = vpack.c.bf16 %v882, %v882
    %v887 = vpack.c.bf16 %v883, %v883
    %v888 = vpack.c.bf16 %v884, %v884
    %v889 = vxor.u32 %v885, 2147516416
    %v891 = vmul.bf16 %v889, 1069105081
    %v892 = vpow.bf16.pop %v891
    %v893 = vadd.bf16 %v892, 1065369472
    %v894 = vrcp.bf16.pop %v893
    %v895 = vmul.bf16 1065369472, %v894
    %v896 = vunpack.c.l.bf16 %v895
    %v897 = vxor.u32 %v886, 2147516416
    %v899 = vmul.bf16 %v897, 1069105081
    %v900 = vpow.bf16.pop %v899
    %v901 = vadd.bf16 %v900, 1065369472
    %v902 = vrcp.bf16.pop %v901
    %v903 = vmul.bf16 1065369472, %v902
    %v904 = vunpack.c.l.bf16 %v903
    %v905 = vtanh.bf16.pop %v887
    %v906 = vunpack.c.l.bf16 %v905
    %v907 = vxor.u32 %v888, 2147516416
    %v909 = vmul.bf16 %v907, 1069105081
    %v910 = vpow.bf16.pop %v909
    %v911 = vadd.bf16 %v910, 1065369472
    %v912 = vrcp.bf16.pop %v911
    %v913 = vmul.bf16 1065369472, %v912
    %v914 = vunpack.c.l.bf16 %v913
    %v915 = vld [vmem:[#allocation4] sm:$0xff]
    %v916 = vmul.f32 %v904, %v915
    %v917 = vmul.f32 %v896, %v906
    %v918 = vadd.f32 %v916, %v917
    %v919 = vpack.c.bf16 %v918, %v918
    %v920 = vtanh.bf16.pop %v919
    %v921 = vunpack.c.l.bf16 %v920
    %v922 = vmul.f32 %v914, %v921
    %923 = vst [vmem:[#allocation4] sm:$0xff] %v918
    %924 = vst [vmem:[#allocation3] sm:$0xff] %v922
    %v925 = vld [vmem:[#allocation5] sm:$0xff]
    %v926 = vadd.f32 %v925, %v922
    %927 = vst [vmem:[#allocation5] sm:$0xff] %v926
    %s928 = smul.u32 1, 4
    %s929 = smul.addr %s928, 4
    %s930 = scalar_lea.vmem [#allocation2], %s929
    %v931 = vld [vmem:[%s930] sm:$0xff]
    %v932 = vld [vmem:[%s930 + $0x8] sm:$0xff]
    %v933 = vunpack.c.l.bf16 %v931
    %v934 = vunpack.c.h.bf16 %v931
    %v935 = vunpack.c.l.bf16 %v932
    %v936 = vunpack.c.h.bf16 %v932
    %v937 = vadd.f32 %v933, %v584
    %v938 = vadd.f32 %v934, %v588
    %v939 = vadd.f32 %v935, %v592
    %v940 = vadd.f32 %v936, %v596
    %v941 = vld [vmem:[#allocation3] sm:$0xff]
    %v942 = vpack.c.bf16 %v941, %v941
    %v943 = vld [vmem:[#allocation11] sm:$0xff]
    %v944 = vld [vmem:[#allocation11 + $0x8] sm:$0xff]
    %v945 = vld [vmem:[#allocation11 + $0x10] sm:$0xff]
    %v946 = vld [vmem:[#allocation11 + $0x18] sm:$0xff]
    %v947 = vld [vmem:[#allocation11 + $0x20] sm:$0xff]
    %v948 = vld [vmem:[#allocation11 + $0x28] sm:$0xff]
    %v949 = vld [vmem:[#allocation11 + $0x30] sm:$0xff]
    %v950 = vld [vmem:[#allocation11 + $0x38] sm:$0xff]
    %v951 = vld [vmem:[#allocation11 + $0x40] sm:$0xff]
    %v952 = vld [vmem:[#allocation11 + $0x48] sm:$0xff]
    %v953 = vld [vmem:[#allocation11 + $0x50] sm:$0xff]
    %v954 = vld [vmem:[#allocation11 + $0x58] sm:$0xff]
    %v955 = vld [vmem:[#allocation11 + $0x60] sm:$0xff]
    %v956 = vld [vmem:[#allocation11 + $0x68] sm:$0xff]
    %v957 = vld [vmem:[#allocation11 + $0x70] sm:$0xff]
    %v958 = vld [vmem:[#allocation11 + $0x78] sm:$0xff]
    %v959 = vld [vmem:[#allocation11 + $0x80] sm:$0xff]
    %v960 = vld [vmem:[#allocation11 + $0x88] sm:$0xff]
    %v961 = vld [vmem:[#allocation11 + $0x90] sm:$0xff]
    %v962 = vld [vmem:[#allocation11 + $0x98] sm:$0xff]
    %v963 = vld [vmem:[#allocation11 + $0xa0] sm:$0xff]
    %v964 = vld [vmem:[#allocation11 + $0xa8] sm:$0xff]
    %v965 = vld [vmem:[#allocation11 + $0xb0] sm:$0xff]
    %v966 = vld [vmem:[#allocation11 + $0xb8] sm:$0xff]
    %v967 = vld [vmem:[#allocation11 + $0xc0] sm:$0xff]
    %v968 = vld [vmem:[#allocation11 + $0xc8] sm:$0xff]
    %v969 = vld [vmem:[#allocation11 + $0xd0] sm:$0xff]
    %v970 = vld [vmem:[#allocation11 + $0xd8] sm:$0xff]
    %v971 = vld [vmem:[#allocation11 + $0xe0] sm:$0xff]
    %v972 = vld [vmem:[#allocation11 + $0xe8] sm:$0xff]
    %v973 = vld [vmem:[#allocation11 + $0xf0] sm:$0xff]
    %v974 = vld [vmem:[#allocation11 + $0xf8] sm:$0xff]
    %v1007 = vunpack.c.l.b16 %v943
    %v1008 = vunpack.c.h.b16 %v943
    %v1009 = vunpack.c.l.b16 %v944
    %v1010 = vunpack.c.h.b16 %v944
    %v1011 = vunpack.c.l.b16 %v945
    %v1012 = vunpack.c.h.b16 %v945
    %v1013 = vunpack.c.l.b16 %v946
    %v1014 = vunpack.c.h.b16 %v946
    %v1015 = vunpack.c.l.b16 %v947
    %v1016 = vunpack.c.h.b16 %v947
    %v1017 = vunpack.c.l.b16 %v948
    %v1018 = vunpack.c.h.b16 %v948
    %v1019 = vunpack.c.l.b16 %v949
    %v1020 = vunpack.c.h.b16 %v949
    %v1021 = vunpack.c.l.b16 %v950
    %v1022 = vunpack.c.h.b16 %v950
    %v1023 = vunpack.c.l.b16 %v951
    %v1024 = vunpack.c.h.b16 %v951
    %v1025 = vunpack.c.l.b16 %v952
    %v1026 = vunpack.c.h.b16 %v952
    %v1027 = vunpack.c.l.b16 %v953
    %v1028 = vunpack.c.h.b16 %v953
    %v1029 = vunpack.c.l.b16 %v954
    %v1030 = vunpack.c.h.b16 %v954
    %v1031 = vunpack.c.l.b16 %v955
    %v1032 = vunpack.c.h.b16 %v955
    %v1033 = vunpack.c.l.b16 %v956
    %v1034 = vunpack.c.h.b16 %v956
    %v1035 = vunpack.c.l.b16 %v957
    %v1036 = vunpack.c.h.b16 %v957
    %v1037 = vunpack.c.l.b16 %v958
    %v1038 = vunpack.c.h.b16 %v958
    %v1039 = vunpack.c.l.b16 %v959
    %v1040 = vunpack.c.h.b16 %v959
    %v1041 = vunpack.c.l.b16 %v960
    %v1042 = vunpack.c.h.b16 %v960
    %v1043 = vunpack.c.l.b16 %v961
    %v1044 = vunpack.c.h.b16 %v961
    %v1045 = vunpack.c.l.b16 %v962
    %v1046 = vunpack.c.h.b16 %v962
    %v1047 = vunpack.c.l.b16 %v963
    %v1048 = vunpack.c.h.b16 %v963
    %v1049 = vunpack.c.l.b16 %v964
    %v1050 = vunpack.c.h.b16 %v964
    %v1051 = vunpack.c.l.b16 %v965
    %v1052 = vunpack.c.h.b16 %v965
    %v1053 = vunpack.c.l.b16 %v966
    %v1054 = vunpack.c.h.b16 %v966
    %v1055 = vunpack.c.l.b16 %v967
    %v1056 = vunpack.c.h.b16 %v967
    %v1057 = vunpack.c.l.b16 %v968
    %v1058 = vunpack.c.h.b16 %v968
    %v1059 = vunpack.c.l.b16 %v969
    %v1060 = vunpack.c.h.b16 %v969
    %v1061 = vunpack.c.l.b16 %v970
    %v1062 = vunpack.c.h.b16 %v970
    %v1063 = vunpack.c.l.b16 %v971
    %v1064 = vunpack.c.h.b16 %v971
    %v1065 = vunpack.c.l.b16 %v972
    %v1066 = vunpack.c.h.b16 %v972
    %v1067 = vunpack.c.l.b16 %v973
    %v1068 = vunpack.c.h.b16 %v973
    %v1069 = vunpack.c.l.b16 %v974
    %v1070 = vunpack.c.h.b16 %v974
    %v1071 = vpack.c.b16 %v1011, %v1007
    %v1072 = vpack.c.b16 %v1012, %v1008
    %v1073 = vpack.c.b16 %v1013, %v1009
    %v1074 = vpack.c.b16 %v1014, %v1010
    %v1075 = vpack.c.b16 %v1019, %v1015
    %v1076 = vpack.c.b16 %v1020, %v1016
    %v1077 = vpack.c.b16 %v1021, %v1017
    %v1078 = vpack.c.b16 %v1022, %v1018
    %v1079 = vpack.c.b16 %v1027, %v1023
    %v1080 = vpack.c.b16 %v1028, %v1024
    %v1081 = vpack.c.b16 %v1029, %v1025
    %v1082 = vpack.c.b16 %v1030, %v1026
    %v1083 = vpack.c.b16 %v1035, %v1031
    %v1084 = vpack.c.b16 %v1036, %v1032
    %v1085 = vpack.c.b16 %v1037, %v1033
    %v1086 = vpack.c.b16 %v1038, %v1034
    %v1087 = vpack.c.b16 %v1043, %v1039
    %v1088 = vpack.c.b16 %v1044, %v1040
    %v1089 = vpack.c.b16 %v1045, %v1041
    %v1090 = vpack.c.b16 %v1046, %v1042
    %v1091 = vpack.c.b16 %v1051, %v1047
    %v1092 = vpack.c.b16 %v1052, %v1048
    %v1093 = vpack.c.b16 %v1053, %v1049
    %v1094 = vpack.c.b16 %v1054, %v1050
    %v1095 = vpack.c.b16 %v1059, %v1055
    %v1096 = vpack.c.b16 %v1060, %v1056
    %v1097 = vpack.c.b16 %v1061, %v1057
    %v1098 = vpack.c.b16 %v1062, %v1058
    %v1099 = vpack.c.b16 %v1067, %v1063
    %v1100 = vpack.c.b16 %v1068, %v1064
    %v1101 = vpack.c.b16 %v1069, %v1065
    %v1102 = vpack.c.b16 %v1070, %v1066
    %1135 = vmatprep.subr.bf16.mxu0 %v1100
    %1136 = vmatpush1.bf16.msra.mxu0 %v1099
    %1137 = vmatprep.subr.bf16.mxu0 %v1096
    %1138 = vmatpush1.bf16.msra.mxu0 %v1095
    %1139 = vmatprep.subr.bf16.mxu0 %v1092
    %1140 = vmatpush1.bf16.msra.mxu0 %v1091
    %1141 = vmatprep.subr.bf16.mxu0 %v1088
    %1142 = vmatpush1.bf16.msra.mxu0 %v1087
    %1143 = vmatprep.subr.bf16.mxu0 %v1084
    %1144 = vmatpush1.bf16.msra.mxu0 %v1083
    %1145 = vmatprep.subr.bf16.mxu0 %v1080
    %1146 = vmatpush1.bf16.msra.mxu0 %v1079
    %1147 = vmatprep.subr.bf16.mxu0 %v1076
    %1148 = vmatpush1.bf16.msra.mxu0 %v1075
    %1149 = vmatprep.subr.bf16.mxu0 %v1072
    %1150 = vmatpush1.bf16.msra.mxu0 %v1071
    %1151 = vmatprep.subr.bf16.mxu0 0
    %1152 = vmatpush2.bf16.msra.mxu0 0
    %1153 = vmatprep.subr.bf16.mxu0 0
    %1154 = vmatpush2.bf16.msra.mxu0 0
    %1155 = vmatprep.subr.bf16.mxu0 0
    %1156 = vmatpush2.bf16.msra.mxu0 0
    %1157 = vmatprep.subr.bf16.mxu0 0
    %1158 = vmatpush2.bf16.msra.mxu0 0
    %1159 = vmatprep.subr.bf16.mxu0 0
    %1160 = vmatpush2.bf16.msra.mxu0 0
    %1161 = vmatprep.subr.bf16.mxu0 0
    %1162 = vmatpush2.bf16.msra.mxu0 0
    %1163 = vmatprep.subr.bf16.mxu0 0
    %1164 = vmatpush2.bf16.msra.mxu0 0
    %1165 = vmatprep.subr.bf16.mxu0 0
    %1166 = vmatpush2.bf16.msra.mxu0 0
    %1167 = vmatprep.mubr.bf16.mxu0 0
    %1168 = vmatmul.mubr.bf16.gmra.mxu0 %v942
    %v1169 = vpop.f32.mrf.mxu0
    %v1170 = vadd.f32 0.0, %v1169
    %v1171 = vpop.f32.mrf.mxu0
    %v1172 = vadd.f32 0.0, %v1171
    %v1173 = vpop.f32.mrf.mxu0
    %v1174 = vpop.f32.mrf.mxu0
    %1175 = vdwg.mxu0
    %1176 = vmatprep.subr.bf16.mxu0 %v1102
    %1177 = vmatpush1.bf16.msra.mxu0 %v1101
    %1178 = vmatprep.subr.bf16.mxu0 %v1098
    %1179 = vmatpush1.bf16.msra.mxu0 %v1097
    %1180 = vmatprep.subr.bf16.mxu0 %v1094
    %1181 = vmatpush1.bf16.msra.mxu0 %v1093
    %1182 = vmatprep.subr.bf16.mxu0 %v1090
    %1183 = vmatpush1.bf16.msra.mxu0 %v1089
    %1184 = vmatprep.subr.bf16.mxu0 %v1086
    %1185 = vmatpush1.bf16.msra.mxu0 %v1085
    %1186 = vmatprep.subr.bf16.mxu0 %v1082
    %1187 = vmatpush1.bf16.msra.mxu0 %v1081
    %1188 = vmatprep.subr.bf16.mxu0 %v1078
    %1189 = vmatpush1.bf16.msra.mxu0 %v1077
    %1190 = vmatprep.subr.bf16.mxu0 %v1074
    %1191 = vmatpush1.bf16.msra.mxu0 %v1073
    %1192 = vmatprep.subr.bf16.mxu0 0
    %1193 = vmatpush2.bf16.msra.mxu0 0
    %1194 = vmatprep.subr.bf16.mxu0 0
    %1195 = vmatpush2.bf16.msra.mxu0 0
    %1196 = vmatprep.subr.bf16.mxu0 0
    %1197 = vmatpush2.bf16.msra.mxu0 0
    %1198 = vmatprep.subr.bf16.mxu0 0
    %1199 = vmatpush2.bf16.msra.mxu0 0
    %1200 = vmatprep.subr.bf16.mxu0 0
    %1201 = vmatpush2.bf16.msra.mxu0 0
    %1202 = vmatprep.subr.bf16.mxu0 0
    %1203 = vmatpush2.bf16.msra.mxu0 0
    %1204 = vmatprep.subr.bf16.mxu0 0
    %1205 = vmatpush2.bf16.msra.mxu0 0
    %1206 = vmatprep.subr.bf16.mxu0 0
    %1207 = vmatpush2.bf16.msra.mxu0 0
    %1208 = vmatprep.mubr.bf16.mxu0 0
    %1209 = vmatmul.mubr.bf16.gmra.mxu0 %v942
    %v1210 = vpop.f32.mrf.mxu0
    %v1211 = vadd.f32 0.0, %v1210
    %v1212 = vpop.f32.mrf.mxu0
    %v1213 = vadd.f32 0.0, %v1212
    %v1214 = vpop.f32.mrf.mxu0
    %v1215 = vpop.f32.mrf.mxu0
    %1216 = vdwg.mxu0
    %v1217 = vadd.f32 %v937, %v1170
    %v1218 = vadd.f32 %v938, %v1172
    %v1219 = vadd.f32 %v939, %v1211
    %v1220 = vadd.f32 %v940, %v1213
    %v1221 = vpack.c.bf16 %v1217, %v1217
    %v1222 = vpack.c.bf16 %v1218, %v1218
    %v1223 = vpack.c.bf16 %v1219, %v1219
    %v1224 = vpack.c.bf16 %v1220, %v1220
    %v1225 = vxor.u32 %v1221, 2147516416
    %v1227 = vmul.bf16 %v1225, 1069105081
    %v1228 = vpow.bf16.pop %v1227
    %v1229 = vadd.bf16 %v1228, 1065369472
    %v1230 = vrcp.bf16.pop %v1229
    %v1231 = vmul.bf16 1065369472, %v1230
    %v1232 = vunpack.c.l.bf16 %v1231
    %v1233 = vxor.u32 %v1222, 2147516416
    %v1235 = vmul.bf16 %v1233, 1069105081
    %v1236 = vpow.bf16.pop %v1235
    %v1237 = vadd.bf16 %v1236, 1065369472
    %v1238 = vrcp.bf16.pop %v1237
    %v1239 = vmul.bf16 1065369472, %v1238
    %v1240 = vunpack.c.l.bf16 %v1239
    %v1241 = vtanh.bf16.pop %v1223
    %v1242 = vunpack.c.l.bf16 %v1241
    %v1243 = vxor.u32 %v1224, 2147516416
    %v1245 = vmul.bf16 %v1243, 1069105081
    %v1246 = vpow.bf16.pop %v1245
    %v1247 = vadd.bf16 %v1246, 1065369472
    %v1248 = vrcp.bf16.pop %v1247
    %v1249 = vmul.bf16 1065369472, %v1248
    %v1250 = vunpack.c.l.bf16 %v1249
    %v1251 = vld [vmem:[#allocation4] sm:$0xff]
    %v1252 = vmul.f32 %v1240, %v1251
    %v1253 = vmul.f32 %v1232, %v1242
    %v1254 = vadd.f32 %v1252, %v1253
    %v1255 = vpack.c.bf16 %v1254, %v1254
    %v1256 = vtanh.bf16.pop %v1255
    %v1257 = vunpack.c.l.bf16 %v1256
    %v1258 = vmul.f32 %v1250, %v1257
    %1259 = vst [vmem:[#allocation4] sm:$0xff] %v1254
    %1260 = vst [vmem:[#allocation3] sm:$0xff] %v1258
    %v1261 = vld [vmem:[#allocation5] sm:$0xff]
    %v1262 = vadd.f32 %v1261, %v1258
    %1263 = vst [vmem:[#allocation5] sm:$0xff] %v1262
    %s1264 = smul.u32 2, 4
    %s1265 = smul.addr %s1264, 4
    %s1266 = scalar_lea.vmem [#allocation2], %s1265
    %v1267 = vld [vmem:[%s1266] sm:$0xff]
    %v1268 = vld [vmem:[%s1266 + $0x8] sm:$0xff]
    %v1269 = vunpack.c.l.bf16 %v1267
    %v1270 = vunpack.c.h.bf16 %v1267
    %v1271 = vunpack.c.l.bf16 %v1268
    %v1272 = vunpack.c.h.bf16 %v1268
    %v1273 = vadd.f32 %v1269, %v584
    %v1274 = vadd.f32 %v1270, %v588
    %v1275 = vadd.f32 %v1271, %v592
    %v1276 = vadd.f32 %v1272, %v596
    %v1277 = vld [vmem:[#allocation3] sm:$0xff]
    %v1278 = vpack.c.bf16 %v1277, %v1277
    %v1279 = vld [vmem:[#allocation11] sm:$0xff]
    %v1280 = vld [vmem:[#allocation11 + $0x8] sm:$0xff]
    %v1281 = vld [vmem:[#allocation11 + $0x10] sm:$0xff]
    %v1282 = vld [vmem:[#allocation11 + $0x18] sm:$0xff]
    %v1283 = vld [vmem:[#allocation11 + $0x20] sm:$0xff]
    %v1284 = vld [vmem:[#allocation11 + $0x28] sm:$0xff]
    %v1285 = vld [vmem:[#allocation11 + $0x30] sm:$0xff]
    %v1286 = vld [vmem:[#allocation11 + $0x38] sm:$0xff]
    %v1287 = vld [vmem:[#allocation11 + $0x40] sm:$0xff]
    %v1288 = vld [vmem:[#allocation11 + $0x48] sm:$0xff]
    %v1289 = vld [vmem:[#allocation11 + $0x50] sm:$0xff]
    %v1290 = vld [vmem:[#allocation11 + $0x58] sm:$0xff]
    %v1291 = vld [vmem:[#allocation11 + $0x60] sm:$0xff]
    %v1292 = vld [vmem:[#allocation11 + $0x68] sm:$0xff]
    %v1293 = vld [vmem:[#allocation11 + $0x70] sm:$0xff]
    %v1294 = vld [vmem:[#allocation11 + $0x78] sm:$0xff]
    %v1295 = vld [vmem:[#allocation11 + $0x80] sm:$0xff]
    %v1296 = vld [vmem:[#allocation11 + $0x88] sm:$0xff]
    %v1297 = vld [vmem:[#allocation11 + $0x90] sm:$0xff]
    %v1298 = vld [vmem:[#allocation11 + $0x98] sm:$0xff]
    %v1299 = vld [vmem:[#allocation11 + $0xa0] sm:$0xff]
    %v1300 = vld [vmem:[#allocation11 + $0xa8] sm:$0xff]
    %v1301 = vld [vmem:[#allocation11 + $0xb0] sm:$0xff]
    %v1302 = vld [vmem:[#allocation11 + $0xb8] sm:$0xff]
    %v1303 = vld [vmem:[#allocation11 + $0xc0] sm:$0xff]
    %v1304 = vld [vmem:[#allocation11 + $0xc8] sm:$0xff]
    %v1305 = vld [vmem:[#allocation11 + $0xd0] sm:$0xff]
    %v1306 = vld [vmem:[#allocation11 + $0xd8] sm:$0xff]
    %v1307 = vld [vmem:[#allocation11 + $0xe0] sm:$0xff]
    %v1308 = vld [vmem:[#allocation11 + $0xe8] sm:$0xff]
    %v1309 = vld [vmem:[#allocation11 + $0xf0] sm:$0xff]
    %v1310 = vld [vmem:[#allocation11 + $0xf8] sm:$0xff]
    %v1343 = vunpack.c.l.b16 %v1279
    %v1344 = vunpack.c.h.b16 %v1279
    %v1345 = vunpack.c.l.b16 %v1280
    %v1346 = vunpack.c.h.b16 %v1280
    %v1347 = vunpack.c.l.b16 %v1281
    %v1348 = vunpack.c.h.b16 %v1281
    %v1349 = vunpack.c.l.b16 %v1282
    %v1350 = vunpack.c.h.b16 %v1282
    %v1351 = vunpack.c.l.b16 %v1283
    %v1352 = vunpack.c.h.b16 %v1283
    %v1353 = vunpack.c.l.b16 %v1284
    %v1354 = vunpack.c.h.b16 %v1284
    %v1355 = vunpack.c.l.b16 %v1285
    %v1356 = vunpack.c.h.b16 %v1285
    %v1357 = vunpack.c.l.b16 %v1286
    %v1358 = vunpack.c.h.b16 %v1286
    %v1359 = vunpack.c.l.b16 %v1287
    %v1360 = vunpack.c.h.b16 %v1287
    %v1361 = vunpack.c.l.b16 %v1288
    %v1362 = vunpack.c.h.b16 %v1288
    %v1363 = vunpack.c.l.b16 %v1289
    %v1364 = vunpack.c.h.b16 %v1289
    %v1365 = vunpack.c.l.b16 %v1290
    %v1366 = vunpack.c.h.b16 %v1290
    %v1367 = vunpack.c.l.b16 %v1291
    %v1368 = vunpack.c.h.b16 %v1291
    %v1369 = vunpack.c.l.b16 %v1292
    %v1370 = vunpack.c.h.b16 %v1292
    %v1371 = vunpack.c.l.b16 %v1293
    %v1372 = vunpack.c.h.b16 %v1293
    %v1373 = vunpack.c.l.b16 %v1294
    %v1374 = vunpack.c.h.b16 %v1294
    %v1375 = vunpack.c.l.b16 %v1295
    %v1376 = vunpack.c.h.b16 %v1295
    %v1377 = vunpack.c.l.b16 %v1296
    %v1378 = vunpack.c.h.b16 %v1296
    %v1379 = vunpack.c.l.b16 %v1297
    %v1380 = vunpack.c.h.b16 %v1297
    %v1381 = vunpack.c.l.b16 %v1298
    %v1382 = vunpack.c.h.b16 %v1298
    %v1383 = vunpack.c.l.b16 %v1299
    %v1384 = vunpack.c.h.b16 %v1299
    %v1385 = vunpack.c.l.b16 %v1300
    %v1386 = vunpack.c.h.b16 %v1300
    %v1387 = vunpack.c.l.b16 %v1301
    %v1388 = vunpack.c.h.b16 %v1301
    %v1389 = vunpack.c.l.b16 %v1302
    %v1390 = vunpack.c.h.b16 %v1302
    %v1391 = vunpack.c.l.b16 %v1303
    %v1392 = vunpack.c.h.b16 %v1303
    %v1393 = vunpack.c.l.b16 %v1304
    %v1394 = vunpack.c.h.b16 %v1304
    %v1395 = vunpack.c.l.b16 %v1305
    %v1396 = vunpack.c.h.b16 %v1305
    %v1397 = vunpack.c.l.b16 %v1306
    %v1398 = vunpack.c.h.b16 %v1306
    %v1399 = vunpack.c.l.b16 %v1307
    %v1400 = vunpack.c.h.b16 %v1307
    %v1401 = vunpack.c.l.b16 %v1308
    %v1402 = vunpack.c.h.b16 %v1308
    %v1403 = vunpack.c.l.b16 %v1309
    %v1404 = vunpack.c.h.b16 %v1309
    %v1405 = vunpack.c.l.b16 %v1310
    %v1406 = vunpack.c.h.b16 %v1310
    %v1407 = vpack.c.b16 %v1347, %v1343
    %v1408 = vpack.c.b16 %v1348, %v1344
    %v1409 = vpack.c.b16 %v1349, %v1345
    %v1410 = vpack.c.b16 %v1350, %v1346
    %v1411 = vpack.c.b16 %v1355, %v1351
    %v1412 = vpack.c.b16 %v1356, %v1352
    %v1413 = vpack.c.b16 %v1357, %v1353
    %v1414 = vpack.c.b16 %v1358, %v1354
    %v1415 = vpack.c.b16 %v1363, %v1359
    %v1416 = vpack.c.b16 %v1364, %v1360
    %v1417 = vpack.c.b16 %v1365, %v1361
    %v1418 = vpack.c.b16 %v1366, %v1362
    %v1419 = vpack.c.b16 %v1371, %v1367
    %v1420 = vpack.c.b16 %v1372, %v1368
    %v1421 = vpack.c.b16 %v1373, %v1369
    %v1422 = vpack.c.b16 %v1374, %v1370
    %v1423 = vpack.c.b16 %v1379, %v1375
    %v1424 = vpack.c.b16 %v1380, %v1376
    %v1425 = vpack.c.b16 %v1381, %v1377
    %v1426 = vpack.c.b16 %v1382, %v1378
    %v1427 = vpack.c.b16 %v1387, %v1383
    %v1428 = vpack.c.b16 %v1388, %v1384
    %v1429 = vpack.c.b16 %v1389, %v1385
    %v1430 = vpack.c.b16 %v1390, %v1386
    %v1431 = vpack.c.b16 %v1395, %v1391
    %v1432 = vpack.c.b16 %v1396, %v1392
    %v1433 = vpack.c.b16 %v1397, %v1393
    %v1434 = vpack.c.b16 %v1398, %v1394
    %v1435 = vpack.c.b16 %v1403, %v1399
    %v1436 = vpack.c.b16 %v1404, %v1400
    %v1437 = vpack.c.b16 %v1405, %v1401
    %v1438 = vpack.c.b16 %v1406, %v1402
    %1471 = vmatprep.subr.bf16.mxu0 %v1436
    %1472 = vmatpush1.bf16.msra.mxu0 %v1435
    %1473 = vmatprep.subr.bf16.mxu0 %v1432
    %1474 = vmatpush1.bf16.msra.mxu0 %v1431
    %1475 = vmatprep.subr.bf16.mxu0 %v1428
    %1476 = vmatpush1.bf16.msra.mxu0 %v1427
    %1477 = vmatprep.subr.bf16.mxu0 %v1424
    %1478 = vmatpush1.bf16.msra.mxu0 %v1423
    %1479 = vmatprep.subr.bf16.mxu0 %v1420
    %1480 = vmatpush1.bf16.msra.mxu0 %v1419
    %1481 = vmatprep.subr.bf16.mxu0 %v1416
    %1482 = vmatpush1.bf16.msra.mxu0 %v1415
    %1483 = vmatprep.subr.bf16.mxu0 %v1412
    %1484 = vmatpush1.bf16.msra.mxu0 %v1411
    %1485 = vmatprep.subr.bf16.mxu0 %v1408
    %1486 = vmatpush1.bf16.msra.mxu0 %v1407
    %1487 = vmatprep.subr.bf16.mxu0 0
    %1488 = vmatpush2.bf16.msra.mxu0 0
    %1489 = vmatprep.subr.bf16.mxu0 0
    %1490 = vmatpush2.bf16.msra.mxu0 0
    %1491 = vmatprep.subr.bf16.mxu0 0
    %1492 = vmatpush2.bf16.msra.mxu0 0
    %1493 = vmatprep.subr.bf16.mxu0 0
    %1494 = vmatpush2.bf16.msra.mxu0 0
    %1495 = vmatprep.subr.bf16.mxu0 0
    %1496 = vmatpush2.bf16.msra.mxu0 0
    %1497 = vmatprep.subr.bf16.mxu0 0
    %1498 = vmatpush2.bf16.msra.mxu0 0
    %1499 = vmatprep.subr.bf16.mxu0 0
    %1500 = vmatpush2.bf16.msra.mxu0 0
    %1501 = vmatprep.subr.bf16.mxu0 0
    %1502 = vmatpush2.bf16.msra.mxu0 0
    %1503 = vmatprep.mubr.bf16.mxu0 0
    %1504 = vmatmul.mubr.bf16.gmra.mxu0 %v1278
    %v1505 = vpop.f32.mrf.mxu0
    %v1506 = vadd.f32 0.0, %v1505
    %v1507 = vpop.f32.mrf.mxu0
    %v1508 = vadd.f32 0.0, %v1507
    %v1509 = vpop.f32.mrf.mxu0
    %v1510 = vpop.f32.mrf.mxu0
    %1511 = vdwg.mxu0
    %1512 = vmatprep.subr.bf16.mxu0 %v1438
    %1513 = vmatpush1.bf16.msra.mxu0 %v1437
    %1514 = vmatprep.subr.bf16.mxu0 %v1434
    %1515 = vmatpush1.bf16.msra.mxu0 %v1433
    %1516 = vmatprep.subr.bf16.mxu0 %v1430
    %1517 = vmatpush1.bf16.msra.mxu0 %v1429
    %1518 = vmatprep.subr.bf16.mxu0 %v1426
    %1519 = vmatpush1.bf16.msra.mxu0 %v1425
    %1520 = vmatprep.subr.bf16.mxu0 %v1422
    %1521 = vmatpush1.bf16.msra.mxu0 %v1421
    %1522 = vmatprep.subr.bf16.mxu0 %v1418
    %1523 = vmatpush1.bf16.msra.mxu0 %v1417
    %1524 = vmatprep.subr.bf16.mxu0 %v1414
    %1525 = vmatpush1.bf16.msra.mxu0 %v1413
    %1526 = vmatprep.subr.bf16.mxu0 %v1410
    %1527 = vmatpush1.bf16.msra.mxu0 %v1409
    %1528 = vmatprep.subr.bf16.mxu0 0
    %1529 = vmatpush2.bf16.msra.mxu0 0
    %1530 = vmatprep.subr.bf16.mxu0 0
    %1531 = vmatpush2.bf16.msra.mxu0 0
    %1532 = vmatprep.subr.bf16.mxu0 0
    %1533 = vmatpush2.bf16.msra.mxu0 0
    %1534 = vmatprep.subr.bf16.mxu0 0
    %1535 = vmatpush2.bf16.msra.mxu0 0
    %1536 = vmatprep.subr.bf16.mxu0 0
    %1537 = vmatpush2.bf16.msra.mxu0 0
    %1538 = vmatprep.subr.bf16.mxu0 0
    %1539 = vmatpush2.bf16.msra.mxu0 0
    %1540 = vmatprep.subr.bf16.mxu0 0
    %1541 = vmatpush2.bf16.msra.mxu0 0
    %1542 = vmatprep.subr.bf16.mxu0 0
    %1543 = vmatpush2.bf16.msra.mxu0 0
    %1544 = vmatprep.mubr.bf16.mxu0 0
    %1545 = vmatmul.mubr.bf16.gmra.mxu0 %v1278
    %v1546 = vpop.f32.mrf.mxu0
    %v1547 = vadd.f32 0.0, %v1546
    %v1548 = vpop.f32.mrf.mxu0
    %v1549 = vadd.f32 0.0, %v1548
    %v1550 = vpop.f32.mrf.mxu0
    %v1551 = vpop.f32.mrf.mxu0
    %1552 = vdwg.mxu0
    %v1553 = vadd.f32 %v1273, %v1506
    %v1554 = vadd.f32 %v1274, %v1508
    %v1555 = vadd.f32 %v1275, %v1547
    %v1556 = vadd.f32 %v1276, %v1549
    %v1557 = vpack.c.bf16 %v1553, %v1553
    %v1558 = vpack.c.bf16 %v1554, %v1554
    %v1559 = vpack.c.bf16 %v1555, %v1555
    %v1560 = vpack.c.bf16 %v1556, %v1556
    %v1561 = vxor.u32 %v1557, 2147516416
    %v1563 = vmul.bf16 %v1561, 1069105081
    %v1564 = vpow.bf16.pop %v1563
    %v1565 = vadd.bf16 %v1564, 1065369472
    %v1566 = vrcp.bf16.pop %v1565
    %v1567 = vmul.bf16 1065369472, %v1566
    %v1568 = vunpack.c.l.bf16 %v1567
    %v1569 = vxor.u32 %v1558, 2147516416
    %v1571 = vmul.bf16 %v1569, 1069105081
    %v1572 = vpow.bf16.pop %v1571
    %v1573 = vadd.bf16 %v1572, 1065369472
    %v1574 = vrcp.bf16.pop %v1573
    %v1575 = vmul.bf16 1065369472, %v1574
    %v1576 = vunpack.c.l.bf16 %v1575
    %v1577 = vtanh.bf16.pop %v1559
    %v1578 = vunpack.c.l.bf16 %v1577
    %v1579 = vxor.u32 %v1560, 2147516416
    %v1581 = vmul.bf16 %v1579, 1069105081
    %v1582 = vpow.bf16.pop %v1581
    %v1583 = vadd.bf16 %v1582, 1065369472
    %v1584 = vrcp.bf16.pop %v1583
    %v1585 = vmul.bf16 1065369472, %v1584
    %v1586 = vunpack.c.l.bf16 %v1585
    %v1587 = vld [vmem:[#allocation4] sm:$0xff]
    %v1588 = vmul.f32 %v1576, %v1587
    %v1589 = vmul.f32 %v1568, %v1578
    %v1590 = vadd.f32 %v1588, %v1589
    %v1591 = vpack.c.bf16 %v1590, %v1590
    %v1592 = vtanh.bf16.pop %v1591
    %v1593 = vunpack.c.l.bf16 %v1592
    %v1594 = vmul.f32 %v1586, %v1593
    %1595 = vst [vmem:[#allocation4] sm:$0xff] %v1590
    %1596 = vst [vmem:[#allocation3] sm:$0xff] %v1594
    %v1597 = vld [vmem:[#allocation5] sm:$0xff]
    %v1598 = vadd.f32 %v1597, %v1594
    %1599 = vst [vmem:[#allocation5] sm:$0xff] %v1598
    %s1600 = smul.u32 3, 4
    %s1601 = smul.addr %s1600, 4
    %s1602 = scalar_lea.vmem [#allocation2], %s1601
    %v1603 = vld [vmem:[%s1602] sm:$0xff]
    %v1604 = vld [vmem:[%s1602 + $0x8] sm:$0xff]
    %v1605 = vunpack.c.l.bf16 %v1603
    %v1606 = vunpack.c.h.bf16 %v1603
    %v1607 = vunpack.c.l.bf16 %v1604
    %v1608 = vunpack.c.h.bf16 %v1604
    %v1609 = vadd.f32 %v1605, %v584
    %v1610 = vadd.f32 %v1606, %v588
    %v1611 = vadd.f32 %v1607, %v592
    %v1612 = vadd.f32 %v1608, %v596
    %v1613 = vld [vmem:[#allocation3] sm:$0xff]
    %v1614 = vpack.c.bf16 %v1613, %v1613
    %v1615 = vld [vmem:[#allocation11] sm:$0xff]
    %v1616 = vld [vmem:[#allocation11 + $0x8] sm:$0xff]
    %v1617 = vld [vmem:[#allocation11 + $0x10] sm:$0xff]
    %v1618 = vld [vmem:[#allocation11 + $0x18] sm:$0xff]
    %v1619 = vld [vmem:[#allocation11 + $0x20] sm:$0xff]
    %v1620 = vld [vmem:[#allocation11 + $0x28] sm:$0xff]
    %v1621 = vld [vmem:[#allocation11 + $0x30] sm:$0xff]
    %v1622 = vld [vmem:[#allocation11 + $0x38] sm:$0xff]
    %v1623 = vld [vmem:[#allocation11 + $0x40] sm:$0xff]
    %v1624 = vld [vmem:[#allocation11 + $0x48] sm:$0xff]
    %v1625 = vld [vmem:[#allocation11 + $0x50] sm:$0xff]
    %v1626 = vld [vmem:[#allocation11 + $0x58] sm:$0xff]
    %v1627 = vld [vmem:[#allocation11 + $0x60] sm:$0xff]
    %v1628 = vld [vmem:[#allocation11 + $0x68] sm:$0xff]
    %v1629 = vld [vmem:[#allocation11 + $0x70] sm:$0xff]
    %v1630 = vld [vmem:[#allocation11 + $0x78] sm:$0xff]
    %v1631 = vld [vmem:[#allocation11 + $0x80] sm:$0xff]
    %v1632 = vld [vmem:[#allocation11 + $0x88] sm:$0xff]
    %v1633 = vld [vmem:[#allocation11 + $0x90] sm:$0xff]
    %v1634 = vld [vmem:[#allocation11 + $0x98] sm:$0xff]
    %v1635 = vld [vmem:[#allocation11 + $0xa0] sm:$0xff]
    %v1636 = vld [vmem:[#allocation11 + $0xa8] sm:$0xff]
    %v1637 = vld [vmem:[#allocation11 + $0xb0] sm:$0xff]
    %v1638 = vld [vmem:[#allocation11 + $0xb8] sm:$0xff]
    %v1639 = vld [vmem:[#allocation11 + $0xc0] sm:$0xff]
    %v1640 = vld [vmem:[#allocation11 + $0xc8] sm:$0xff]
    %v1641 = vld [vmem:[#allocation11 + $0xd0] sm:$0xff]
    %v1642 = vld [vmem:[#allocation11 + $0xd8] sm:$0xff]
    %v1643 = vld [vmem:[#allocation11 + $0xe0] sm:$0xff]
    %v1644 = vld [vmem:[#allocation11 + $0xe8] sm:$0xff]
    %v1645 = vld [vmem:[#allocation11 + $0xf0] sm:$0xff]
    %v1646 = vld [vmem:[#allocation11 + $0xf8] sm:$0xff]
    %v1679 = vunpack.c.l.b16 %v1615
    %v1680 = vunpack.c.h.b16 %v1615
    %v1681 = vunpack.c.l.b16 %v1616
    %v1682 = vunpack.c.h.b16 %v1616
    %v1683 = vunpack.c.l.b16 %v1617
    %v1684 = vunpack.c.h.b16 %v1617
    %v1685 = vunpack.c.l.b16 %v1618
    %v1686 = vunpack.c.h.b16 %v1618
    %v1687 = vunpack.c.l.b16 %v1619
    %v1688 = vunpack.c.h.b16 %v1619
    %v1689 = vunpack.c.l.b16 %v1620
    %v1690 = vunpack.c.h.b16 %v1620
    %v1691 = vunpack.c.l.b16 %v1621
    %v1692 = vunpack.c.h.b16 %v1621
    %v1693 = vunpack.c.l.b16 %v1622
    %v1694 = vunpack.c.h.b16 %v1622
    %v1695 = vunpack.c.l.b16 %v1623
    %v1696 = vunpack.c.h.b16 %v1623
    %v1697 = vunpack.c.l.b16 %v1624
    %v1698 = vunpack.c.h.b16 %v1624
    %v1699 = vunpack.c.l.b16 %v1625
    %v1700 = vunpack.c.h.b16 %v1625
    %v1701 = vunpack.c.l.b16 %v1626
    %v1702 = vunpack.c.h.b16 %v1626
    %v1703 = vunpack.c.l.b16 %v1627
    %v1704 = vunpack.c.h.b16 %v1627
    %v1705 = vunpack.c.l.b16 %v1628
    %v1706 = vunpack.c.h.b16 %v1628
    %v1707 = vunpack.c.l.b16 %v1629
    %v1708 = vunpack.c.h.b16 %v1629
    %v1709 = vunpack.c.l.b16 %v1630
    %v1710 = vunpack.c.h.b16 %v1630
    %v1711 = vunpack.c.l.b16 %v1631
    %v1712 = vunpack.c.h.b16 %v1631
    %v1713 = vunpack.c.l.b16 %v1632
    %v1714 = vunpack.c.h.b16 %v1632
    %v1715 = vunpack.c.l.b16 %v1633
    %v1716 = vunpack.c.h.b16 %v1633
    %v1717 = vunpack.c.l.b16 %v1634
    %v1718 = vunpack.c.h.b16 %v1634
    %v1719 = vunpack.c.l.b16 %v1635
    %v1720 = vunpack.c.h.b16 %v1635
    %v1721 = vunpack.c.l.b16 %v1636
    %v1722 = vunpack.c.h.b16 %v1636
    %v1723 = vunpack.c.l.b16 %v1637
    %v1724 = vunpack.c.h.b16 %v1637
    %v1725 = vunpack.c.l.b16 %v1638
    %v1726 = vunpack.c.h.b16 %v1638
    %v1727 = vunpack.c.l.b16 %v1639
    %v1728 = vunpack.c.h.b16 %v1639
    %v1729 = vunpack.c.l.b16 %v1640
    %v1730 = vunpack.c.h.b16 %v1640
    %v1731 = vunpack.c.l.b16 %v1641
    %v1732 = vunpack.c.h.b16 %v1641
    %v1733 = vunpack.c.l.b16 %v1642
    %v1734 = vunpack.c.h.b16 %v1642
    %v1735 = vunpack.c.l.b16 %v1643
    %v1736 = vunpack.c.h.b16 %v1643
    %v1737 = vunpack.c.l.b16 %v1644
    %v1738 = vunpack.c.h.b16 %v1644
    %v1739 = vunpack.c.l.b16 %v1645
    %v1740 = vunpack.c.h.b16 %v1645
    %v1741 = vunpack.c.l.b16 %v1646
    %v1742 = vunpack.c.h.b16 %v1646
    %v1743 = vpack.c.b16 %v1683, %v1679
    %v1744 = vpack.c.b16 %v1684, %v1680
    %v1745 = vpack.c.b16 %v1685, %v1681
    %v1746 = vpack.c.b16 %v1686, %v1682
    %v1747 = vpack.c.b16 %v1691, %v1687
    %v1748 = vpack.c.b16 %v1692, %v1688
    %v1749 = vpack.c.b16 %v1693, %v1689
    %v1750 = vpack.c.b16 %v1694, %v1690
    %v1751 = vpack.c.b16 %v1699, %v1695
    %v1752 = vpack.c.b16 %v1700, %v1696
    %v1753 = vpack.c.b16 %v1701, %v1697
    %v1754 = vpack.c.b16 %v1702, %v1698
    %v1755 = vpack.c.b16 %v1707, %v1703
    %v1756 = vpack.c.b16 %v1708, %v1704
    %v1757 = vpack.c.b16 %v1709, %v1705
    %v1758 = vpack.c.b16 %v1710, %v1706
    %v1759 = vpack.c.b16 %v1715, %v1711
    %v1760 = vpack.c.b16 %v1716, %v1712
    %v1761 = vpack.c.b16 %v1717, %v1713
    %v1762 = vpack.c.b16 %v1718, %v1714
    %v1763 = vpack.c.b16 %v1723, %v1719
    %v1764 = vpack.c.b16 %v1724, %v1720
    %v1765 = vpack.c.b16 %v1725, %v1721
    %v1766 = vpack.c.b16 %v1726, %v1722
    %v1767 = vpack.c.b16 %v1731, %v1727
    %v1768 = vpack.c.b16 %v1732, %v1728
    %v1769 = vpack.c.b16 %v1733, %v1729
    %v1770 = vpack.c.b16 %v1734, %v1730
    %v1771 = vpack.c.b16 %v1739, %v1735
    %v1772 = vpack.c.b16 %v1740, %v1736
    %v1773 = vpack.c.b16 %v1741, %v1737
    %v1774 = vpack.c.b16 %v1742, %v1738
    %1807 = vmatprep.subr.bf16.mxu0 %v1772
    %1808 = vmatpush1.bf16.msra.mxu0 %v1771
    %1809 = vmatprep.subr.bf16.mxu0 %v1768
    %1810 = vmatpush1.bf16.msra.mxu0 %v1767
    %1811 = vmatprep.subr.bf16.mxu0 %v1764
    %1812 = vmatpush1.bf16.msra.mxu0 %v1763
    %1813 = vmatprep.subr.bf16.mxu0 %v1760
    %1814 = vmatpush1.bf16.msra.mxu0 %v1759
    %1815 = vmatprep.subr.bf16.mxu0 %v1756
    %1816 = vmatpush1.bf16.msra.mxu0 %v1755
    %1817 = vmatprep.subr.bf16.mxu0 %v1752
    %1818 = vmatpush1.bf16.msra.mxu0 %v1751
    %1819 = vmatprep.subr.bf16.mxu0 %v1748
    %1820 = vmatpush1.bf16.msra.mxu0 %v1747
    %1821 = vmatprep.subr.bf16.mxu0 %v1744
    %1822 = vmatpush1.bf16.msra.mxu0 %v1743
    %1823 = vmatprep.subr.bf16.mxu0 0
    %1824 = vmatpush2.bf16.msra.mxu0 0
    %1825 = vmatprep.subr.bf16.mxu0 0
    %1826 = vmatpush2.bf16.msra.mxu0 0
    %1827 = vmatprep.subr.bf16.mxu0 0
    %1828 = vmatpush2.bf16.msra.mxu0 0
    %1829 = vmatprep.subr.bf16.mxu0 0
    %1830 = vmatpush2.bf16.msra.mxu0 0
    %1831 = vmatprep.subr.bf16.mxu0 0
    %1832 = vmatpush2.bf16.msra.mxu0 0
    %1833 = vmatprep.subr.bf16.mxu0 0
    %1834 = vmatpush2.bf16.msra.mxu0 0
    %1835 = vmatprep.subr.bf16.mxu0 0
    %1836 = vmatpush2.bf16.msra.mxu0 0
    %1837 = vmatprep.subr.bf16.mxu0 0
    %1838 = vmatpush2.bf16.msra.mxu0 0
    %1839 = vmatprep.mubr.bf16.mxu0 0
    %1840 = vmatmul.mubr.bf16.gmra.mxu0 %v1614
    %v1841 = vpop.f32.mrf.mxu0
    %v1842 = vadd.f32 0.0, %v1841
    %v1843 = vpop.f32.mrf.mxu0
    %v1844 = vadd.f32 0.0, %v1843
    %v1845 = vpop.f32.mrf.mxu0
    %v1846 = vpop.f32.mrf.mxu0
    %1847 = vdwg.mxu0
    %1848 = vmatprep.subr.bf16.mxu0 %v1774
    %1849 = vmatpush1.bf16.msra.mxu0 %v1773
    %1850 = vmatprep.subr.bf16.mxu0 %v1770
    %1851 = vmatpush1.bf16.msra.mxu0 %v1769
    %1852 = vmatprep.subr.bf16.mxu0 %v1766
    %1853 = vmatpush1.bf16.msra.mxu0 %v1765
    %1854 = vmatprep.subr.bf16.mxu0 %v1762
    %1855 = vmatpush1.bf16.msra.mxu0 %v1761
    %1856 = vmatprep.subr.bf16.mxu0 %v1758
    %1857 = vmatpush1.bf16.msra.mxu0 %v1757
    %1858 = vmatprep.subr.bf16.mxu0 %v1754
    %1859 = vmatpush1.bf16.msra.mxu0 %v1753
    %1860 = vmatprep.subr.bf16.mxu0 %v1750
    %1861 = vmatpush1.bf16.msra.mxu0 %v1749
    %1862 = vmatprep.subr.bf16.mxu0 %v1746
    %1863 = vmatpush1.bf16.msra.mxu0 %v1745
    %1864 = vmatprep.subr.bf16.mxu0 0
    %1865 = vmatpush2.bf16.msra.mxu0 0
    %1866 = vmatprep.subr.bf16.mxu0 0
    %1867 = vmatpush2.bf16.msra.mxu0 0
    %1868 = vmatprep.subr.bf16.mxu0 0
    %1869 = vmatpush2.bf16.msra.mxu0 0
    %1870 = vmatprep.subr.bf16.mxu0 0
    %1871 = vmatpush2.bf16.msra.mxu0 0
    %1872 = vmatprep.subr.bf16.mxu0 0
    %1873 = vmatpush2.bf16.msra.mxu0 0
    %1874 = vmatprep.subr.bf16.mxu0 0
    %1875 = vmatpush2.bf16.msra.mxu0 0
    %1876 = vmatprep.subr.bf16.mxu0 0
    %1877 = vmatpush2.bf16.msra.mxu0 0
    %1878 = vmatprep.subr.bf16.mxu0 0
    %1879 = vmatpush2.bf16.msra.mxu0 0
    %1880 = vmatprep.mubr.bf16.mxu0 0
    %1881 = vmatmul.mubr.bf16.gmra.mxu0 %v1614
    %v1882 = vpop.f32.mrf.mxu0
    %v1883 = vadd.f32 0.0, %v1882
    %v1884 = vpop.f32.mrf.mxu0
    %v1885 = vadd.f32 0.0, %v1884
    %v1886 = vpop.f32.mrf.mxu0
    %v1887 = vpop.f32.mrf.mxu0
    %1888 = vdwg.mxu0
    %v1889 = vadd.f32 %v1609, %v1842
    %v1890 = vadd.f32 %v1610, %v1844
    %v1891 = vadd.f32 %v1611, %v1883
    %v1892 = vadd.f32 %v1612, %v1885
    %v1893 = vpack.c.bf16 %v1889, %v1889
    %v1894 = vpack.c.bf16 %v1890, %v1890
    %v1895 = vpack.c.bf16 %v1891, %v1891
    %v1896 = vpack.c.bf16 %v1892, %v1892
    %v1897 = vxor.u32 %v1893, 2147516416
    %v1899 = vmul.bf16 %v1897, 1069105081
    %v1900 = vpow.bf16.pop %v1899
    %v1901 = vadd.bf16 %v1900, 1065369472
    %v1902 = vrcp.bf16.pop %v1901
    %v1903 = vmul.bf16 1065369472, %v1902
    %v1904 = vunpack.c.l.bf16 %v1903
    %v1905 = vxor.u32 %v1894, 2147516416
    %v1907 = vmul.bf16 %v1905, 1069105081
    %v1908 = vpow.bf16.pop %v1907
    %v1909 = vadd.bf16 %v1908, 1065369472
    %v1910 = vrcp.bf16.pop %v1909
    %v1911 = vmul.bf16 1065369472, %v1910
    %v1912 = vunpack.c.l.bf16 %v1911
    %v1913 = vtanh.bf16.pop %v1895
    %v1914 = vunpack.c.l.bf16 %v1913
    %v1915 = vxor.u32 %v1896, 2147516416
    %v1917 = vmul.bf16 %v1915, 1069105081
    %v1918 = vpow.bf16.pop %v1917
    %v1919 = vadd.bf16 %v1918, 1065369472
    %v1920 = vrcp.bf16.pop %v1919
    %v1921 = vmul.bf16 1065369472, %v1920
    %v1922 = vunpack.c.l.bf16 %v1921
    %v1923 = vld [vmem:[#allocation4] sm:$0xff]
    %v1924 = vmul.f32 %v1912, %v1923
    %v1925 = vmul.f32 %v1904, %v1914
    %v1926 = vadd.f32 %v1924, %v1925
    %v1927 = vpack.c.bf16 %v1926, %v1926
    %v1928 = vtanh.bf16.pop %v1927
    %v1929 = vunpack.c.l.bf16 %v1928
    %v1930 = vmul.f32 %v1922, %v1929
    %1931 = vst [vmem:[#allocation4] sm:$0xff] %v1926
    %1932 = vst [vmem:[#allocation3] sm:$0xff] %v1930
    %v1933 = vld [vmem:[#allocation5] sm:$0xff]
    %v1934 = vadd.f32 %v1933, %v1930
    %1935 = vst [vmem:[#allocation5] sm:$0xff] %v1934
    %s1936 = smul.u32 4, 4
    %s1937 = smul.addr %s1936, 4
    %s1938 = scalar_lea.vmem [#allocation2], %s1937
    %v1939 = vld [vmem:[%s1938] sm:$0xff]
    %v1940 = vld [vmem:[%s1938 + $0x8] sm:$0xff]
    %v1941 = vunpack.c.l.bf16 %v1939
    %v1942 = vunpack.c.h.bf16 %v1939
    %v1943 = vunpack.c.l.bf16 %v1940
    %v1944 = vunpack.c.h.bf16 %v1940
    %v1945 = vadd.f32 %v1941, %v584
    %v1946 = vadd.f32 %v1942, %v588
    %v1947 = vadd.f32 %v1943, %v592
    %v1948 = vadd.f32 %v1944, %v596
    %v1949 = vld [vmem:[#allocation3] sm:$0xff]
    %v1950 = vpack.c.bf16 %v1949, %v1949
    %v1951 = vld [vmem:[#allocation11] sm:$0xff]
    %v1952 = vld [vmem:[#allocation11 + $0x8] sm:$0xff]
    %v1953 = vld [vmem:[#allocation11 + $0x10] sm:$0xff]
    %v1954 = vld [vmem:[#allocation11 + $0x18] sm:$0xff]
    %v1955 = vld [vmem:[#allocation11 + $0x20] sm:$0xff]
    %v1956 = vld [vmem:[#allocation11 + $0x28] sm:$0xff]
    %v1957 = vld [vmem:[#allocation11 + $0x30] sm:$0xff]
    %v1958 = vld [vmem:[#allocation11 + $0x38] sm:$0xff]
    %v1959 = vld [vmem:[#allocation11 + $0x40] sm:$0xff]
    %v1960 = vld [vmem:[#allocation11 + $0x48] sm:$0xff]
    %v1961 = vld [vmem:[#allocation11 + $0x50] sm:$0xff]
    %v1962 = vld [vmem:[#allocation11 + $0x58] sm:$0xff]
    %v1963 = vld [vmem:[#allocation11 + $0x60] sm:$0xff]
    %v1964 = vld [vmem:[#allocation11 + $0x68] sm:$0xff]
    %v1965 = vld [vmem:[#allocation11 + $0x70] sm:$0xff]
    %v1966 = vld [vmem:[#allocation11 + $0x78] sm:$0xff]
    %v1967 = vld [vmem:[#allocation11 + $0x80] sm:$0xff]
    %v1968 = vld [vmem:[#allocation11 + $0x88] sm:$0xff]
    %v1969 = vld [vmem:[#allocation11 + $0x90] sm:$0xff]
    %v1970 = vld [vmem:[#allocation11 + $0x98] sm:$0xff]
    %v1971 = vld [vmem:[#allocation11 + $0xa0] sm:$0xff]
    %v1972 = vld [vmem:[#allocation11 + $0xa8] sm:$0xff]
    %v1973 = vld [vmem:[#allocation11 + $0xb0] sm:$0xff]
    %v1974 = vld [vmem:[#allocation11 + $0xb8] sm:$0xff]
    %v1975 = vld [vmem:[#allocation11 + $0xc0] sm:$0xff]
    %v1976 = vld [vmem:[#allocation11 + $0xc8] sm:$0xff]
    %v1977 = vld [vmem:[#allocation11 + $0xd0] sm:$0xff]
    %v1978 = vld [vmem:[#allocation11 + $0xd8] sm:$0xff]
    %v1979 = vld [vmem:[#allocation11 + $0xe0] sm:$0xff]
    %v1980 = vld [vmem:[#allocation11 + $0xe8] sm:$0xff]
    %v1981 = vld [vmem:[#allocation11 + $0xf0] sm:$0xff]
    %v1982 = vld [vmem:[#allocation11 + $0xf8] sm:$0xff]
    %v2015 = vunpack.c.l.b16 %v1951
    %v2016 = vunpack.c.h.b16 %v1951
    %v2017 = vunpack.c.l.b16 %v1952
    %v2018 = vunpack.c.h.b16 %v1952
    %v2019 = vunpack.c.l.b16 %v1953
    %v2020 = vunpack.c.h.b16 %v1953
    %v2021 = vunpack.c.l.b16 %v1954
    %v2022 = vunpack.c.h.b16 %v1954
    %v2023 = vunpack.c.l.b16 %v1955
    %v2024 = vunpack.c.h.b16 %v1955
    %v2025 = vunpack.c.l.b16 %v1956
    %v2026 = vunpack.c.h.b16 %v1956
    %v2027 = vunpack.c.l.b16 %v1957
    %v2028 = vunpack.c.h.b16 %v1957
    %v2029 = vunpack.c.l.b16 %v1958
    %v2030 = vunpack.c.h.b16 %v1958
    %v2031 = vunpack.c.l.b16 %v1959
    %v2032 = vunpack.c.h.b16 %v1959
    %v2033 = vunpack.c.l.b16 %v1960
    %v2034 = vunpack.c.h.b16 %v1960
    %v2035 = vunpack.c.l.b16 %v1961
    %v2036 = vunpack.c.h.b16 %v1961
    %v2037 = vunpack.c.l.b16 %v1962
    %v2038 = vunpack.c.h.b16 %v1962
    %v2039 = vunpack.c.l.b16 %v1963
    %v2040 = vunpack.c.h.b16 %v1963
    %v2041 = vunpack.c.l.b16 %v1964
    %v2042 = vunpack.c.h.b16 %v1964
    %v2043 = vunpack.c.l.b16 %v1965
    %v2044 = vunpack.c.h.b16 %v1965
    %v2045 = vunpack.c.l.b16 %v1966
    %v2046 = vunpack.c.h.b16 %v1966
    %v2047 = vunpack.c.l.b16 %v1967
    %v2048 = vunpack.c.h.b16 %v1967
    %v2049 = vunpack.c.l.b16 %v1968
    %v2050 = vunpack.c.h.b16 %v1968
    %v2051 = vunpack.c.l.b16 %v1969
    %v2052 = vunpack.c.h.b16 %v1969
    %v2053 = vunpack.c.l.b16 %v1970
    %v2054 = vunpack.c.h.b16 %v1970
    %v2055 = vunpack.c.l.b16 %v1971
    %v2056 = vunpack.c.h.b16 %v1971
    %v2057 = vunpack.c.l.b16 %v1972
    %v2058 = vunpack.c.h.b16 %v1972
    %v2059 = vunpack.c.l.b16 %v1973
    %v2060 = vunpack.c.h.b16 %v1973
    %v2061 = vunpack.c.l.b16 %v1974
    %v2062 = vunpack.c.h.b16 %v1974
    %v2063 = vunpack.c.l.b16 %v1975
    %v2064 = vunpack.c.h.b16 %v1975
    %v2065 = vunpack.c.l.b16 %v1976
    %v2066 = vunpack.c.h.b16 %v1976
    %v2067 = vunpack.c.l.b16 %v1977
    %v2068 = vunpack.c.h.b16 %v1977
    %v2069 = vunpack.c.l.b16 %v1978
    %v2070 = vunpack.c.h.b16 %v1978
    %v2071 = vunpack.c.l.b16 %v1979
    %v2072 = vunpack.c.h.b16 %v1979
    %v2073 = vunpack.c.l.b16 %v1980
    %v2074 = vunpack.c.h.b16 %v1980
    %v2075 = vunpack.c.l.b16 %v1981
    %v2076 = vunpack.c.h.b16 %v1981
    %v2077 = vunpack.c.l.b16 %v1982
    %v2078 = vunpack.c.h.b16 %v1982
    %v2079 = vpack.c.b16 %v2019, %v2015
    %v2080 = vpack.c.b16 %v2020, %v2016
    %v2081 = vpack.c.b16 %v2021, %v2017
    %v2082 = vpack.c.b16 %v2022, %v2018
    %v2083 = vpack.c.b16 %v2027, %v2023
    %v2084 = vpack.c.b16 %v2028, %v2024
    %v2085 = vpack.c.b16 %v2029, %v2025
    %v2086 = vpack.c.b16 %v2030, %v2026
    %v2087 = vpack.c.b16 %v2035, %v2031
    %v2088 = vpack.c.b16 %v2036, %v2032
    %v2089 = vpack.c.b16 %v2037, %v2033
    %v2090 = vpack.c.b16 %v2038, %v2034
    %v2091 = vpack.c.b16 %v2043, %v2039
    %v2092 = vpack.c.b16 %v2044, %v2040
    %v2093 = vpack.c.b16 %v2045, %v2041
    %v2094 = vpack.c.b16 %v2046, %v2042
    %v2095 = vpack.c.b16 %v2051, %v2047
    %v2096 = vpack.c.b16 %v2052, %v2048
    %v2097 = vpack.c.b16 %v2053, %v2049
    %v2098 = vpack.c.b16 %v2054, %v2050
    %v2099 = vpack.c.b16 %v2059, %v2055
    %v2100 = vpack.c.b16 %v2060, %v2056
    %v2101 = vpack.c.b16 %v2061, %v2057
    %v2102 = vpack.c.b16 %v2062, %v2058
    %v2103 = vpack.c.b16 %v2067, %v2063
    %v2104 = vpack.c.b16 %v2068, %v2064
    %v2105 = vpack.c.b16 %v2069, %v2065
    %v2106 = vpack.c.b16 %v2070, %v2066
    %v2107 = vpack.c.b16 %v2075, %v2071
    %v2108 = vpack.c.b16 %v2076, %v2072
    %v2109 = vpack.c.b16 %v2077, %v2073
    %v2110 = vpack.c.b16 %v2078, %v2074
    %2143 = vmatprep.subr.bf16.mxu0 %v2108
    %2144 = vmatpush1.bf16.msra.mxu0 %v2107
    %2145 = vmatprep.subr.bf16.mxu0 %v2104
    %2146 = vmatpush1.bf16.msra.mxu0 %v2103
    %2147 = vmatprep.subr.bf16.mxu0 %v2100
    %2148 = vmatpush1.bf16.msra.mxu0 %v2099
    %2149 = vmatprep.subr.bf16.mxu0 %v2096
    %2150 = vmatpush1.bf16.msra.mxu0 %v2095
    %2151 = vmatprep.subr.bf16.mxu0 %v2092
    %2152 = vmatpush1.bf16.msra.mxu0 %v2091
    %2153 = vmatprep.subr.bf16.mxu0 %v2088
    %2154 = vmatpush1.bf16.msra.mxu0 %v2087
    %2155 = vmatprep.subr.bf16.mxu0 %v2084
    %2156 = vmatpush1.bf16.msra.mxu0 %v2083
    %2157 = vmatprep.subr.bf16.mxu0 %v2080
    %2158 = vmatpush1.bf16.msra.mxu0 %v2079
    %2159 = vmatprep.subr.bf16.mxu0 0
    %2160 = vmatpush2.bf16.msra.mxu0 0
    %2161 = vmatprep.subr.bf16.mxu0 0
    %2162 = vmatpush2.bf16.msra.mxu0 0
    %2163 = vmatprep.subr.bf16.mxu0 0
    %2164 = vmatpush2.bf16.msra.mxu0 0
    %2165 = vmatprep.subr.bf16.mxu0 0
    %2166 = vmatpush2.bf16.msra.mxu0 0
    %2167 = vmatprep.subr.bf16.mxu0 0
    %2168 = vmatpush2.bf16.msra.mxu0 0
    %2169 = vmatprep.subr.bf16.mxu0 0
    %2170 = vmatpush2.bf16.msra.mxu0 0
    %2171 = vmatprep.subr.bf16.mxu0 0
    %2172 = vmatpush2.bf16.msra.mxu0 0
    %2173 = vmatprep.subr.bf16.mxu0 0
    %2174 = vmatpush2.bf16.msra.mxu0 0
    %2175 = vmatprep.mubr.bf16.mxu0 0
    %2176 = vmatmul.mubr.bf16.gmra.mxu0 %v1950
    %v2177 = vpop.f32.mrf.mxu0
    %v2178 = vadd.f32 0.0, %v2177
    %v2179 = vpop.f32.mrf.mxu0
    %v2180 = vadd.f32 0.0, %v2179
    %v2181 = vpop.f32.mrf.mxu0
    %v2182 = vpop.f32.mrf.mxu0
    %2183 = vdwg.mxu0
    %2184 = vmatprep.subr.bf16.mxu0 %v2110
    %2185 = vmatpush1.bf16.msra.mxu0 %v2109
    %2186 = vmatprep.subr.bf16.mxu0 %v2106
    %2187 = vmatpush1.bf16.msra.mxu0 %v2105
    %2188 = vmatprep.subr.bf16.mxu0 %v2102
    %2189 = vmatpush1.bf16.msra.mxu0 %v2101
    %2190 = vmatprep.subr.bf16.mxu0 %v2098
    %2191 = vmatpush1.bf16.msra.mxu0 %v2097
    %2192 = vmatprep.subr.bf16.mxu0 %v2094
    %2193 = vmatpush1.bf16.msra.mxu0 %v2093
    %2194 = vmatprep.subr.bf16.mxu0 %v2090
    %2195 = vmatpush1.bf16.msra.mxu0 %v2089
    %2196 = vmatprep.subr.bf16.mxu0 %v2086
    %2197 = vmatpush1.bf16.msra.mxu0 %v2085
    %2198 = vmatprep.subr.bf16.mxu0 %v2082
    %2199 = vmatpush1.bf16.msra.mxu0 %v2081
    %2200 = vmatprep.subr.bf16.mxu0 0
    %2201 = vmatpush2.bf16.msra.mxu0 0
    %2202 = vmatprep.subr.bf16.mxu0 0
    %2203 = vmatpush2.bf16.msra.mxu0 0
    %2204 = vmatprep.subr.bf16.mxu0 0
    %2205 = vmatpush2.bf16.msra.mxu0 0
    %2206 = vmatprep.subr.bf16.mxu0 0
    %2207 = vmatpush2.bf16.msra.mxu0 0
    %2208 = vmatprep.subr.bf16.mxu0 0
    %2209 = vmatpush2.bf16.msra.mxu0 0
    %2210 = vmatprep.subr.bf16.mxu0 0
    %2211 = vmatpush2.bf16.msra.mxu0 0
    %2212 = vmatprep.subr.bf16.mxu0 0
    %2213 = vmatpush2.bf16.msra.mxu0 0
    %2214 = vmatprep.subr.bf16.mxu0 0
    %2215 = vmatpush2.bf16.msra.mxu0 0
    %2216 = vmatprep.mubr.bf16.mxu0 0
    %2217 = vmatmul.mubr.bf16.gmra.mxu0 %v1950
    %v2218 = vpop.f32.mrf.mxu0
    %v2219 = vadd.f32 0.0, %v2218
    %v2220 = vpop.f32.mrf.mxu0
    %v2221 = vadd.f32 0.0, %v2220
    %v2222 = vpop.f32.mrf.mxu0
    %v2223 = vpop.f32.mrf.mxu0
    %2224 = vdwg.mxu0
    %v2225 = vadd.f32 %v1945, %v2178
    %v2226 = vadd.f32 %v1946, %v2180
    %v2227 = vadd.f32 %v1947, %v2219
    %v2228 = vadd.f32 %v1948, %v2221
    %v2229 = vpack.c.bf16 %v2225, %v2225
    %v2230 = vpack.c.bf16 %v2226, %v2226
    %v2231 = vpack.c.bf16 %v2227, %v2227
    %v2232 = vpack.c.bf16 %v2228, %v2228
    %v2233 = vxor.u32 %v2229, 2147516416
    %v2235 = vmul.bf16 %v2233, 1069105081
    %v2236 = vpow.bf16.pop %v2235
    %v2237 = vadd.bf16 %v2236, 1065369472
    %v2238 = vrcp.bf16.pop %v2237
    %v2239 = vmul.bf16 1065369472, %v2238
    %v2240 = vunpack.c.l.bf16 %v2239
    %v2241 = vxor.u32 %v2230, 2147516416
    %v2243 = vmul.bf16 %v2241, 1069105081
    %v2244 = vpow.bf16.pop %v2243
    %v2245 = vadd.bf16 %v2244, 1065369472
    %v2246 = vrcp.bf16.pop %v2245
    %v2247 = vmul.bf16 1065369472, %v2246
    %v2248 = vunpack.c.l.bf16 %v2247
    %v2249 = vtanh.bf16.pop %v2231
    %v2250 = vunpack.c.l.bf16 %v2249
    %v2251 = vxor.u32 %v2232, 2147516416
    %v2253 = vmul.bf16 %v2251, 1069105081
    %v2254 = vpow.bf16.pop %v2253
    %v2255 = vadd.bf16 %v2254, 1065369472
    %v2256 = vrcp.bf16.pop %v2255
    %v2257 = vmul.bf16 1065369472, %v2256
    %v2258 = vunpack.c.l.bf16 %v2257
    %v2259 = vld [vmem:[#allocation4] sm:$0xff]
    %v2260 = vmul.f32 %v2248, %v2259
    %v2261 = vmul.f32 %v2240, %v2250
    %v2262 = vadd.f32 %v2260, %v2261
    %v2263 = vpack.c.bf16 %v2262, %v2262
    %v2264 = vtanh.bf16.pop %v2263
    %v2265 = vunpack.c.l.bf16 %v2264
    %v2266 = vmul.f32 %v2258, %v2265
    %2267 = vst [vmem:[#allocation4] sm:$0xff] %v2262
    %2268 = vst [vmem:[#allocation3] sm:$0xff] %v2266
    %v2269 = vld [vmem:[#allocation5] sm:$0xff]
    %v2270 = vadd.f32 %v2269, %v2266
    %2271 = vst [vmem:[#allocation5] sm:$0xff] %v2270
    %s2272 = smul.u32 5, 4
    %s2273 = smul.addr %s2272, 4
    %s2274 = scalar_lea.vmem [#allocation2], %s2273
    %v2275 = vld [vmem:[%s2274] sm:$0xff]
    %v2276 = vld [vmem:[%s2274 + $0x8] sm:$0xff]
    %v2277 = vunpack.c.l.bf16 %v2275
    %v2278 = vunpack.c.h.bf16 %v2275
    %v2279 = vunpack.c.l.bf16 %v2276
    %v2280 = vunpack.c.h.bf16 %v2276
    %v2281 = vadd.f32 %v2277, %v584
    %v2282 = vadd.f32 %v2278, %v588
    %v2283 = vadd.f32 %v2279, %v592
    %v2284 = vadd.f32 %v2280, %v596
    %v2285 = vld [vmem:[#allocation3] sm:$0xff]
    %v2286 = vpack.c.bf16 %v2285, %v2285
    %v2287 = vld [vmem:[#allocation11] sm:$0xff]
    %v2288 = vld [vmem:[#allocation11 + $0x8] sm:$0xff]
    %v2289 = vld [vmem:[#allocation11 + $0x10] sm:$0xff]
    %v2290 = vld [vmem:[#allocation11 + $0x18] sm:$0xff]
    %v2291 = vld [vmem:[#allocation11 + $0x20] sm:$0xff]
    %v2292 = vld [vmem:[#allocation11 + $0x28] sm:$0xff]
    %v2293 = vld [vmem:[#allocation11 + $0x30] sm:$0xff]
    %v2294 = vld [vmem:[#allocation11 + $0x38] sm:$0xff]
    %v2295 = vld [vmem:[#allocation11 + $0x40] sm:$0xff]
    %v2296 = vld [vmem:[#allocation11 + $0x48] sm:$0xff]
    %v2297 = vld [vmem:[#allocation11 + $0x50] sm:$0xff]
    %v2298 = vld [vmem:[#allocation11 + $0x58] sm:$0xff]
    %v2299 = vld [vmem:[#allocation11 + $0x60] sm:$0xff]
    %v2300 = vld [vmem:[#allocation11 + $0x68] sm:$0xff]
    %v2301 = vld [vmem:[#allocation11 + $0x70] sm:$0xff]
    %v2302 = vld [vmem:[#allocation11 + $0x78] sm:$0xff]
    %v2303 = vld [vmem:[#allocation11 + $0x80] sm:$0xff]
    %v2304 = vld [vmem:[#allocation11 + $0x88] sm:$0xff]
    %v2305 = vld [vmem:[#allocation11 + $0x90] sm:$0xff]
    %v2306 = vld [vmem:[#allocation11 + $0x98] sm:$0xff]
    %v2307 = vld [vmem:[#allocation11 + $0xa0] sm:$0xff]
    %v2308 = vld [vmem:[#allocation11 + $0xa8] sm:$0xff]
    %v2309 = vld [vmem:[#allocation11 + $0xb0] sm:$0xff]
    %v2310 = vld [vmem:[#allocation11 + $0xb8] sm:$0xff]
    %v2311 = vld [vmem:[#allocation11 + $0xc0] sm:$0xff]
    %v2312 = vld [vmem:[#allocation11 + $0xc8] sm:$0xff]
    %v2313 = vld [vmem:[#allocation11 + $0xd0] sm:$0xff]
    %v2314 = vld [vmem:[#allocation11 + $0xd8] sm:$0xff]
    %v2315 = vld [vmem:[#allocation11 + $0xe0] sm:$0xff]
    %v2316 = vld [vmem:[#allocation11 + $0xe8] sm:$0xff]
    %v2317 = vld [vmem:[#allocation11 + $0xf0] sm:$0xff]
    %v2318 = vld [vmem:[#allocation11 + $0xf8] sm:$0xff]
    %v2351 = vunpack.c.l.b16 %v2287
    %v2352 = vunpack.c.h.b16 %v2287
    %v2353 = vunpack.c.l.b16 %v2288
    %v2354 = vunpack.c.h.b16 %v2288
    %v2355 = vunpack.c.l.b16 %v2289
    %v2356 = vunpack.c.h.b16 %v2289
    %v2357 = vunpack.c.l.b16 %v2290
    %v2358 = vunpack.c.h.b16 %v2290
    %v2359 = vunpack.c.l.b16 %v2291
    %v2360 = vunpack.c.h.b16 %v2291
    %v2361 = vunpack.c.l.b16 %v2292
    %v2362 = vunpack.c.h.b16 %v2292
    %v2363 = vunpack.c.l.b16 %v2293
    %v2364 = vunpack.c.h.b16 %v2293
    %v2365 = vunpack.c.l.b16 %v2294
    %v2366 = vunpack.c.h.b16 %v2294
    %v2367 = vunpack.c.l.b16 %v2295
    %v2368 = vunpack.c.h.b16 %v2295
    %v2369 = vunpack.c.l.b16 %v2296
    %v2370 = vunpack.c.h.b16 %v2296
    %v2371 = vunpack.c.l.b16 %v2297
    %v2372 = vunpack.c.h.b16 %v2297
    %v2373 = vunpack.c.l.b16 %v2298
    %v2374 = vunpack.c.h.b16 %v2298
    %v2375 = vunpack.c.l.b16 %v2299
    %v2376 = vunpack.c.h.b16 %v2299
    %v2377 = vunpack.c.l.b16 %v2300
    %v2378 = vunpack.c.h.b16 %v2300
    %v2379 = vunpack.c.l.b16 %v2301
    %v2380 = vunpack.c.h.b16 %v2301
    %v2381 = vunpack.c.l.b16 %v2302
    %v2382 = vunpack.c.h.b16 %v2302
    %v2383 = vunpack.c.l.b16 %v2303
    %v2384 = vunpack.c.h.b16 %v2303
    %v2385 = vunpack.c.l.b16 %v2304
    %v2386 = vunpack.c.h.b16 %v2304
    %v2387 = vunpack.c.l.b16 %v2305
    %v2388 = vunpack.c.h.b16 %v2305
    %v2389 = vunpack.c.l.b16 %v2306
    %v2390 = vunpack.c.h.b16 %v2306
    %v2391 = vunpack.c.l.b16 %v2307
    %v2392 = vunpack.c.h.b16 %v2307
    %v2393 = vunpack.c.l.b16 %v2308
    %v2394 = vunpack.c.h.b16 %v2308
    %v2395 = vunpack.c.l.b16 %v2309
    %v2396 = vunpack.c.h.b16 %v2309
    %v2397 = vunpack.c.l.b16 %v2310
    %v2398 = vunpack.c.h.b16 %v2310
    %v2399 = vunpack.c.l.b16 %v2311
    %v2400 = vunpack.c.h.b16 %v2311
    %v2401 = vunpack.c.l.b16 %v2312
    %v2402 = vunpack.c.h.b16 %v2312
    %v2403 = vunpack.c.l.b16 %v2313
    %v2404 = vunpack.c.h.b16 %v2313
    %v2405 = vunpack.c.l.b16 %v2314
    %v2406 = vunpack.c.h.b16 %v2314
    %v2407 = vunpack.c.l.b16 %v2315
    %v2408 = vunpack.c.h.b16 %v2315
    %v2409 = vunpack.c.l.b16 %v2316
    %v2410 = vunpack.c.h.b16 %v2316
    %v2411 = vunpack.c.l.b16 %v2317
    %v2412 = vunpack.c.h.b16 %v2317
    %v2413 = vunpack.c.l.b16 %v2318
    %v2414 = vunpack.c.h.b16 %v2318
    %v2415 = vpack.c.b16 %v2355, %v2351
    %v2416 = vpack.c.b16 %v2356, %v2352
    %v2417 = vpack.c.b16 %v2357, %v2353
    %v2418 = vpack.c.b16 %v2358, %v2354
    %v2419 = vpack.c.b16 %v2363, %v2359
    %v2420 = vpack.c.b16 %v2364, %v2360
    %v2421 = vpack.c.b16 %v2365, %v2361
    %v2422 = vpack.c.b16 %v2366, %v2362
    %v2423 = vpack.c.b16 %v2371, %v2367
    %v2424 = vpack.c.b16 %v2372, %v2368
    %v2425 = vpack.c.b16 %v2373, %v2369
    %v2426 = vpack.c.b16 %v2374, %v2370
    %v2427 = vpack.c.b16 %v2379, %v2375
    %v2428 = vpack.c.b16 %v2380, %v2376
    %v2429 = vpack.c.b16 %v2381, %v2377
    %v2430 = vpack.c.b16 %v2382, %v2378
    %v2431 = vpack.c.b16 %v2387, %v2383
    %v2432 = vpack.c.b16 %v2388, %v2384
    %v2433 = vpack.c.b16 %v2389, %v2385
    %v2434 = vpack.c.b16 %v2390, %v2386
    %v2435 = vpack.c.b16 %v2395, %v2391
    %v2436 = vpack.c.b16 %v2396, %v2392
    %v2437 = vpack.c.b16 %v2397, %v2393
    %v2438 = vpack.c.b16 %v2398, %v2394
    %v2439 = vpack.c.b16 %v2403, %v2399
    %v2440 = vpack.c.b16 %v2404, %v2400
    %v2441 = vpack.c.b16 %v2405, %v2401
    %v2442 = vpack.c.b16 %v2406, %v2402
    %v2443 = vpack.c.b16 %v2411, %v2407
    %v2444 = vpack.c.b16 %v2412, %v2408
    %v2445 = vpack.c.b16 %v2413, %v2409
    %v2446 = vpack.c.b16 %v2414, %v2410
    %2479 = vmatprep.subr.bf16.mxu0 %v2444
    %2480 = vmatpush1.bf16.msra.mxu0 %v2443
    %2481 = vmatprep.subr.bf16.mxu0 %v2440
    %2482 = vmatpush1.bf16.msra.mxu0 %v2439
    %2483 = vmatprep.subr.bf16.mxu0 %v2436
    %2484 = vmatpush1.bf16.msra.mxu0 %v2435
    %2485 = vmatprep.subr.bf16.mxu0 %v2432
    %2486 = vmatpush1.bf16.msra.mxu0 %v2431
    %2487 = vmatprep.subr.bf16.mxu0 %v2428
    %2488 = vmatpush1.bf16.msra.mxu0 %v2427
    %2489 = vmatprep.subr.bf16.mxu0 %v2424
    %2490 = vmatpush1.bf16.msra.mxu0 %v2423
    %2491 = vmatprep.subr.bf16.mxu0 %v2420
    %2492 = vmatpush1.bf16.msra.mxu0 %v2419
    %2493 = vmatprep.subr.bf16.mxu0 %v2416
    %2494 = vmatpush1.bf16.msra.mxu0 %v2415
    %2495 = vmatprep.subr.bf16.mxu0 0
    %2496 = vmatpush2.bf16.msra.mxu0 0
    %2497 = vmatprep.subr.bf16.mxu0 0
    %2498 = vmatpush2.bf16.msra.mxu0 0
    %2499 = vmatprep.subr.bf16.mxu0 0
    %2500 = vmatpush2.bf16.msra.mxu0 0
    %2501 = vmatprep.subr.bf16.mxu0 0
    %2502 = vmatpush2.bf16.msra.mxu0 0
    %2503 = vmatprep.subr.bf16.mxu0 0
    %2504 = vmatpush2.bf16.msra.mxu0 0
    %2505 = vmatprep.subr.bf16.mxu0 0
    %2506 = vmatpush2.bf16.msra.mxu0 0
    %2507 = vmatprep.subr.bf16.mxu0 0
    %2508 = vmatpush2.bf16.msra.mxu0 0
    %2509 = vmatprep.subr.bf16.mxu0 0
    %2510 = vmatpush2.bf16.msra.mxu0 0
    %2511 = vmatprep.mubr.bf16.mxu0 0
    %2512 = vmatmul.mubr.bf16.gmra.mxu0 %v2286
    %v2513 = vpop.f32.mrf.mxu0
    %v2514 = vadd.f32 0.0, %v2513
    %v2515 = vpop.f32.mrf.mxu0
    %v2516 = vadd.f32 0.0, %v2515
    %v2517 = vpop.f32.mrf.mxu0
    %v2518 = vpop.f32.mrf.mxu0
    %2519 = vdwg.mxu0
    %2520 = vmatprep.subr.bf16.mxu0 %v2446
    %2521 = vmatpush1.bf16.msra.mxu0 %v2445
    %2522 = vmatprep.subr.bf16.mxu0 %v2442
    %2523 = vmatpush1.bf16.msra.mxu0 %v2441
    %2524 = vmatprep.subr.bf16.mxu0 %v2438
    %2525 = vmatpush1.bf16.msra.mxu0 %v2437
    %2526 = vmatprep.subr.bf16.mxu0 %v2434
    %2527 = vmatpush1.bf16.msra.mxu0 %v2433
    %2528 = vmatprep.subr.bf16.mxu0 %v2430
    %2529 = vmatpush1.bf16.msra.mxu0 %v2429
    %2530 = vmatprep.subr.bf16.mxu0 %v2426
    %2531 = vmatpush1.bf16.msra.mxu0 %v2425
    %2532 = vmatprep.subr.bf16.mxu0 %v2422
    %2533 = vmatpush1.bf16.msra.mxu0 %v2421
    %2534 = vmatprep.subr.bf16.mxu0 %v2418
    %2535 = vmatpush1.bf16.msra.mxu0 %v2417
    %2536 = vmatprep.subr.bf16.mxu0 0
    %2537 = vmatpush2.bf16.msra.mxu0 0
    %2538 = vmatprep.subr.bf16.mxu0 0
    %2539 = vmatpush2.bf16.msra.mxu0 0
    %2540 = vmatprep.subr.bf16.mxu0 0
    %2541 = vmatpush2.bf16.msra.mxu0 0
    %2542 = vmatprep.subr.bf16.mxu0 0
    %2543 = vmatpush2.bf16.msra.mxu0 0
    %2544 = vmatprep.subr.bf16.mxu0 0
    %2545 = vmatpush2.bf16.msra.mxu0 0
    %2546 = vmatprep.subr.bf16.mxu0 0
    %2547 = vmatpush2.bf16.msra.mxu0 0
    %2548 = vmatprep.subr.bf16.mxu0 0
    %2549 = vmatpush2.bf16.msra.mxu0 0
    %2550 = vmatprep.subr.bf16.mxu0 0
    %2551 = vmatpush2.bf16.msra.mxu0 0
    %2552 = vmatprep.mubr.bf16.mxu0 0
    %2553 = vmatmul.mubr.bf16.gmra.mxu0 %v2286
    %v2554 = vpop.f32.mrf.mxu0
    %v2555 = vadd.f32 0.0, %v2554
    %v2556 = vpop.f32.mrf.mxu0
    %v2557 = vadd.f32 0.0, %v2556
    %v2558 = vpop.f32.mrf.mxu0
    %v2559 = vpop.f32.mrf.mxu0
    %2560 = vdwg.mxu0
    %v2561 = vadd.f32 %v2281, %v2514
    %v2562 = vadd.f32 %v2282, %v2516
    %v2563 = vadd.f32 %v2283, %v2555
    %v2564 = vadd.f32 %v2284, %v2557
    %v2565 = vpack.c.bf16 %v2561, %v2561
    %v2566 = vpack.c.bf16 %v2562, %v2562
    %v2567 = vpack.c.bf16 %v2563, %v2563
    %v2568 = vpack.c.bf16 %v2564, %v2564
    %v2569 = vxor.u32 %v2565, 2147516416
    %v2571 = vmul.bf16 %v2569, 1069105081
    %v2572 = vpow.bf16.pop %v2571
    %v2573 = vadd.bf16 %v2572, 1065369472
    %v2574 = vrcp.bf16.pop %v2573
    %v2575 = vmul.bf16 1065369472, %v2574
    %v2576 = vunpack.c.l.bf16 %v2575
    %v2577 = vxor.u32 %v2566, 2147516416
    %v2579 = vmul.bf16 %v2577, 1069105081
    %v2580 = vpow.bf16.pop %v2579
    %v2581 = vadd.bf16 %v2580, 1065369472
    %v2582 = vrcp.bf16.pop %v2581
    %v2583 = vmul.bf16 1065369472, %v2582
    %v2584 = vunpack.c.l.bf16 %v2583
    %v2585 = vtanh.bf16.pop %v2567
    %v2586 = vunpack.c.l.bf16 %v2585
    %v2587 = vxor.u32 %v2568, 2147516416
    %v2589 = vmul.bf16 %v2587, 1069105081
    %v2590 = vpow.bf16.pop %v2589
    %v2591 = vadd.bf16 %v2590, 1065369472
    %v2592 = vrcp.bf16.pop %v2591
    %v2593 = vmul.bf16 1065369472, %v2592
    %v2594 = vunpack.c.l.bf16 %v2593
    %v2595 = vld [vmem:[#allocation4] sm:$0xff]
    %v2596 = vmul.f32 %v2584, %v2595
    %v2597 = vmul.f32 %v2576, %v2586
    %v2598 = vadd.f32 %v2596, %v2597
    %v2599 = vpack.c.bf16 %v2598, %v2598
    %v2600 = vtanh.bf16.pop %v2599
    %v2601 = vunpack.c.l.bf16 %v2600
    %v2602 = vmul.f32 %v2594, %v2601
    %2603 = vst [vmem:[#allocation4] sm:$0xff] %v2598
    %2604 = vst [vmem:[#allocation3] sm:$0xff] %v2602
    %v2605 = vld [vmem:[#allocation5] sm:$0xff]
    %v2606 = vadd.f32 %v2605, %v2602
    %2607 = vst [vmem:[#allocation5] sm:$0xff] %v2606
    %s2608 = smul.u32 6, 4
    %s2609 = smul.addr %s2608, 4
    %s2610 = scalar_lea.vmem [#allocation2], %s2609
    %v2611 = vld [vmem:[%s2610] sm:$0xff]
    %v2612 = vld [vmem:[%s2610 + $0x8] sm:$0xff]
    %v2613 = vunpack.c.l.bf16 %v2611
    %v2614 = vunpack.c.h.bf16 %v2611
    %v2615 = vunpack.c.l.bf16 %v2612
    %v2616 = vunpack.c.h.bf16 %v2612
    %v2617 = vadd.f32 %v2613, %v584
    %v2618 = vadd.f32 %v2614, %v588
    %v2619 = vadd.f32 %v2615, %v592
    %v2620 = vadd.f32 %v2616, %v596
    %v2621 = vld [vmem:[#allocation3] sm:$0xff]
    %v2622 = vpack.c.bf16 %v2621, %v2621
    %v2623 = vld [vmem:[#allocation11] sm:$0xff]
    %v2624 = vld [vmem:[#allocation11 + $0x8] sm:$0xff]
    %v2625 = vld [vmem:[#allocation11 + $0x10] sm:$0xff]
    %v2626 = vld [vmem:[#allocation11 + $0x18] sm:$0xff]
    %v2627 = vld [vmem:[#allocation11 + $0x20] sm:$0xff]
    %v2628 = vld [vmem:[#allocation11 + $0x28] sm:$0xff]
    %v2629 = vld [vmem:[#allocation11 + $0x30] sm:$0xff]
    %v2630 = vld [vmem:[#allocation11 + $0x38] sm:$0xff]
    %v2631 = vld [vmem:[#allocation11 + $0x40] sm:$0xff]
    %v2632 = vld [vmem:[#allocation11 + $0x48] sm:$0xff]
    %v2633 = vld [vmem:[#allocation11 + $0x50] sm:$0xff]
    %v2634 = vld [vmem:[#allocation11 + $0x58] sm:$0xff]
    %v2635 = vld [vmem:[#allocation11 + $0x60] sm:$0xff]
    %v2636 = vld [vmem:[#allocation11 + $0x68] sm:$0xff]
    %v2637 = vld [vmem:[#allocation11 + $0x70] sm:$0xff]
    %v2638 = vld [vmem:[#allocation11 + $0x78] sm:$0xff]
    %v2639 = vld [vmem:[#allocation11 + $0x80] sm:$0xff]
    %v2640 = vld [vmem:[#allocation11 + $0x88] sm:$0xff]
    %v2641 = vld [vmem:[#allocation11 + $0x90] sm:$0xff]
    %v2642 = vld [vmem:[#allocation11 + $0x98] sm:$0xff]
    %v2643 = vld [vmem:[#allocation11 + $0xa0] sm:$0xff]
    %v2644 = vld [vmem:[#allocation11 + $0xa8] sm:$0xff]
    %v2645 = vld [vmem:[#allocation11 + $0xb0] sm:$0xff]
    %v2646 = vld [vmem:[#allocation11 + $0xb8] sm:$0xff]
    %v2647 = vld [vmem:[#allocation11 + $0xc0] sm:$0xff]
    %v2648 = vld [vmem:[#allocation11 + $0xc8] sm:$0xff]
    %v2649 = vld [vmem:[#allocation11 + $0xd0] sm:$0xff]
    %v2650 = vld [vmem:[#allocation11 + $0xd8] sm:$0xff]
    %v2651 = vld [vmem:[#allocation11 + $0xe0] sm:$0xff]
    %v2652 = vld [vmem:[#allocation11 + $0xe8] sm:$0xff]
    %v2653 = vld [vmem:[#allocation11 + $0xf0] sm:$0xff]
    %v2654 = vld [vmem:[#allocation11 + $0xf8] sm:$0xff]
    %v2687 = vunpack.c.l.b16 %v2623
    %v2688 = vunpack.c.h.b16 %v2623
    %v2689 = vunpack.c.l.b16 %v2624
    %v2690 = vunpack.c.h.b16 %v2624
    %v2691 = vunpack.c.l.b16 %v2625
    %v2692 = vunpack.c.h.b16 %v2625
    %v2693 = vunpack.c.l.b16 %v2626
    %v2694 = vunpack.c.h.b16 %v2626
    %v2695 = vunpack.c.l.b16 %v2627
    %v2696 = vunpack.c.h.b16 %v2627
    %v2697 = vunpack.c.l.b16 %v2628
    %v2698 = vunpack.c.h.b16 %v2628
    %v2699 = vunpack.c.l.b16 %v2629
    %v2700 = vunpack.c.h.b16 %v2629
    %v2701 = vunpack.c.l.b16 %v2630
    %v2702 = vunpack.c.h.b16 %v2630
    %v2703 = vunpack.c.l.b16 %v2631
    %v2704 = vunpack.c.h.b16 %v2631
    %v2705 = vunpack.c.l.b16 %v2632
    %v2706 = vunpack.c.h.b16 %v2632
    %v2707 = vunpack.c.l.b16 %v2633
    %v2708 = vunpack.c.h.b16 %v2633
    %v2709 = vunpack.c.l.b16 %v2634
    %v2710 = vunpack.c.h.b16 %v2634
    %v2711 = vunpack.c.l.b16 %v2635
    %v2712 = vunpack.c.h.b16 %v2635
    %v2713 = vunpack.c.l.b16 %v2636
    %v2714 = vunpack.c.h.b16 %v2636
    %v2715 = vunpack.c.l.b16 %v2637
    %v2716 = vunpack.c.h.b16 %v2637
    %v2717 = vunpack.c.l.b16 %v2638
    %v2718 = vunpack.c.h.b16 %v2638
    %v2719 = vunpack.c.l.b16 %v2639
    %v2720 = vunpack.c.h.b16 %v2639
    %v2721 = vunpack.c.l.b16 %v2640
    %v2722 = vunpack.c.h.b16 %v2640
    %v2723 = vunpack.c.l.b16 %v2641
    %v2724 = vunpack.c.h.b16 %v2641
    %v2725 = vunpack.c.l.b16 %v2642
    %v2726 = vunpack.c.h.b16 %v2642
    %v2727 = vunpack.c.l.b16 %v2643
    %v2728 = vunpack.c.h.b16 %v2643
    %v2729 = vunpack.c.l.b16 %v2644
    %v2730 = vunpack.c.h.b16 %v2644
    %v2731 = vunpack.c.l.b16 %v2645
    %v2732 = vunpack.c.h.b16 %v2645
    %v2733 = vunpack.c.l.b16 %v2646
    %v2734 = vunpack.c.h.b16 %v2646
    %v2735 = vunpack.c.l.b16 %v2647
    %v2736 = vunpack.c.h.b16 %v2647
    %v2737 = vunpack.c.l.b16 %v2648
    %v2738 = vunpack.c.h.b16 %v2648
    %v2739 = vunpack.c.l.b16 %v2649
    %v2740 = vunpack.c.h.b16 %v2649
    %v2741 = vunpack.c.l.b16 %v2650
    %v2742 = vunpack.c.h.b16 %v2650
    %v2743 = vunpack.c.l.b16 %v2651
    %v2744 = vunpack.c.h.b16 %v2651
    %v2745 = vunpack.c.l.b16 %v2652
    %v2746 = vunpack.c.h.b16 %v2652
    %v2747 = vunpack.c.l.b16 %v2653
    %v2748 = vunpack.c.h.b16 %v2653
    %v2749 = vunpack.c.l.b16 %v2654
    %v2750 = vunpack.c.h.b16 %v2654
    %v2751 = vpack.c.b16 %v2691, %v2687
    %v2752 = vpack.c.b16 %v2692, %v2688
    %v2753 = vpack.c.b16 %v2693, %v2689
    %v2754 = vpack.c.b16 %v2694, %v2690
    %v2755 = vpack.c.b16 %v2699, %v2695
    %v2756 = vpack.c.b16 %v2700, %v2696
    %v2757 = vpack.c.b16 %v2701, %v2697
    %v2758 = vpack.c.b16 %v2702, %v2698
    %v2759 = vpack.c.b16 %v2707, %v2703
    %v2760 = vpack.c.b16 %v2708, %v2704
    %v2761 = vpack.c.b16 %v2709, %v2705
    %v2762 = vpack.c.b16 %v2710, %v2706
    %v2763 = vpack.c.b16 %v2715, %v2711
    %v2764 = vpack.c.b16 %v2716, %v2712
    %v2765 = vpack.c.b16 %v2717, %v2713
    %v2766 = vpack.c.b16 %v2718, %v2714
    %v2767 = vpack.c.b16 %v2723, %v2719
    %v2768 = vpack.c.b16 %v2724, %v2720
    %v2769 = vpack.c.b16 %v2725, %v2721
    %v2770 = vpack.c.b16 %v2726, %v2722
    %v2771 = vpack.c.b16 %v2731, %v2727
    %v2772 = vpack.c.b16 %v2732, %v2728
    %v2773 = vpack.c.b16 %v2733, %v2729
    %v2774 = vpack.c.b16 %v2734, %v2730
    %v2775 = vpack.c.b16 %v2739, %v2735
    %v2776 = vpack.c.b16 %v2740, %v2736
    %v2777 = vpack.c.b16 %v2741, %v2737
    %v2778 = vpack.c.b16 %v2742, %v2738
    %v2779 = vpack.c.b16 %v2747, %v2743
    %v2780 = vpack.c.b16 %v2748, %v2744
    %v2781 = vpack.c.b16 %v2749, %v2745
    %v2782 = vpack.c.b16 %v2750, %v2746
    %2815 = vmatprep.subr.bf16.mxu0 %v2780
    %2816 = vmatpush1.bf16.msra.mxu0 %v2779
    %2817 = vmatprep.subr.bf16.mxu0 %v2776
    %2818 = vmatpush1.bf16.msra.mxu0 %v2775
    %2819 = vmatprep.subr.bf16.mxu0 %v2772
    %2820 = vmatpush1.bf16.msra.mxu0 %v2771
    %2821 = vmatprep.subr.bf16.mxu0 %v2768
    %2822 = vmatpush1.bf16.msra.mxu0 %v2767
    %2823 = vmatprep.subr.bf16.mxu0 %v2764
    %2824 = vmatpush1.bf16.msra.mxu0 %v2763
    %2825 = vmatprep.subr.bf16.mxu0 %v2760
    %2826 = vmatpush1.bf16.msra.mxu0 %v2759
    %2827 = vmatprep.subr.bf16.mxu0 %v2756
    %2828 = vmatpush1.bf16.msra.mxu0 %v2755
    %2829 = vmatprep.subr.bf16.mxu0 %v2752
    %2830 = vmatpush1.bf16.msra.mxu0 %v2751
    %2831 = vmatprep.subr.bf16.mxu0 0
    %2832 = vmatpush2.bf16.msra.mxu0 0
    %2833 = vmatprep.subr.bf16.mxu0 0
    %2834 = vmatpush2.bf16.msra.mxu0 0
    %2835 = vmatprep.subr.bf16.mxu0 0
    %2836 = vmatpush2.bf16.msra.mxu0 0
    %2837 = vmatprep.subr.bf16.mxu0 0
    %2838 = vmatpush2.bf16.msra.mxu0 0
    %2839 = vmatprep.subr.bf16.mxu0 0
    %2840 = vmatpush2.bf16.msra.mxu0 0
    %2841 = vmatprep.subr.bf16.mxu0 0
    %2842 = vmatpush2.bf16.msra.mxu0 0
    %2843 = vmatprep.subr.bf16.mxu0 0
    %2844 = vmatpush2.bf16.msra.mxu0 0
    %2845 = vmatprep.subr.bf16.mxu0 0
    %2846 = vmatpush2.bf16.msra.mxu0 0
    %2847 = vmatprep.mubr.bf16.mxu0 0
    %2848 = vmatmul.mubr.bf16.gmra.mxu0 %v2622
    %v2849 = vpop.f32.mrf.mxu0
    %v2850 = vadd.f32 0.0, %v2849
    %v2851 = vpop.f32.mrf.mxu0
    %v2852 = vadd.f32 0.0, %v2851
    %v2853 = vpop.f32.mrf.mxu0
    %v2854 = vpop.f32.mrf.mxu0
    %2855 = vdwg.mxu0
    %2856 = vmatprep.subr.bf16.mxu0 %v2782
    %2857 = vmatpush1.bf16.msra.mxu0 %v2781
    %2858 = vmatprep.subr.bf16.mxu0 %v2778
    %2859 = vmatpush1.bf16.msra.mxu0 %v2777
    %2860 = vmatprep.subr.bf16.mxu0 %v2774
    %2861 = vmatpush1.bf16.msra.mxu0 %v2773
    %2862 = vmatprep.subr.bf16.mxu0 %v2770
    %2863 = vmatpush1.bf16.msra.mxu0 %v2769
    %2864 = vmatprep.subr.bf16.mxu0 %v2766
    %2865 = vmatpush1.bf16.msra.mxu0 %v2765
    %2866 = vmatprep.subr.bf16.mxu0 %v2762
    %2867 = vmatpush1.bf16.msra.mxu0 %v2761
    %2868 = vmatprep.subr.bf16.mxu0 %v2758
    %2869 = vmatpush1.bf16.msra.mxu0 %v2757
    %2870 = vmatprep.subr.bf16.mxu0 %v2754
    %2871 = vmatpush1.bf16.msra.mxu0 %v2753
    %2872 = vmatprep.subr.bf16.mxu0 0
    %2873 = vmatpush2.bf16.msra.mxu0 0
    %2874 = vmatprep.subr.bf16.mxu0 0
    %2875 = vmatpush2.bf16.msra.mxu0 0
    %2876 = vmatprep.subr.bf16.mxu0 0
    %2877 = vmatpush2.bf16.msra.mxu0 0
    %2878 = vmatprep.subr.bf16.mxu0 0
    %2879 = vmatpush2.bf16.msra.mxu0 0
    %2880 = vmatprep.subr.bf16.mxu0 0
    %2881 = vmatpush2.bf16.msra.mxu0 0
    %2882 = vmatprep.subr.bf16.mxu0 0
    %2883 = vmatpush2.bf16.msra.mxu0 0
    %2884 = vmatprep.subr.bf16.mxu0 0
    %2885 = vmatpush2.bf16.msra.mxu0 0
    %2886 = vmatprep.subr.bf16.mxu0 0
    %2887 = vmatpush2.bf16.msra.mxu0 0
    %2888 = vmatprep.mubr.bf16.mxu0 0
    %2889 = vmatmul.mubr.bf16.gmra.mxu0 %v2622
    %v2890 = vpop.f32.mrf.mxu0
    %v2891 = vadd.f32 0.0, %v2890
    %v2892 = vpop.f32.mrf.mxu0
    %v2893 = vadd.f32 0.0, %v2892
    %v2894 = vpop.f32.mrf.mxu0
    %v2895 = vpop.f32.mrf.mxu0
    %2896 = vdwg.mxu0
    %v2897 = vadd.f32 %v2617, %v2850
    %v2898 = vadd.f32 %v2618, %v2852
    %v2899 = vadd.f32 %v2619, %v2891
    %v2900 = vadd.f32 %v2620, %v2893
    %v2901 = vpack.c.bf16 %v2897, %v2897
    %v2902 = vpack.c.bf16 %v2898, %v2898
    %v2903 = vpack.c.bf16 %v2899, %v2899
    %v2904 = vpack.c.bf16 %v2900, %v2900
    %v2905 = vxor.u32 %v2901, 2147516416
    %v2907 = vmul.bf16 %v2905, 1069105081
    %v2908 = vpow.bf16.pop %v2907
    %v2909 = vadd.bf16 %v2908, 1065369472
    %v2910 = vrcp.bf16.pop %v2909
    %v2911 = vmul.bf16 1065369472, %v2910
    %v2912 = vunpack.c.l.bf16 %v2911
    %v2913 = vxor.u32 %v2902, 2147516416
    %v2915 = vmul.bf16 %v2913, 1069105081
    %v2916 = vpow.bf16.pop %v2915
    %v2917 = vadd.bf16 %v2916, 1065369472
    %v2918 = vrcp.bf16.pop %v2917
    %v2919 = vmul.bf16 1065369472, %v2918
    %v2920 = vunpack.c.l.bf16 %v2919
    %v2921 = vtanh.bf16.pop %v2903
    %v2922 = vunpack.c.l.bf16 %v2921
    %v2923 = vxor.u32 %v2904, 2147516416
    %v2925 = vmul.bf16 %v2923, 1069105081
    %v2926 = vpow.bf16.pop %v2925
    %v2927 = vadd.bf16 %v2926, 1065369472
    %v2928 = vrcp.bf16.pop %v2927
    %v2929 = vmul.bf16 1065369472, %v2928
    %v2930 = vunpack.c.l.bf16 %v2929
    %v2931 = vld [vmem:[#allocation4] sm:$0xff]
    %v2932 = vmul.f32 %v2920, %v2931
    %v2933 = vmul.f32 %v2912, %v2922
    %v2934 = vadd.f32 %v2932, %v2933
    %v2935 = vpack.c.bf16 %v2934, %v2934
    %v2936 = vtanh.bf16.pop %v2935
    %v2937 = vunpack.c.l.bf16 %v2936
    %v2938 = vmul.f32 %v2930, %v2937
    %2939 = vst [vmem:[#allocation4] sm:$0xff] %v2934
    %2940 = vst [vmem:[#allocation3] sm:$0xff] %v2938
    %v2941 = vld [vmem:[#allocation5] sm:$0xff]
    %v2942 = vadd.f32 %v2941, %v2938
    %2943 = vst [vmem:[#allocation5] sm:$0xff] %v2942
    %s2944 = smul.u32 7, 4
    %s2945 = smul.addr %s2944, 4
    %s2946 = scalar_lea.vmem [#allocation2], %s2945
    %v2947 = vld [vmem:[%s2946] sm:$0xff]
    %v2948 = vld [vmem:[%s2946 + $0x8] sm:$0xff]
    %v2949 = vunpack.c.l.bf16 %v2947
    %v2950 = vunpack.c.h.bf16 %v2947
    %v2951 = vunpack.c.l.bf16 %v2948
    %v2952 = vunpack.c.h.bf16 %v2948
    %v2953 = vadd.f32 %v2949, %v584
    %v2954 = vadd.f32 %v2950, %v588
    %v2955 = vadd.f32 %v2951, %v592
    %v2956 = vadd.f32 %v2952, %v596
    %v2957 = vld [vmem:[#allocation3] sm:$0xff]
    %v2958 = vpack.c.bf16 %v2957, %v2957
    %v2959 = vld [vmem:[#allocation11] sm:$0xff]
    %v2960 = vld [vmem:[#allocation11 + $0x8] sm:$0xff]
    %v2961 = vld [vmem:[#allocation11 + $0x10] sm:$0xff]
    %v2962 = vld [vmem:[#allocation11 + $0x18] sm:$0xff]
    %v2963 = vld [vmem:[#allocation11 + $0x20] sm:$0xff]
    %v2964 = vld [vmem:[#allocation11 + $0x28] sm:$0xff]
    %v2965 = vld [vmem:[#allocation11 + $0x30] sm:$0xff]
    %v2966 = vld [vmem:[#allocation11 + $0x38] sm:$0xff]
    %v2967 = vld [vmem:[#allocation11 + $0x40] sm:$0xff]
    %v2968 = vld [vmem:[#allocation11 + $0x48] sm:$0xff]
    %v2969 = vld [vmem:[#allocation11 + $0x50] sm:$0xff]
    %v2970 = vld [vmem:[#allocation11 + $0x58] sm:$0xff]
    %v2971 = vld [vmem:[#allocation11 + $0x60] sm:$0xff]
    %v2972 = vld [vmem:[#allocation11 + $0x68] sm:$0xff]
    %v2973 = vld [vmem:[#allocation11 + $0x70] sm:$0xff]
    %v2974 = vld [vmem:[#allocation11 + $0x78] sm:$0xff]
    %v2975 = vld [vmem:[#allocation11 + $0x80] sm:$0xff]
    %v2976 = vld [vmem:[#allocation11 + $0x88] sm:$0xff]
    %v2977 = vld [vmem:[#allocation11 + $0x90] sm:$0xff]
    %v2978 = vld [vmem:[#allocation11 + $0x98] sm:$0xff]
    %v2979 = vld [vmem:[#allocation11 + $0xa0] sm:$0xff]
    %v2980 = vld [vmem:[#allocation11 + $0xa8] sm:$0xff]
    %v2981 = vld [vmem:[#allocation11 + $0xb0] sm:$0xff]
    %v2982 = vld [vmem:[#allocation11 + $0xb8] sm:$0xff]
    %v2983 = vld [vmem:[#allocation11 + $0xc0] sm:$0xff]
    %v2984 = vld [vmem:[#allocation11 + $0xc8] sm:$0xff]
    %v2985 = vld [vmem:[#allocation11 + $0xd0] sm:$0xff]
    %v2986 = vld [vmem:[#allocation11 + $0xd8] sm:$0xff]
    %v2987 = vld [vmem:[#allocation11 + $0xe0] sm:$0xff]
    %v2988 = vld [vmem:[#allocation11 + $0xe8] sm:$0xff]
    %v2989 = vld [vmem:[#allocation11 + $0xf0] sm:$0xff]
    %v2990 = vld [vmem:[#allocation11 + $0xf8] sm:$0xff]
    %v3023 = vunpack.c.l.b16 %v2959
    %v3024 = vunpack.c.h.b16 %v2959
    %v3025 = vunpack.c.l.b16 %v2960
    %v3026 = vunpack.c.h.b16 %v2960
    %v3027 = vunpack.c.l.b16 %v2961
    %v3028 = vunpack.c.h.b16 %v2961
    %v3029 = vunpack.c.l.b16 %v2962
    %v3030 = vunpack.c.h.b16 %v2962
    %v3031 = vunpack.c.l.b16 %v2963
    %v3032 = vunpack.c.h.b16 %v2963
    %v3033 = vunpack.c.l.b16 %v2964
    %v3034 = vunpack.c.h.b16 %v2964
    %v3035 = vunpack.c.l.b16 %v2965
    %v3036 = vunpack.c.h.b16 %v2965
    %v3037 = vunpack.c.l.b16 %v2966
    %v3038 = vunpack.c.h.b16 %v2966
    %v3039 = vunpack.c.l.b16 %v2967
    %v3040 = vunpack.c.h.b16 %v2967
    %v3041 = vunpack.c.l.b16 %v2968
    %v3042 = vunpack.c.h.b16 %v2968
    %v3043 = vunpack.c.l.b16 %v2969
    %v3044 = vunpack.c.h.b16 %v2969
    %v3045 = vunpack.c.l.b16 %v2970
    %v3046 = vunpack.c.h.b16 %v2970
    %v3047 = vunpack.c.l.b16 %v2971
    %v3048 = vunpack.c.h.b16 %v2971
    %v3049 = vunpack.c.l.b16 %v2972
    %v3050 = vunpack.c.h.b16 %v2972
    %v3051 = vunpack.c.l.b16 %v2973
    %v3052 = vunpack.c.h.b16 %v2973
    %v3053 = vunpack.c.l.b16 %v2974
    %v3054 = vunpack.c.h.b16 %v2974
    %v3055 = vunpack.c.l.b16 %v2975
    %v3056 = vunpack.c.h.b16 %v2975
    %v3057 = vunpack.c.l.b16 %v2976
    %v3058 = vunpack.c.h.b16 %v2976
    %v3059 = vunpack.c.l.b16 %v2977
    %v3060 = vunpack.c.h.b16 %v2977
    %v3061 = vunpack.c.l.b16 %v2978
    %v3062 = vunpack.c.h.b16 %v2978
    %v3063 = vunpack.c.l.b16 %v2979
    %v3064 = vunpack.c.h.b16 %v2979
    %v3065 = vunpack.c.l.b16 %v2980
    %v3066 = vunpack.c.h.b16 %v2980
    %v3067 = vunpack.c.l.b16 %v2981
    %v3068 = vunpack.c.h.b16 %v2981
    %v3069 = vunpack.c.l.b16 %v2982
    %v3070 = vunpack.c.h.b16 %v2982
    %v3071 = vunpack.c.l.b16 %v2983
    %v3072 = vunpack.c.h.b16 %v2983
    %v3073 = vunpack.c.l.b16 %v2984
    %v3074 = vunpack.c.h.b16 %v2984
    %v3075 = vunpack.c.l.b16 %v2985
    %v3076 = vunpack.c.h.b16 %v2985
    %v3077 = vunpack.c.l.b16 %v2986
    %v3078 = vunpack.c.h.b16 %v2986
    %v3079 = vunpack.c.l.b16 %v2987
    %v3080 = vunpack.c.h.b16 %v2987
    %v3081 = vunpack.c.l.b16 %v2988
    %v3082 = vunpack.c.h.b16 %v2988
    %v3083 = vunpack.c.l.b16 %v2989
    %v3084 = vunpack.c.h.b16 %v2989
    %v3085 = vunpack.c.l.b16 %v2990
    %v3086 = vunpack.c.h.b16 %v2990
    %v3087 = vpack.c.b16 %v3027, %v3023
    %v3088 = vpack.c.b16 %v3028, %v3024
    %v3089 = vpack.c.b16 %v3029, %v3025
    %v3090 = vpack.c.b16 %v3030, %v3026
    %v3091 = vpack.c.b16 %v3035, %v3031
    %v3092 = vpack.c.b16 %v3036, %v3032
    %v3093 = vpack.c.b16 %v3037, %v3033
    %v3094 = vpack.c.b16 %v3038, %v3034
    %v3095 = vpack.c.b16 %v3043, %v3039
    %v3096 = vpack.c.b16 %v3044, %v3040
    %v3097 = vpack.c.b16 %v3045, %v3041
    %v3098 = vpack.c.b16 %v3046, %v3042
    %v3099 = vpack.c.b16 %v3051, %v3047
    %v3100 = vpack.c.b16 %v3052, %v3048
    %v3101 = vpack.c.b16 %v3053, %v3049
    %v3102 = vpack.c.b16 %v3054, %v3050
    %v3103 = vpack.c.b16 %v3059, %v3055
    %v3104 = vpack.c.b16 %v3060, %v3056
    %v3105 = vpack.c.b16 %v3061, %v3057
    %v3106 = vpack.c.b16 %v3062, %v3058
    %v3107 = vpack.c.b16 %v3067, %v3063
    %v3108 = vpack.c.b16 %v3068, %v3064
    %v3109 = vpack.c.b16 %v3069, %v3065
    %v3110 = vpack.c.b16 %v3070, %v3066
    %v3111 = vpack.c.b16 %v3075, %v3071
    %v3112 = vpack.c.b16 %v3076, %v3072
    %v3113 = vpack.c.b16 %v3077, %v3073
    %v3114 = vpack.c.b16 %v3078, %v3074
    %v3115 = vpack.c.b16 %v3083, %v3079
    %v3116 = vpack.c.b16 %v3084, %v3080
    %v3117 = vpack.c.b16 %v3085, %v3081
    %v3118 = vpack.c.b16 %v3086, %v3082
    %3151 = vmatprep.subr.bf16.mxu0 %v3116
    %3152 = vmatpush1.bf16.msra.mxu0 %v3115
    %3153 = vmatprep.subr.bf16.mxu0 %v3112
    %3154 = vmatpush1.bf16.msra.mxu0 %v3111
    %3155 = vmatprep.subr.bf16.mxu0 %v3108
    %3156 = vmatpush1.bf16.msra.mxu0 %v3107
    %3157 = vmatprep.subr.bf16.mxu0 %v3104
    %3158 = vmatpush1.bf16.msra.mxu0 %v3103
    %3159 = vmatprep.subr.bf16.mxu0 %v3100
    %3160 = vmatpush1.bf16.msra.mxu0 %v3099
    %3161 = vmatprep.subr.bf16.mxu0 %v3096
    %3162 = vmatpush1.bf16.msra.mxu0 %v3095
    %3163 = vmatprep.subr.bf16.mxu0 %v3092
    %3164 = vmatpush1.bf16.msra.mxu0 %v3091
    %3165 = vmatprep.subr.bf16.mxu0 %v3088
    %3166 = vmatpush1.bf16.msra.mxu0 %v3087
    %3167 = vmatprep.subr.bf16.mxu0 0
    %3168 = vmatpush2.bf16.msra.mxu0 0
    %3169 = vmatprep.subr.bf16.mxu0 0
    %3170 = vmatpush2.bf16.msra.mxu0 0
    %3171 = vmatprep.subr.bf16.mxu0 0
    %3172 = vmatpush2.bf16.msra.mxu0 0
    %3173 = vmatprep.subr.bf16.mxu0 0
    %3174 = vmatpush2.bf16.msra.mxu0 0
    %3175 = vmatprep.subr.bf16.mxu0 0
    %3176 = vmatpush2.bf16.msra.mxu0 0
    %3177 = vmatprep.subr.bf16.mxu0 0
    %3178 = vmatpush2.bf16.msra.mxu0 0
    %3179 = vmatprep.subr.bf16.mxu0 0
    %3180 = vmatpush2.bf16.msra.mxu0 0
    %3181 = vmatprep.subr.bf16.mxu0 0
    %3182 = vmatpush2.bf16.msra.mxu0 0
    %3183 = vmatprep.mubr.bf16.mxu0 0
    %3184 = vmatmul.mubr.bf16.gmra.mxu0 %v2958
    %v3185 = vpop.f32.mrf.mxu0
    %v3186 = vadd.f32 0.0, %v3185
    %v3187 = vpop.f32.mrf.mxu0
    %v3188 = vadd.f32 0.0, %v3187
    %v3189 = vpop.f32.mrf.mxu0
    %v3190 = vpop.f32.mrf.mxu0
    %3191 = vdwg.mxu0
    %3192 = vmatprep.subr.bf16.mxu0 %v3118
    %3193 = vmatpush1.bf16.msra.mxu0 %v3117
    %3194 = vmatprep.subr.bf16.mxu0 %v3114
    %3195 = vmatpush1.bf16.msra.mxu0 %v3113
    %3196 = vmatprep.subr.bf16.mxu0 %v3110
    %3197 = vmatpush1.bf16.msra.mxu0 %v3109
    %3198 = vmatprep.subr.bf16.mxu0 %v3106
    %3199 = vmatpush1.bf16.msra.mxu0 %v3105
    %3200 = vmatprep.subr.bf16.mxu0 %v3102
    %3201 = vmatpush1.bf16.msra.mxu0 %v3101
    %3202 = vmatprep.subr.bf16.mxu0 %v3098
    %3203 = vmatpush1.bf16.msra.mxu0 %v3097
    %3204 = vmatprep.subr.bf16.mxu0 %v3094
    %3205 = vmatpush1.bf16.msra.mxu0 %v3093
    %3206 = vmatprep.subr.bf16.mxu0 %v3090
    %3207 = vmatpush1.bf16.msra.mxu0 %v3089
    %3208 = vmatprep.subr.bf16.mxu0 0
    %3209 = vmatpush2.bf16.msra.mxu0 0
    %3210 = vmatprep.subr.bf16.mxu0 0
    %3211 = vmatpush2.bf16.msra.mxu0 0
    %3212 = vmatprep.subr.bf16.mxu0 0
    %3213 = vmatpush2.bf16.msra.mxu0 0
    %3214 = vmatprep.subr.bf16.mxu0 0
    %3215 = vmatpush2.bf16.msra.mxu0 0
    %3216 = vmatprep.subr.bf16.mxu0 0
    %3217 = vmatpush2.bf16.msra.mxu0 0
    %3218 = vmatprep.subr.bf16.mxu0 0
    %3219 = vmatpush2.bf16.msra.mxu0 0
    %3220 = vmatprep.subr.bf16.mxu0 0
    %3221 = vmatpush2.bf16.msra.mxu0 0
    %3222 = vmatprep.subr.bf16.mxu0 0
    %3223 = vmatpush2.bf16.msra.mxu0 0
    %3224 = vmatprep.mubr.bf16.mxu0 0
    %3225 = vmatmul.mubr.bf16.gmra.mxu0 %v2958
    %v3226 = vpop.f32.mrf.mxu0
    %v3227 = vadd.f32 0.0, %v3226
    %v3228 = vpop.f32.mrf.mxu0
    %v3229 = vadd.f32 0.0, %v3228
    %v3230 = vpop.f32.mrf.mxu0
    %v3231 = vpop.f32.mrf.mxu0
    %3232 = vdwg.mxu0
    %v3233 = vadd.f32 %v2953, %v3186
    %v3234 = vadd.f32 %v2954, %v3188
    %v3235 = vadd.f32 %v2955, %v3227
    %v3236 = vadd.f32 %v2956, %v3229
    %v3237 = vpack.c.bf16 %v3233, %v3233
    %v3238 = vpack.c.bf16 %v3234, %v3234
    %v3239 = vpack.c.bf16 %v3235, %v3235
    %v3240 = vpack.c.bf16 %v3236, %v3236
    %v3241 = vxor.u32 %v3237, 2147516416
    %v3243 = vmul.bf16 %v3241, 1069105081
    %v3244 = vpow.bf16.pop %v3243
    %v3245 = vadd.bf16 %v3244, 1065369472
    %v3246 = vrcp.bf16.pop %v3245
    %v3247 = vmul.bf16 1065369472, %v3246
    %v3248 = vunpack.c.l.bf16 %v3247
    %v3249 = vxor.u32 %v3238, 2147516416
    %v3251 = vmul.bf16 %v3249, 1069105081
    %v3252 = vpow.bf16.pop %v3251
    %v3253 = vadd.bf16 %v3252, 1065369472
    %v3254 = vrcp.bf16.pop %v3253
    %v3255 = vmul.bf16 1065369472, %v3254
    %v3256 = vunpack.c.l.bf16 %v3255
    %v3257 = vtanh.bf16.pop %v3239
    %v3258 = vunpack.c.l.bf16 %v3257
    %v3259 = vxor.u32 %v3240, 2147516416
    %v3261 = vmul.bf16 %v3259, 1069105081
    %v3262 = vpow.bf16.pop %v3261
    %v3263 = vadd.bf16 %v3262, 1065369472
    %v3264 = vrcp.bf16.pop %v3263
    %v3265 = vmul.bf16 1065369472, %v3264
    %v3266 = vunpack.c.l.bf16 %v3265
    %v3267 = vld [vmem:[#allocation4] sm:$0xff]
    %v3268 = vmul.f32 %v3256, %v3267
    %v3269 = vmul.f32 %v3248, %v3258
    %v3270 = vadd.f32 %v3268, %v3269
    %v3271 = vpack.c.bf16 %v3270, %v3270
    %v3272 = vtanh.bf16.pop %v3271
    %v3273 = vunpack.c.l.bf16 %v3272
    %v3274 = vmul.f32 %v3266, %v3273
    %3275 = vst [vmem:[#allocation4] sm:$0xff] %v3270
    %3276 = vst [vmem:[#allocation3] sm:$0xff] %v3274
    %v3277 = vld [vmem:[#allocation5] sm:$0xff]
    %v3278 = vadd.f32 %v3277, %v3274
    %3279 = vst [vmem:[#allocation5] sm:$0xff] %v3278
    // Predicated region
    $region46: #{tpu_custom_call.1} parent=1 // pred_check
      %p3280 = pneg %p81
    $region47: #{tpu_custom_call.1} parent=1 // pred_check_branch
      %3282 = sbr.rel (%p3280) target = $region49
    $region48: #{tpu_custom_call.1} parent=1 // pred_region
      %v3283 = vld [vmem:[#allocation5] sm:$0xff]
      %v3284 = vmul.f32 %v3283, 0.125
      %v3285 = vpack.c.bf16 %v3284, %v3284
      %v3286 = vld [vmem:[#allocation12] sm:$0xf]
      %v3287 = vld [vmem:[#allocation12 + $0x4] sm:$0xf]
      %v3288 = vld [vmem:[#allocation12 + $0x8] sm:$0xf]
      %v3289 = vld [vmem:[#allocation12 + $0xc] sm:$0xf]
      %v3290 = vld [vmem:[#allocation12 + $0x10] sm:$0xf]
      %v3291 = vld [vmem:[#allocation12 + $0x14] sm:$0xf]
      %v3292 = vld [vmem:[#allocation12 + $0x18] sm:$0xf]
      %v3293 = vld [vmem:[#allocation12 + $0x1c] sm:$0xf]
      %v3294 = vld [vmem:[#allocation12 + $0x20] sm:$0xf]
      %v3295 = vld [vmem:[#allocation12 + $0x24] sm:$0xf]
      %v3296 = vld [vmem:[#allocation12 + $0x28] sm:$0xf]
      %v3297 = vld [vmem:[#allocation12 + $0x2c] sm:$0xf]
      %v3298 = vld [vmem:[#allocation12 + $0x30] sm:$0xf]
      %v3299 = vld [vmem:[#allocation12 + $0x34] sm:$0xf]
      %v3300 = vld [vmem:[#allocation12 + $0x38] sm:$0xf]
      %v3301 = vld [vmem:[#allocation12 + $0x3c] sm:$0xf]
      %v3302 = vld [vmem:[%s5] sm:$0x1]
      %v3304 = vlaneseq
      %v3305 = vshrl.u32 %v3304, 7
      %v3306 = vsub.s32 0, %v3305
      %v3307 = vrot.slane %v3302, %v3306
      %v3325 = vunpack.c.l.b16 %v3286
      %v3326 = vunpack.c.l.b16 %v3287
      %v3327 = vunpack.c.l.b16 %v3288
      %v3328 = vunpack.c.l.b16 %v3289
      %v3329 = vunpack.c.l.b16 %v3290
      %v3330 = vunpack.c.l.b16 %v3291
      %v3331 = vunpack.c.l.b16 %v3292
      %v3332 = vunpack.c.l.b16 %v3293
      %v3333 = vunpack.c.l.b16 %v3294
      %v3334 = vunpack.c.l.b16 %v3295
      %v3335 = vunpack.c.l.b16 %v3296
      %v3336 = vunpack.c.l.b16 %v3297
      %v3337 = vunpack.c.l.b16 %v3298
      %v3338 = vunpack.c.l.b16 %v3299
      %v3339 = vunpack.c.l.b16 %v3300
      %v3340 = vunpack.c.l.b16 %v3301
      %v3341 = vpack.c.b16 %v3326, %v3325
      %v3342 = vpack.c.b16 %v3328, %v3327
      %v3343 = vpack.c.b16 %v3330, %v3329
      %v3344 = vpack.c.b16 %v3332, %v3331
      %v3345 = vpack.c.b16 %v3334, %v3333
      %v3346 = vpack.c.b16 %v3336, %v3335
      %v3347 = vpack.c.b16 %v3338, %v3337
      %v3348 = vpack.c.b16 %v3340, %v3339
      %3357 = vmatprep.subr.bf16.mxu0 0
      %3358 = vmatpush1.bf16.msra.mxu0 %v3348
      %3359 = vmatprep.subr.bf16.mxu0 0
      %3360 = vmatpush1.bf16.msra.mxu0 %v3347
      %3361 = vmatprep.subr.bf16.mxu0 0
      %3362 = vmatpush1.bf16.msra.mxu0 %v3346
      %3363 = vmatprep.subr.bf16.mxu0 0
      %3364 = vmatpush1.bf16.msra.mxu0 %v3345
      %3365 = vmatprep.subr.bf16.mxu0 0
      %3366 = vmatpush1.bf16.msra.mxu0 %v3344
      %3367 = vmatprep.subr.bf16.mxu0 0
      %3368 = vmatpush1.bf16.msra.mxu0 %v3343
      %3369 = vmatprep.subr.bf16.mxu0 0
      %3370 = vmatpush1.bf16.msra.mxu0 %v3342
      %3371 = vmatprep.subr.bf16.mxu0 0
      %3372 = vmatpush1.bf16.msra.mxu0 %v3341
      %3373 = vmatprep.subr.bf16.mxu0 0
      %3374 = vmatpush2.bf16.msra.mxu0 0
      %3375 = vmatprep.subr.bf16.mxu0 0
      %3376 = vmatpush2.bf16.msra.mxu0 0
      %3377 = vmatprep.subr.bf16.mxu0 0
      %3378 = vmatpush2.bf16.msra.mxu0 0
      %3379 = vmatprep.subr.bf16.mxu0 0
      %3380 = vmatpush2.bf16.msra.mxu0 0
      %3381 = vmatprep.subr.bf16.mxu0 0
      %3382 = vmatpush2.bf16.msra.mxu0 0
      %3383 = vmatprep.subr.bf16.mxu0 0
      %3384 = vmatpush2.bf16.msra.mxu0 0
      %3385 = vmatprep.subr.bf16.mxu0 0
      %3386 = vmatpush2.bf16.msra.mxu0 0
      %3387 = vmatprep.subr.bf16.mxu0 0
      %3388 = vmatpush2.bf16.msra.mxu0 0
      %3389 = vmatprep.mubr.bf16.mxu0 0
      %3390 = vmatmul.mubr.bf16.gmra.mxu0 %v3285
      %v3391 = vpop.f32.mrf.mxu0
      %v3392 = vadd.f32 %v3307, %v3391
      %v3393 = vpop.f32.mrf.mxu0
      %v3394 = vpop.f32.mrf.mxu0
      %v3395 = vpop.f32.mrf.mxu0
      %3396 = vdwg.mxu0
      %3397 = vmax.xlane.f32.xlu0 %v3392
      %v3398 = vpop.xlane.xlu0 %3397
      %v3399 = vsub.f32 %v3392, %v3398
      %v3400 = vmul.f32 %v3399, 1.442695
      %v3401 = vpow.pop %v3400
      %3402 = vadd.xlane.f32.xlu0 %v3401
      %v3403 = vpop.xlane.xlu0 %3402
      %v3404 = vlog2.pop %v3403
      %v3405 = vmul.f32 %v3404, 0.6931472
      %v3406 = vsub.f32 %v3399, %v3405
      %3407 = vst [vmem:[#allocation14] sm:$0xff] %v3406
    $region49: #{tpu_custom_call.1} parent=1 // pred_fallthru
      _
    // Predicated region
    $region50: #{tpu_custom_call.1} parent=1 // pred_check
      _
    $region51: #{tpu_custom_call.1} parent=1 // pred_check_branch
      %3409 = sbr.rel (0) target = $region53
    $region52: #{tpu_custom_call.1} parent=1 // pred_region
      %s3411 = ssub.s32 128, 128
      %3412 = vsyncadd [#allocation8], %s3411
      %s3414 = sshll.u32 [#allocation14], 4
      %s3415 = int_to_ptr.vmem [resolvable:$true] %s3414
      %3417 = dma.vmem_to_hbm [thread:$0]  %s3415, 128, %s6, [#allocation8]
    $region53: #{tpu_custom_call.1} parent=1 // pred_fallthru
      _
    // Predicated region
    $region54: #{tpu_custom_call.1} parent=1 // pred_check
      _
    $region55: #{tpu_custom_call.1} parent=1 // pred_check_branch
      %3419 = sbr.rel (0) target = $region57
    $region56: #{tpu_custom_call.1} parent=1 // pred_region
      %3420 = dma.done [#allocation8], 128
    $region57: #{tpu_custom_call.1} parent=1 // pred_fallthru
      _
    %3421 = vsyncpa [#allocation7], 1
    %3422 = vsyncpa [#allocation10], 1
    %3423 = vsyncpa [#allocation13], 1
    %3424 = vsyncpa [#allocation8], 1

</llo_original>
